<compile_context>
chip_gen: v7x
topology: tpu7x:2x2x1
jax: 0.10.0
libtpu: 0.0.40
codegen_flags: <defaults>
</compile_context>

<pallas_src>
import functools

import jax
import jax.numpy as jnp
from jax import lax
from jax.experimental import pallas as pl
from jax.experimental.pallas import tpu as pltpu

# Matmul-operand dtype. f32 (default) matches PyTorch numerics bit-for-bit at
# the reference tolerance; set to jnp.bfloat16 on v6e/v7x for MXU-native
# throughput (gate elementwise math and accumulation stay in f32 either way).
MATMUL_DTYPE = jnp.float32

_LANE = 128
_SUBLANE = 8


def _round_up(n, m):
    return (n + m - 1) // m * m


def _pad2d(a, rows, cols):
    return jnp.pad(a, ((0, rows - a.shape[0]), (0, cols - a.shape[1])))


def _pick_chunk(T, target=64):
    """Largest divisor of T that is <= target (time-chunk length)."""
    tc = min(T, target)
    while T % tc:
        tc -= 1
    return tc


# ----------------------------- Pallas kernels -----------------------------

def _gru_recurrence(gi_ref, w_hh, b_hn, h0, n_steps, b_pad, h_pad,
                    h_seq_ref=None):
    """Serial GRU recurrence over `n_steps` steps stored in gi_ref (VMEM scratch).

    gi_ref rows are time-major with b_pad rows per step; gate columns are
    lane-aligned segments of width h_pad in PyTorch order (r, z, n).
    """
    def step(t, h):
        row = pl.multiple_of(t * b_pad, b_pad)
        gi_t = gi_ref[pl.ds(row, b_pad), :]                    # (b_pad, 3*h_pad)
        gh = jnp.dot(h.astype(w_hh.dtype), w_hh,
                     preferred_element_type=jnp.float32)       # (b_pad, 3*h_pad)
        r = jax.nn.sigmoid(gi_t[:, :h_pad] + gh[:, :h_pad])
        z = jax.nn.sigmoid(gi_t[:, h_pad:2 * h_pad] + gh[:, h_pad:2 * h_pad])
        n = jnp.tanh(gi_t[:, 2 * h_pad:] + r * (gh[:, 2 * h_pad:] + b_hn))
        h_new = n + z * (h - n)                                # == (1-z)*n + z*h
        if h_seq_ref is not None:
            h_seq_ref[pl.ds(row, b_pad), :] = h_new.astype(h_seq_ref.dtype)
        return h_new

    return lax.fori_loop(0, n_steps, step, h0, unroll=True)


def gru_seq_kernel(x_ref, w_ih_ref, w_hh_ref, b_gi_ref, b_hn_ref, h_seq_ref,
                   h_carry, gi_scratch, *, tc, b_pad, h_pad):
    """One GRU layer over one time-chunk; writes the full hidden sequence."""
    @pl.when(pl.program_id(0) == 0)
    def _init():
        h_carry[...] = jnp.zeros_like(h_carry)

    # Input projection for the whole chunk: one MXU matmul, biases folded in.
    gi_scratch[...] = (
        jnp.dot(x_ref[...], w_ih_ref[...], preferred_element_type=jnp.float32)
        + b_gi_ref[...])

    h = _gru_recurrence(gi_scratch, w_hh_ref[...], b_hn_ref[...], h_carry[...],
                        tc, b_pad, h_pad, h_seq_ref=h_seq_ref)
    h_carry[...] = h


def gru_head_kernel(x_ref, w_ih_ref, w_hh_ref, b_gi_ref, b_hn_ref,
                    w_out_ref, b_out_ref, out_ref, h_carry, gi_scratch,
                    *, tc, b_pad, h_pad):
    """Last GRU layer fused with the output Linear; only (B, O) leaves HBM."""
    @pl.when(pl.program_id(0) == 0)
    def _init():
        h_carry[...] = jnp.zeros_like(h_carry)

    gi_scratch[...] = (
        jnp.dot(x_ref[...], w_ih_ref[...], preferred_element_type=jnp.float32)
        + b_gi_ref[...])

    h = _gru_recurrence(gi_scratch, w_hh_ref[...], b_hn_ref[...], h_carry[...],
                        tc, b_pad, h_pad, h_seq_ref=None)
    h_carry[...] = h

    @pl.when(pl.program_id(0) == pl.num_programs(0) - 1)
    def _head():
        out_ref[...] = (
            jnp.dot(h.astype(w_out_ref.dtype), w_out_ref[...],
                    preferred_element_type=jnp.float32)
            + b_out_ref[...]).astype(out_ref.dtype)


# ----------------------------- Wrappers -----------------------------------

_COMPILER_PARAMS = pltpu.CompilerParams(
    dimension_semantics=("arbitrary",),          # serial carried dependence in time
    vmem_limit_bytes=32 * 1024 * 1024,           # explicit budget (safe on v7x 64 MiB)
)


def run_gru_layer_seq(x_flat, w_ih_t, w_hh_t, b_gi, b_hn, *, T, b_pad, h_pad):
    d_pad = x_flat.shape[1]
    tc = _pick_chunk(T)
    rows_c = tc * b_pad
    kernel = functools.partial(gru_seq_kernel, tc=tc, b_pad=b_pad, h_pad=h_pad)
    return pl.pallas_call(
        kernel,
        grid=(T // tc,),
        in_specs=[
            pl.BlockSpec((rows_c, d_pad), lambda t: (t, 0)),        # x chunk
            pl.BlockSpec((d_pad, 3 * h_pad), lambda t: (0, 0)),     # w_ih^T
            pl.BlockSpec((h_pad, 3 * h_pad), lambda t: (0, 0)),     # w_hh^T
            pl.BlockSpec((1, 3 * h_pad), lambda t: (0, 0)),         # folded gi bias
            pl.BlockSpec((1, h_pad), lambda t: (0, 0)),             # b_hn
        ],
        out_specs=pl.BlockSpec((rows_c, h_pad), lambda t: (t, 0)),
        out_shape=jax.ShapeDtypeStruct((T * b_pad, h_pad), MATMUL_DTYPE),
        scratch_shapes=[
            pltpu.VMEM((b_pad, h_pad), jnp.float32),                # h carry
            pltpu.VMEM((rows_c, 3 * h_pad), jnp.float32),           # gi for the chunk
        ],
        compiler_params=_COMPILER_PARAMS,
    )(x_flat, w_ih_t, w_hh_t, b_gi, b_hn)


def run_gru_layer_head(x_flat, w_ih_t, w_hh_t, b_gi, b_hn, w_out_t, b_out_p,
                       *, T, b_pad, h_pad, o_pad):
    d_pad = x_flat.shape[1]
    tc = _pick_chunk(T)
    rows_c = tc * b_pad
    kernel = functools.partial(gru_head_kernel, tc=tc, b_pad=b_pad, h_pad=h_pad)
    return pl.pallas_call(
        kernel,
        grid=(T // tc,),
        in_specs=[
            pl.BlockSpec((rows_c, d_pad), lambda t: (t, 0)),
            pl.BlockSpec((d_pad, 3 * h_pad), lambda t: (0, 0)),
            pl.BlockSpec((h_pad, 3 * h_pad), lambda t: (0, 0)),
            pl.BlockSpec((1, 3 * h_pad), lambda t: (0, 0)),
            pl.BlockSpec((1, h_pad), lambda t: (0, 0)),
            pl.BlockSpec((h_pad, o_pad), lambda t: (0, 0)),         # w_out^T
            pl.BlockSpec((1, o_pad), lambda t: (0, 0)),             # b_out
        ],
        out_specs=pl.BlockSpec((b_pad, o_pad), lambda t: (0, 0)),
        out_shape=jax.ShapeDtypeStruct((b_pad, o_pad), jnp.float32),
        scratch_shapes=[
            pltpu.VMEM((b_pad, h_pad), jnp.float32),
            pltpu.VMEM((rows_c, 3 * h_pad), jnp.float32),
        ],
        compiler_params=_COMPILER_PARAMS,
    )(x_flat, w_ih_t, w_hh_t, b_gi, b_hn, w_out_t, b_out_p)


def _prep_layer(w_ih, w_hh, b_ih, b_hh, d_pad, h_pad):
    """Pre-transpose weights, pad each gate to h_pad lanes, fold r/z hidden
    biases into the input-projection bias (only the n-gate b_hn stays per-step)."""
    H = w_hh.shape[1]

    def split3(a):
        return a[:H], a[H:2 * H], a[2 * H:]

    wir, wiz, win = split3(w_ih)          # (H, D) each
    whr, whz, whn = split3(w_hh)          # (H, H) each
    bir, biz, bin_ = split3(b_ih)
    bhr, bhz, bhn = split3(b_hh)

    def padw(w, rows):
        return _pad2d(w.T, rows, h_pad)   # transpose once, zero-pad

    w_ih_t = jnp.concatenate([padw(wir, d_pad), padw(wiz, d_pad),
                              padw(win, d_pad)], axis=1)         # (d_pad, 3*h_pad)
    w_hh_t = jnp.concatenate([padw(whr, h_pad), padw(whz, h_pad),
                              padw(whn, h_pad)], axis=1)         # (h_pad, 3*h_pad)

    def padb(b):
        return _pad2d(b.reshape(1, -1), 1, h_pad)

    b_gi = jnp.concatenate([padb(bir + bhr), padb(biz + bhz), padb(bin_)],
                           axis=1)                                # (1, 3*h_pad)
    b_hn = padb(bhn)                                              # (1, h_pad)

    return (w_ih_t.astype(MATMUL_DTYPE), w_hh_t.astype(MATMUL_DTYPE),
            b_gi.astype(jnp.float32), b_hn.astype(jnp.float32))


@jax.jit
def gru_forward(x, params):
    """x: (B, T, input_size), batch-first.  Returns (B, output_size)."""
    B, T, D = x.shape
    H = params["layers"][0][1].shape[1]
    O = params["w_out"].shape[0]

    b_pad = _round_up(B, _SUBLANE)
    d_pad = _round_up(D, _LANE)
    h_pad = _round_up(H, _LANE)
    o_pad = _round_up(O, _LANE)

    # Layout plumbing outside the kernels: batch-first -> time-major, zero-pad
    # batch/feature dims, flatten to a lane-dense 2-D (T*b_pad, d_pad) slab.
    xt = jnp.transpose(x, (1, 0, 2)).astype(jnp.float32)
    xt = jnp.pad(xt, ((0, 0), (0, b_pad - B), (0, d_pad - D)))
    h = xt.reshape(T * b_pad, d_pad).astype(MATMUL_DTYPE)

    n_layers = len(params["layers"])
    out_p = None
    for li, (w_ih, w_hh, b_ih, b_hh) in enumerate(params["layers"]):
        in_pad = d_pad if li == 0 else h_pad
        w_ih_t, w_hh_t, b_gi, b_hn = _prep_layer(w_ih, w_hh, b_ih, b_hh,
                                                 in_pad, h_pad)
        if li < n_layers - 1:
            h = run_gru_layer_seq(h, w_ih_t, w_hh_t, b_gi, b_hn,
                                  T=T, b_pad=b_pad, h_pad=h_pad)
        else:
            w_out_t = _pad2d(params["w_out"].T, h_pad, o_pad).astype(MATMUL_DTYPE)
            b_out_p = _pad2d(params["b_out"].reshape(1, -1), 1, o_pad
                             ).astype(jnp.float32)
            out_p = run_gru_layer_head(h, w_ih_t, w_hh_t, b_gi, b_hn,
                                       w_out_t, b_out_p,
                                       T=T, b_pad=b_pad, h_pad=h_pad, o_pad=o_pad)
    return out_p[:B, :O]


# ----------------------------- Reference (pure JAX) ------------------------

def gru_forward_ref(x, params):
    B, T, _ = x.shape
    inp = x
    for (w_ih, w_hh, b_ih, b_hh) in params["layers"]:
        H = w_hh.shape[1]
        h = jnp.zeros((B, H), jnp.float32)
        outs = []
        for t in range(T):
            gi = inp[:, t, :] @ w_ih.T + b_ih
            gh = h @ w_hh.T + b_hh
            r = jax.nn.sigmoid(gi[:, :H] + gh[:, :H])
            z = jax.nn.sigmoid(gi[:, H:2 * H] + gh[:, H:2 * H])
            n = jnp.tanh(gi[:, 2 * H:] + r * gh[:, 2 * H:])
            h = (1.0 - z) * n + z * h
            outs.append(h)
        inp = jnp.stack(outs, axis=1)
    return inp[:, -1, :] @ params["w_out"].T + params["b_out"]


# ----------------------------- Parameter init ------------------------------

def init_params(key, input_size, hidden_size, num_layers, output_size):
    k = 1.0 / jnp.sqrt(hidden_size)
    layers = []
    for l in range(num_layers):
        d_in = input_size if l == 0 else hidden_size
        key, k1, k2, k3, k4 = jax.random.split(key, 5)
        w_ih = jax.random.uniform(k1, (3 * hidden_size, d_in), jnp.float32, -k, k)
        w_hh = jax.random.uniform(k2, (3 * hidden_size, hidden_size), jnp.float32, -k, k)
        b_ih = jax.random.uniform(k3, (3 * hidden_size,), jnp.float32, -k, k)
        b_hh = jax.random.uniform(k4, (3 * hidden_size,), jnp.float32, -k, k)
        layers.append((w_ih, w_hh, b_ih, b_hh))
    key, k5, k6 = jax.random.split(key, 3)
    w_out = jax.random.uniform(k5, (output_size, hidden_size), jnp.float32, -k, k)
    b_out = jax.random.uniform(k6, (output_size,), jnp.float32, -k, k)
    return {"layers": layers, "w_out": w_out, "b_out": b_out}


# ----------------------------- Main -----------------------------------------

if __name__ == "__main__":
    input_size, hidden_size, num_layers, output_size = 16, 32, 2, 4
    batch, seq = 2, 8

    key = jax.random.PRNGKey(0)
    key, xkey, pkey = jax.random.split(key, 3)
    x = jax.random.normal(xkey, (batch, seq, input_size), jnp.float32)
    params = init_params(pkey, input_size, hidden_size, num_layers, output_size)

    out = jax.block_until_ready(gru_forward(x, params))
    ref = jax.block_until_ready(gru_forward_ref(x, params))

    assert out.shape == (batch, output_size)
    assert jnp.allclose(out, ref, atol=1e-3, rtol=1e-3), "mismatch vs reference"

    print("KERNEL_OK")
</pallas_src>

<mosaic_0001>
module attributes {stable_mosaic.version = 11 : i64} {
  func.func @gru_head_kernel(%arg0: i32, %arg1: memref<64x128xf32, #tpu.memory_space<vmem>>, %arg2: memref<128x384xf32, #tpu.memory_space<vmem>>, %arg3: memref<128x384xf32, #tpu.memory_space<vmem>>, %arg4: memref<1x384xf32, #tpu.memory_space<vmem>>, %arg5: memref<1x128xf32, #tpu.memory_space<vmem>>, %arg6: memref<128x128xf32, #tpu.memory_space<vmem>>, %arg7: memref<1x128xf32, #tpu.memory_space<vmem>>, %arg8: memref<8x128xf32, #tpu.memory_space<vmem>>, %arg9: memref<8x128xf32, #tpu.memory_space<vmem>>, %arg10: memref<64x384xf32, #tpu.memory_space<vmem>>) attributes {dimension_semantics = [#tpu.dimension_semantics<arbitrary>], iteration_bounds = array<i64: 1>, scalar_prefetch = 0 : i64, scratch_operands = 2 : i64, tpu.core_type = #tpu.core_type<tc>, window_params = [{transform_indices = @transform_0, window_bounds = array<i64: 64, 128>}, {pipeline_mode = #tpu.pipeline_mode<synchronous>, transform_indices = @transform_1, window_bounds = array<i64: 128, 384>}, {pipeline_mode = #tpu.pipeline_mode<synchronous>, transform_indices = @transform_2, window_bounds = array<i64: 128, 384>}, {pipeline_mode = #tpu.pipeline_mode<synchronous>, transform_indices = @transform_3, window_bounds = array<i64: 1, 384>}, {pipeline_mode = #tpu.pipeline_mode<synchronous>, transform_indices = @transform_4, window_bounds = array<i64: 1, 128>}, {pipeline_mode = #tpu.pipeline_mode<synchronous>, transform_indices = @transform_5, window_bounds = array<i64: 128, 128>}, {pipeline_mode = #tpu.pipeline_mode<synchronous>, transform_indices = @transform_6, window_bounds = array<i64: 1, 128>}, {pipeline_mode = #tpu.pipeline_mode<synchronous>, transform_indices = @transform_7, window_bounds = array<i64: 8, 128>}]} {
    %c0_i32 = arith.constant 0 : i32
    %0 = arith.cmpi eq, %arg0, %c0_i32 : i32
    %1 = arith.extui %0 : i1 to i32
    %c0_i32_0 = arith.constant 0 : i32
    %2 = arith.cmpi ne, %1, %c0_i32_0 : i32
    scf.if %2 {
      %cst_59 = arith.constant 0.000000e+00 : f32
      %265 = vector.broadcast %cst_59 : f32 to vector<8x128xf32>
      %c0_60 = arith.constant 0 : index
      %c0_61 = arith.constant 0 : index
      %266 = vector.load %arg9[%c0_60, %c0_61] : memref<8x128xf32, #tpu.memory_space<vmem>>, vector<8x128xf32>
      tpu.vector_store %arg9[%c0_60, %c0_61], %265 {strides = array<i32>} : memref<8x128xf32, #tpu.memory_space<vmem>>, vector<8x128xf32>,
    } else {
    }
    %c0 = arith.constant 0 : index
    %c0_1 = arith.constant 0 : index
    %3 = vector.load %arg1[%c0, %c0_1] : memref<64x128xf32, #tpu.memory_space<vmem>>, vector<64x128xf32>
    %c0_2 = arith.constant 0 : index
    %c0_3 = arith.constant 0 : index
    %4 = vector.load %arg2[%c0_2, %c0_3] : memref<128x384xf32, #tpu.memory_space<vmem>>, vector<128x384xf32>
    %cst = arith.constant dense<0.000000e+00> : vector<64x384xf32>
    %5 = tpu.matmul %3, %4, %cst {dimension_numbers = #tpu.dot_dimension_numbers<[1], [0], [0], [1], [0, 0, 1, 1], [], []>} : vector<64x128xf32>, vector<128x384xf32>, vector<64x384xf32> -> vector<64x384xf32>
    %c0_4 = arith.constant 0 : index
    %c0_5 = arith.constant 0 : index
    %6 = vector.load %arg4[%c0_4, %c0_5] : memref<1x384xf32, #tpu.memory_space<vmem>>, vector<1x384xf32>
    %7 = vector.broadcast %6 : vector<1x384xf32> to vector<64x384xf32>
    %8 = arith.addf %5, %7 : vector<64x384xf32>
    %c0_6 = arith.constant 0 : index
    %c0_7 = arith.constant 0 : index
    %9 = vector.load %arg10[%c0_6, %c0_7] : memref<64x384xf32, #tpu.memory_space<vmem>>, vector<64x384xf32>
    tpu.vector_store %arg10[%c0_6, %c0_7], %8 {strides = array<i32>} : memref<64x384xf32, #tpu.memory_space<vmem>>, vector<64x384xf32>,
    %c0_8 = arith.constant 0 : index
    %c0_9 = arith.constant 0 : index
    %10 = vector.load %arg3[%c0_8, %c0_9] : memref<128x384xf32, #tpu.memory_space<vmem>>, vector<128x384xf32>
    %c0_10 = arith.constant 0 : index
    %c0_11 = arith.constant 0 : index
    %11 = vector.load %arg5[%c0_10, %c0_11] : memref<1x128xf32, #tpu.memory_space<vmem>>, vector<1x128xf32>
    %c0_12 = arith.constant 0 : index
    %c0_13 = arith.constant 0 : index
    %12 = vector.load %arg9[%c0_12, %c0_13] : memref<8x128xf32, #tpu.memory_space<vmem>>, vector<8x128xf32>
    %c0_i32_14 = arith.constant 0 : i32
    %c8_i32 = arith.constant 8 : i32
    %13 = arith.muli %c0_i32_14, %c8_i32 : i32
    %14 = tpu.assume_multiple %13, 8 : i32
    %15 = arith.index_cast %14 : i32 to index
    %c0_15 = arith.constant 0 : index
    %16 = vector.load %arg10[%15, %c0_15] : memref<64x384xf32, #tpu.memory_space<vmem>>, vector<8x384xf32>
    %cst_16 = arith.constant dense<0.000000e+00> : vector<8x384xf32>
    %17 = tpu.matmul %12, %10, %cst_16 {dimension_numbers = #tpu.dot_dimension_numbers<[1], [0], [0], [1], [0, 0, 1, 1], [], []>} : vector<8x128xf32>, vector<128x384xf32>, vector<8x384xf32> -> vector<8x384xf32>
    %18 = vector.extract_strided_slice %16 {offsets = [0, 0], sizes = [8, 128], strides = [1, 1]} : vector<8x384xf32> to vector<8x128xf32>
    %19 = vector.extract_strided_slice %17 {offsets = [0, 0], sizes = [8, 128], strides = [1, 1]} : vector<8x384xf32> to vector<8x128xf32>
    %20 = arith.addf %18, %19 : vector<8x128xf32>
    %21 = arith.negf %20 : vector<8x128xf32>
    %22 = math.exp %21 : vector<8x128xf32>
    %cst_17 = arith.constant 1.000000e+00 : f32
    %23 = vector.broadcast %cst_17 : f32 to vector<8x128xf32>
    %24 = arith.addf %23, %22 : vector<8x128xf32>
    %25 = arith.divf %23, %24 : vector<8x128xf32>
    %26 = vector.extract_strided_slice %16 {offsets = [0, 128], sizes = [8, 128], strides = [1, 1]} : vector<8x384xf32> to vector<8x128xf32>
    %27 = vector.extract_strided_slice %17 {offsets = [0, 128], sizes = [8, 128], strides = [1, 1]} : vector<8x384xf32> to vector<8x128xf32>
    %28 = arith.addf %26, %27 : vector<8x128xf32>
    %29 = arith.negf %28 : vector<8x128xf32>
    %30 = math.exp %29 : vector<8x128xf32>
    %cst_18 = arith.constant 1.000000e+00 : f32
    %31 = vector.broadcast %cst_18 : f32 to vector<8x128xf32>
    %32 = arith.addf %31, %30 : vector<8x128xf32>
    %33 = arith.divf %31, %32 : vector<8x128xf32>
    %34 = vector.extract_strided_slice %16 {offsets = [0, 256], sizes = [8, 128], strides = [1, 1]} : vector<8x384xf32> to vector<8x128xf32>
    %35 = vector.extract_strided_slice %17 {offsets = [0, 256], sizes = [8, 128], strides = [1, 1]} : vector<8x384xf32> to vector<8x128xf32>
    %36 = vector.broadcast %11 : vector<1x128xf32> to vector<8x128xf32>
    %37 = arith.addf %35, %36 : vector<8x128xf32>
    %38 = arith.mulf %25, %37 : vector<8x128xf32>
    %39 = arith.addf %34, %38 : vector<8x128xf32>
    %40 = math.tanh %39 : vector<8x128xf32>
    %41 = arith.subf %12, %40 : vector<8x128xf32>
    %42 = arith.mulf %33, %41 : vector<8x128xf32>
    %43 = arith.addf %40, %42 : vector<8x128xf32>
    %c1_i32 = arith.constant 1 : i32
    %c8_i32_19 = arith.constant 8 : i32
    %44 = arith.muli %c1_i32, %c8_i32_19 : i32
    %45 = tpu.assume_multiple %44, 8 : i32
    %46 = arith.index_cast %45 : i32 to index
    %c0_20 = arith.constant 0 : index
    %47 = vector.load %arg10[%46, %c0_20] : memref<64x384xf32, #tpu.memory_space<vmem>>, vector<8x384xf32>
    %cst_21 = arith.constant dense<0.000000e+00> : vector<8x384xf32>
    %48 = tpu.matmul %43, %10, %cst_21 {dimension_numbers = #tpu.dot_dimension_numbers<[1], [0], [0], [1], [0, 0, 1, 1], [], []>} : vector<8x128xf32>, vector<128x384xf32>, vector<8x384xf32> -> vector<8x384xf32>
    %49 = vector.extract_strided_slice %47 {offsets = [0, 0], sizes = [8, 128], strides = [1, 1]} : vector<8x384xf32> to vector<8x128xf32>
    %50 = vector.extract_strided_slice %48 {offsets = [0, 0], sizes = [8, 128], strides = [1, 1]} : vector<8x384xf32> to vector<8x128xf32>
    %51 = arith.addf %49, %50 : vector<8x128xf32>
    %52 = arith.negf %51 : vector<8x128xf32>
    %53 = math.exp %52 : vector<8x128xf32>
    %cst_22 = arith.constant 1.000000e+00 : f32
    %54 = vector.broadcast %cst_22 : f32 to vector<8x128xf32>
    %55 = arith.addf %54, %53 : vector<8x128xf32>
    %56 = arith.divf %54, %55 : vector<8x128xf32>
    %57 = vector.extract_strided_slice %47 {offsets = [0, 128], sizes = [8, 128], strides = [1, 1]} : vector<8x384xf32> to vector<8x128xf32>
    %58 = vector.extract_strided_slice %48 {offsets = [0, 128], sizes = [8, 128], strides = [1, 1]} : vector<8x384xf32> to vector<8x128xf32>
    %59 = arith.addf %57, %58 : vector<8x128xf32>
    %60 = arith.negf %59 : vector<8x128xf32>
    %61 = math.exp %60 : vector<8x128xf32>
    %cst_23 = arith.constant 1.000000e+00 : f32
    %62 = vector.broadcast %cst_23 : f32 to vector<8x128xf32>
    %63 = arith.addf %62, %61 : vector<8x128xf32>
    %64 = arith.divf %62, %63 : vector<8x128xf32>
    %65 = vector.extract_strided_slice %47 {offsets = [0, 256], sizes = [8, 128], strides = [1, 1]} : vector<8x384xf32> to vector<8x128xf32>
    %66 = vector.extract_strided_slice %48 {offsets = [0, 256], sizes = [8, 128], strides = [1, 1]} : vector<8x384xf32> to vector<8x128xf32>
    %67 = vector.broadcast %11 : vector<1x128xf32> to vector<8x128xf32>
    %68 = arith.addf %66, %67 : vector<8x128xf32>
    %69 = arith.mulf %56, %68 : vector<8x128xf32>
    %70 = arith.addf %65, %69 : vector<8x128xf32>
    %71 = math.tanh %70 : vector<8x128xf32>
    %72 = arith.subf %43, %71 : vector<8x128xf32>
    %73 = arith.mulf %64, %72 : vector<8x128xf32>
    %74 = arith.addf %71, %73 : vector<8x128xf32>
    %c2_i32 = arith.constant 2 : i32
    %c8_i32_24 = arith.constant 8 : i32
    %75 = arith.muli %c2_i32, %c8_i32_24 : i32
    %76 = tpu.assume_multiple %75, 8 : i32
    %77 = arith.index_cast %76 : i32 to index
    %c0_25 = arith.constant 0 : index
    %78 = vector.load %arg10[%77, %c0_25] : memref<64x384xf32, #tpu.memory_space<vmem>>, vector<8x384xf32>
    %cst_26 = arith.constant dense<0.000000e+00> : vector<8x384xf32>
    %79 = tpu.matmul %74, %10, %cst_26 {dimension_numbers = #tpu.dot_dimension_numbers<[1], [0], [0], [1], [0, 0, 1, 1], [], []>} : vector<8x128xf32>, vector<128x384xf32>, vector<8x384xf32> -> vector<8x384xf32>
    %80 = vector.extract_strided_slice %78 {offsets = [0, 0], sizes = [8, 128], strides = [1, 1]} : vector<8x384xf32> to vector<8x128xf32>
    %81 = vector.extract_strided_slice %79 {offsets = [0, 0], sizes = [8, 128], strides = [1, 1]} : vector<8x384xf32> to vector<8x128xf32>
    %82 = arith.addf %80, %81 : vector<8x128xf32>
    %83 = arith.negf %82 : vector<8x128xf32>
    %84 = math.exp %83 : vector<8x128xf32>
    %cst_27 = arith.constant 1.000000e+00 : f32
    %85 = vector.broadcast %cst_27 : f32 to vector<8x128xf32>
    %86 = arith.addf %85, %84 : vector<8x128xf32>
    %87 = arith.divf %85, %86 : vector<8x128xf32>
    %88 = vector.extract_strided_slice %78 {offsets = [0, 128], sizes = [8, 128], strides = [1, 1]} : vector<8x384xf32> to vector<8x128xf32>
    %89 = vector.extract_strided_slice %79 {offsets = [0, 128], sizes = [8, 128], strides = [1, 1]} : vector<8x384xf32> to vector<8x128xf32>
    %90 = arith.addf %88, %89 : vector<8x128xf32>
    %91 = arith.negf %90 : vector<8x128xf32>
    %92 = math.exp %91 : vector<8x128xf32>
    %cst_28 = arith.constant 1.000000e+00 : f32
    %93 = vector.broadcast %cst_28 : f32 to vector<8x128xf32>
    %94 = arith.addf %93, %92 : vector<8x128xf32>
    %95 = arith.divf %93, %94 : vector<8x128xf32>
    %96 = vector.extract_strided_slice %78 {offsets = [0, 256], sizes = [8, 128], strides = [1, 1]} : vector<8x384xf32> to vector<8x128xf32>
    %97 = vector.extract_strided_slice %79 {offsets = [0, 256], sizes = [8, 128], strides = [1, 1]} : vector<8x384xf32> to vector<8x128xf32>
    %98 = vector.broadcast %11 : vector<1x128xf32> to vector<8x128xf32>
    %99 = arith.addf %97, %98 : vector<8x128xf32>
    %100 = arith.mulf %87, %99 : vector<8x128xf32>
    %101 = arith.addf %96, %100 : vector<8x128xf32>
    %102 = math.tanh %101 : vector<8x128xf32>
    %103 = arith.subf %74, %102 : vector<8x128xf32>
    %104 = arith.mulf %95, %103 : vector<8x128xf32>
    %105 = arith.addf %102, %104 : vector<8x128xf32>
    %c3_i32 = arith.constant 3 : i32
    %c8_i32_29 = arith.constant 8 : i32
    %106 = arith.muli %c3_i32, %c8_i32_29 : i32
    %107 = tpu.assume_multiple %106, 8 : i32
    %108 = arith.index_cast %107 : i32 to index
    %c0_30 = arith.constant 0 : index
    %109 = vector.load %arg10[%108, %c0_30] : memref<64x384xf32, #tpu.memory_space<vmem>>, vector<8x384xf32>
    %cst_31 = arith.constant dense<0.000000e+00> : vector<8x384xf32>
    %110 = tpu.matmul %105, %10, %cst_31 {dimension_numbers = #tpu.dot_dimension_numbers<[1], [0], [0], [1], [0, 0, 1, 1], [], []>} : vector<8x128xf32>, vector<128x384xf32>, vector<8x384xf32> -> vector<8x384xf32>
    %111 = vector.extract_strided_slice %109 {offsets = [0, 0], sizes = [8, 128], strides = [1, 1]} : vector<8x384xf32> to vector<8x128xf32>
    %112 = vector.extract_strided_slice %110 {offsets = [0, 0], sizes = [8, 128], strides = [1, 1]} : vector<8x384xf32> to vector<8x128xf32>
    %113 = arith.addf %111, %112 : vector<8x128xf32>
    %114 = arith.negf %113 : vector<8x128xf32>
    %115 = math.exp %114 : vector<8x128xf32>
    %cst_32 = arith.constant 1.000000e+00 : f32
    %116 = vector.broadcast %cst_32 : f32 to vector<8x128xf32>
    %117 = arith.addf %116, %115 : vector<8x128xf32>
    %118 = arith.divf %116, %117 : vector<8x128xf32>
    %119 = vector.extract_strided_slice %109 {offsets = [0, 128], sizes = [8, 128], strides = [1, 1]} : vector<8x384xf32> to vector<8x128xf32>
    %120 = vector.extract_strided_slice %110 {offsets = [0, 128], sizes = [8, 128], strides = [1, 1]} : vector<8x384xf32> to vector<8x128xf32>
    %121 = arith.addf %119, %120 : vector<8x128xf32>
    %122 = arith.negf %121 : vector<8x128xf32>
    %123 = math.exp %122 : vector<8x128xf32>
    %cst_33 = arith.constant 1.000000e+00 : f32
    %124 = vector.broadcast %cst_33 : f32 to vector<8x128xf32>
    %125 = arith.addf %124, %123 : vector<8x128xf32>
    %126 = arith.divf %124, %125 : vector<8x128xf32>
    %127 = vector.extract_strided_slice %109 {offsets = [0, 256], sizes = [8, 128], strides = [1, 1]} : vector<8x384xf32> to vector<8x128xf32>
    %128 = vector.extract_strided_slice %110 {offsets = [0, 256], sizes = [8, 128], strides = [1, 1]} : vector<8x384xf32> to vector<8x128xf32>
    %129 = vector.broadcast %11 : vector<1x128xf32> to vector<8x128xf32>
    %130 = arith.addf %128, %129 : vector<8x128xf32>
    %131 = arith.mulf %118, %130 : vector<8x128xf32>
    %132 = arith.addf %127, %131 : vector<8x128xf32>
    %133 = math.tanh %132 : vector<8x128xf32>
    %134 = arith.subf %105, %133 : vector<8x128xf32>
    %135 = arith.mulf %126, %134 : vector<8x128xf32>
    %136 = arith.addf %133, %135 : vector<8x128xf32>
    %c4_i32 = arith.constant 4 : i32
    %c8_i32_34 = arith.constant 8 : i32
    %137 = arith.muli %c4_i32, %c8_i32_34 : i32
    %138 = tpu.assume_multiple %137, 8 : i32
    %139 = arith.index_cast %138 : i32 to index
    %c0_35 = arith.constant 0 : index
    %140 = vector.load %arg10[%139, %c0_35] : memref<64x384xf32, #tpu.memory_space<vmem>>, vector<8x384xf32>
    %cst_36 = arith.constant dense<0.000000e+00> : vector<8x384xf32>
    %141 = tpu.matmul %136, %10, %cst_36 {dimension_numbers = #tpu.dot_dimension_numbers<[1], [0], [0], [1], [0, 0, 1, 1], [], []>} : vector<8x128xf32>, vector<128x384xf32>, vector<8x384xf32> -> vector<8x384xf32>
    %142 = vector.extract_strided_slice %140 {offsets = [0, 0], sizes = [8, 128], strides = [1, 1]} : vector<8x384xf32> to vector<8x128xf32>
    %143 = vector.extract_strided_slice %141 {offsets = [0, 0], sizes = [8, 128], strides = [1, 1]} : vector<8x384xf32> to vector<8x128xf32>
    %144 = arith.addf %142, %143 : vector<8x128xf32>
    %145 = arith.negf %144 : vector<8x128xf32>
    %146 = math.exp %145 : vector<8x128xf32>
    %cst_37 = arith.constant 1.000000e+00 : f32
    %147 = vector.broadcast %cst_37 : f32 to vector<8x128xf32>
    %148 = arith.addf %147, %146 : vector<8x128xf32>
    %149 = arith.divf %147, %148 : vector<8x128xf32>
    %150 = vector.extract_strided_slice %140 {offsets = [0, 128], sizes = [8, 128], strides = [1, 1]} : vector<8x384xf32> to vector<8x128xf32>
    %151 = vector.extract_strided_slice %141 {offsets = [0, 128], sizes = [8, 128], strides = [1, 1]} : vector<8x384xf32> to vector<8x128xf32>
    %152 = arith.addf %150, %151 : vector<8x128xf32>
    %153 = arith.negf %152 : vector<8x128xf32>
    %154 = math.exp %153 : vector<8x128xf32>
    %cst_38 = arith.constant 1.000000e+00 : f32
    %155 = vector.broadcast %cst_38 : f32 to vector<8x128xf32>
    %156 = arith.addf %155, %154 : vector<8x128xf32>
    %157 = arith.divf %155, %156 : vector<8x128xf32>
    %158 = vector.extract_strided_slice %140 {offsets = [0, 256], sizes = [8, 128], strides = [1, 1]} : vector<8x384xf32> to vector<8x128xf32>
    %159 = vector.extract_strided_slice %141 {offsets = [0, 256], sizes = [8, 128], strides = [1, 1]} : vector<8x384xf32> to vector<8x128xf32>
    %160 = vector.broadcast %11 : vector<1x128xf32> to vector<8x128xf32>
    %161 = arith.addf %159, %160 : vector<8x128xf32>
    %162 = arith.mulf %149, %161 : vector<8x128xf32>
    %163 = arith.addf %158, %162 : vector<8x128xf32>
    %164 = math.tanh %163 : vector<8x128xf32>
    %165 = arith.subf %136, %164 : vector<8x128xf32>
    %166 = arith.mulf %157, %165 : vector<8x128xf32>
    %167 = arith.addf %164, %166 : vector<8x128xf32>
    %c5_i32 = arith.constant 5 : i32
    %c8_i32_39 = arith.constant 8 : i32
    %168 = arith.muli %c5_i32, %c8_i32_39 : i32
    %169 = tpu.assume_multiple %168, 8 : i32
    %170 = arith.index_cast %169 : i32 to index
    %c0_40 = arith.constant 0 : index
    %171 = vector.load %arg10[%170, %c0_40] : memref<64x384xf32, #tpu.memory_space<vmem>>, vector<8x384xf32>
    %cst_41 = arith.constant dense<0.000000e+00> : vector<8x384xf32>
    %172 = tpu.matmul %167, %10, %cst_41 {dimension_numbers = #tpu.dot_dimension_numbers<[1], [0], [0], [1], [0, 0, 1, 1], [], []>} : vector<8x128xf32>, vector<128x384xf32>, vector<8x384xf32> -> vector<8x384xf32>
    %173 = vector.extract_strided_slice %171 {offsets = [0, 0], sizes = [8, 128], strides = [1, 1]} : vector<8x384xf32> to vector<8x128xf32>
    %174 = vector.extract_strided_slice %172 {offsets = [0, 0], sizes = [8, 128], strides = [1, 1]} : vector<8x384xf32> to vector<8x128xf32>
    %175 = arith.addf %173, %174 : vector<8x128xf32>
    %176 = arith.negf %175 : vector<8x128xf32>
    %177 = math.exp %176 : vector<8x128xf32>
    %cst_42 = arith.constant 1.000000e+00 : f32
    %178 = vector.broadcast %cst_42 : f32 to vector<8x128xf32>
    %179 = arith.addf %178, %177 : vector<8x128xf32>
    %180 = arith.divf %178, %179 : vector<8x128xf32>
    %181 = vector.extract_strided_slice %171 {offsets = [0, 128], sizes = [8, 128], strides = [1, 1]} : vector<8x384xf32> to vector<8x128xf32>
    %182 = vector.extract_strided_slice %172 {offsets = [0, 128], sizes = [8, 128], strides = [1, 1]} : vector<8x384xf32> to vector<8x128xf32>
    %183 = arith.addf %181, %182 : vector<8x128xf32>
    %184 = arith.negf %183 : vector<8x128xf32>
    %185 = math.exp %184 : vector<8x128xf32>
    %cst_43 = arith.constant 1.000000e+00 : f32
    %186 = vector.broadcast %cst_43 : f32 to vector<8x128xf32>
    %187 = arith.addf %186, %185 : vector<8x128xf32>
    %188 = arith.divf %186, %187 : vector<8x128xf32>
    %189 = vector.extract_strided_slice %171 {offsets = [0, 256], sizes = [8, 128], strides = [1, 1]} : vector<8x384xf32> to vector<8x128xf32>
    %190 = vector.extract_strided_slice %172 {offsets = [0, 256], sizes = [8, 128], strides = [1, 1]} : vector<8x384xf32> to vector<8x128xf32>
    %191 = vector.broadcast %11 : vector<1x128xf32> to vector<8x128xf32>
    %192 = arith.addf %190, %191 : vector<8x128xf32>
    %193 = arith.mulf %180, %192 : vector<8x128xf32>
    %194 = arith.addf %189, %193 : vector<8x128xf32>
    %195 = math.tanh %194 : vector<8x128xf32>
    %196 = arith.subf %167, %195 : vector<8x128xf32>
    %197 = arith.mulf %188, %196 : vector<8x128xf32>
    %198 = arith.addf %195, %197 : vector<8x128xf32>
    %c6_i32 = arith.constant 6 : i32
    %c8_i32_44 = arith.constant 8 : i32
    %199 = arith.muli %c6_i32, %c8_i32_44 : i32
    %200 = tpu.assume_multiple %199, 8 : i32
    %201 = arith.index_cast %200 : i32 to index
    %c0_45 = arith.constant 0 : index
    %202 = vector.load %arg10[%201, %c0_45] : memref<64x384xf32, #tpu.memory_space<vmem>>, vector<8x384xf32>
    %cst_46 = arith.constant dense<0.000000e+00> : vector<8x384xf32>
    %203 = tpu.matmul %198, %10, %cst_46 {dimension_numbers = #tpu.dot_dimension_numbers<[1], [0], [0], [1], [0, 0, 1, 1], [], []>} : vector<8x128xf32>, vector<128x384xf32>, vector<8x384xf32> -> vector<8x384xf32>
    %204 = vector.extract_strided_slice %202 {offsets = [0, 0], sizes = [8, 128], strides = [1, 1]} : vector<8x384xf32> to vector<8x128xf32>
    %205 = vector.extract_strided_slice %203 {offsets = [0, 0], sizes = [8, 128], strides = [1, 1]} : vector<8x384xf32> to vector<8x128xf32>
    %206 = arith.addf %204, %205 : vector<8x128xf32>
    %207 = arith.negf %206 : vector<8x128xf32>
    %208 = math.exp %207 : vector<8x128xf32>
    %cst_47 = arith.constant 1.000000e+00 : f32
    %209 = vector.broadcast %cst_47 : f32 to vector<8x128xf32>
    %210 = arith.addf %209, %208 : vector<8x128xf32>
    %211 = arith.divf %209, %210 : vector<8x128xf32>
    %212 = vector.extract_strided_slice %202 {offsets = [0, 128], sizes = [8, 128], strides = [1, 1]} : vector<8x384xf32> to vector<8x128xf32>
    %213 = vector.extract_strided_slice %203 {offsets = [0, 128], sizes = [8, 128], strides = [1, 1]} : vector<8x384xf32> to vector<8x128xf32>
    %214 = arith.addf %212, %213 : vector<8x128xf32>
    %215 = arith.negf %214 : vector<8x128xf32>
    %216 = math.exp %215 : vector<8x128xf32>
    %cst_48 = arith.constant 1.000000e+00 : f32
    %217 = vector.broadcast %cst_48 : f32 to vector<8x128xf32>
    %218 = arith.addf %217, %216 : vector<8x128xf32>
    %219 = arith.divf %217, %218 : vector<8x128xf32>
    %220 = vector.extract_strided_slice %202 {offsets = [0, 256], sizes = [8, 128], strides = [1, 1]} : vector<8x384xf32> to vector<8x128xf32>
    %221 = vector.extract_strided_slice %203 {offsets = [0, 256], sizes = [8, 128], strides = [1, 1]} : vector<8x384xf32> to vector<8x128xf32>
    %222 = vector.broadcast %11 : vector<1x128xf32> to vector<8x128xf32>
    %223 = arith.addf %221, %222 : vector<8x128xf32>
    %224 = arith.mulf %211, %223 : vector<8x128xf32>
    %225 = arith.addf %220, %224 : vector<8x128xf32>
    %226 = math.tanh %225 : vector<8x128xf32>
    %227 = arith.subf %198, %226 : vector<8x128xf32>
    %228 = arith.mulf %219, %227 : vector<8x128xf32>
    %229 = arith.addf %226, %228 : vector<8x128xf32>
    %c7_i32 = arith.constant 7 : i32
    %c8_i32_49 = arith.constant 8 : i32
    %230 = arith.muli %c7_i32, %c8_i32_49 : i32
    %231 = tpu.assume_multiple %230, 8 : i32
    %232 = arith.index_cast %231 : i32 to index
    %c0_50 = arith.constant 0 : index
    %233 = vector.load %arg10[%232, %c0_50] : memref<64x384xf32, #tpu.memory_space<vmem>>, vector<8x384xf32>
    %cst_51 = arith.constant dense<0.000000e+00> : vector<8x384xf32>
    %234 = tpu.matmul %229, %10, %cst_51 {dimension_numbers = #tpu.dot_dimension_numbers<[1], [0], [0], [1], [0, 0, 1, 1], [], []>} : vector<8x128xf32>, vector<128x384xf32>, vector<8x384xf32> -> vector<8x384xf32>
    %235 = vector.extract_strided_slice %233 {offsets = [0, 0], sizes = [8, 128], strides = [1, 1]} : vector<8x384xf32> to vector<8x128xf32>
    %236 = vector.extract_strided_slice %234 {offsets = [0, 0], sizes = [8, 128], strides = [1, 1]} : vector<8x384xf32> to vector<8x128xf32>
    %237 = arith.addf %235, %236 : vector<8x128xf32>
    %238 = arith.negf %237 : vector<8x128xf32>
    %239 = math.exp %238 : vector<8x128xf32>
    %cst_52 = arith.constant 1.000000e+00 : f32
    %240 = vector.broadcast %cst_52 : f32 to vector<8x128xf32>
    %241 = arith.addf %240, %239 : vector<8x128xf32>
    %242 = arith.divf %240, %241 : vector<8x128xf32>
    %243 = vector.extract_strided_slice %233 {offsets = [0, 128], sizes = [8, 128], strides = [1, 1]} : vector<8x384xf32> to vector<8x128xf32>
    %244 = vector.extract_strided_slice %234 {offsets = [0, 128], sizes = [8, 128], strides = [1, 1]} : vector<8x384xf32> to vector<8x128xf32>
    %245 = arith.addf %243, %244 : vector<8x128xf32>
    %246 = arith.negf %245 : vector<8x128xf32>
    %247 = math.exp %246 : vector<8x128xf32>
    %cst_53 = arith.constant 1.000000e+00 : f32
    %248 = vector.broadcast %cst_53 : f32 to vector<8x128xf32>
    %249 = arith.addf %248, %247 : vector<8x128xf32>
    %250 = arith.divf %248, %249 : vector<8x128xf32>
    %251 = vector.extract_strided_slice %233 {offsets = [0, 256], sizes = [8, 128], strides = [1, 1]} : vector<8x384xf32> to vector<8x128xf32>
    %252 = vector.extract_strided_slice %234 {offsets = [0, 256], sizes = [8, 128], strides = [1, 1]} : vector<8x384xf32> to vector<8x128xf32>
    %253 = vector.broadcast %11 : vector<1x128xf32> to vector<8x128xf32>
    %254 = arith.addf %252, %253 : vector<8x128xf32>
    %255 = arith.mulf %242, %254 : vector<8x128xf32>
    %256 = arith.addf %251, %255 : vector<8x128xf32>
    %257 = math.tanh %256 : vector<8x128xf32>
    %258 = arith.subf %229, %257 : vector<8x128xf32>
    %259 = arith.mulf %250, %258 : vector<8x128xf32>
    %260 = arith.addf %257, %259 : vector<8x128xf32>
    %c8_i32_54 = arith.constant 8 : i32
    %c0_55 = arith.constant 0 : index
    %c0_56 = arith.constant 0 : index
    %261 = vector.load %arg9[%c0_55, %c0_56] : memref<8x128xf32, #tpu.memory_space<vmem>>, vector<8x128xf32>
    tpu.vector_store %arg9[%c0_55, %c0_56], %260 {strides = array<i32>} : memref<8x128xf32, #tpu.memory_space<vmem>>, vector<8x128xf32>,
    %c0_i32_57 = arith.constant 0 : i32
    %262 = arith.cmpi eq, %arg0, %c0_i32_57 : i32
    %263 = arith.extui %262 : i1 to i32
    %c0_i32_58 = arith.constant 0 : i32
    %264 = arith.cmpi ne, %263, %c0_i32_58 : i32
    scf.if %264 {
      %c0_59 = arith.constant 0 : index
      %c0_60 = arith.constant 0 : index
      %265 = vector.load %arg6[%c0_59, %c0_60] : memref<128x128xf32, #tpu.memory_space<vmem>>, vector<128x128xf32>
      %cst_61 = arith.constant dense<0.000000e+00> : vector<8x128xf32>
      %266 = tpu.matmul %260, %265, %cst_61 {dimension_numbers = #tpu.dot_dimension_numbers<[1], [0], [0], [1], [0, 0, 1, 1], [], []>} : vector<8x128xf32>, vector<128x128xf32>, vector<8x128xf32> -> vector<8x128xf32>
      %c0_62 = arith.constant 0 : index
      %c0_63 = arith.constant 0 : index
      %267 = vector.load %arg7[%c0_62, %c0_63] : memref<1x128xf32, #tpu.memory_space<vmem>>, vector<1x128xf32>
      %268 = vector.broadcast %267 : vector<1x128xf32> to vector<8x128xf32>
      %269 = arith.addf %266, %268 : vector<8x128xf32>
      %c0_64 = arith.constant 0 : index
      %c0_65 = arith.constant 0 : index
      %270 = vector.load %arg8[%c0_64, %c0_65] : memref<8x128xf32, #tpu.memory_space<vmem>>, vector<8x128xf32>
      tpu.vector_store %arg8[%c0_64, %c0_65], %269 {strides = array<i32>} : memref<8x128xf32, #tpu.memory_space<vmem>>, vector<8x128xf32>,
    } else {
    }
    return
  }
  func.func @transform_0(%arg0: i32) -> (i32, i32) {
    %c0_i32 = arith.constant 0 : i32
    %c0_i32_0 = arith.constant 0 : i32
    return %arg0, %c0_i32 : i32, i32
  }
  func.func @transform_1(%arg0: i32) -> (i32, i32) {
    %c0_i32 = arith.constant 0 : i32
    %c0_i32_0 = arith.constant 0 : i32
    %c0_i32_1 = arith.constant 0 : i32
    return %c0_i32, %c0_i32_0 : i32, i32
  }
  func.func @transform_2(%arg0: i32) -> (i32, i32) {
    %c0_i32 = arith.constant 0 : i32
    %c0_i32_0 = arith.constant 0 : i32
    %c0_i32_1 = arith.constant 0 : i32
    return %c0_i32, %c0_i32_0 : i32, i32
  }
  func.func @transform_3(%arg0: i32) -> (i32, i32) {
    %c0_i32 = arith.constant 0 : i32
    %c0_i32_0 = arith.constant 0 : i32
    %c0_i32_1 = arith.constant 0 : i32
    return %c0_i32, %c0_i32_0 : i32, i32
  }
  func.func @transform_4(%arg0: i32) -> (i32, i32) {
    %c0_i32 = arith.constant 0 : i32
    %c0_i32_0 = arith.constant 0 : i32
    %c0_i32_1 = arith.constant 0 : i32
    return %c0_i32, %c0_i32_0 : i32, i32
  }
  func.func @transform_5(%arg0: i32) -> (i32, i32) {
    %c0_i32 = arith.constant 0 : i32
    %c0_i32_0 = arith.constant 0 : i32
    %c0_i32_1 = arith.constant 0 : i32
    return %c0_i32, %c0_i32_0 : i32, i32
  }
  func.func @transform_6(%arg0: i32) -> (i32, i32) {
    %c0_i32 = arith.constant 0 : i32
    %c0_i32_0 = arith.constant 0 : i32
    %c0_i32_1 = arith.constant 0 : i32
    return %c0_i32, %c0_i32_0 : i32, i32
  }
  func.func @transform_7(%arg0: i32) -> (i32, i32) {
    %c0_i32 = arith.constant 0 : i32
    %c0_i32_0 = arith.constant 0 : i32
    %c0_i32_1 = arith.constant 0 : i32
    return %c0_i32, %c0_i32_0 : i32, i32
  }
}

module attributes {stable_mosaic.version = 11 : i64} {
  func.func @gru_seq_kernel(%arg0: i32, %arg1: memref<64x128xf32, #tpu.memory_space<vmem>>, %arg2: memref<128x384xf32, #tpu.memory_space<vmem>>, %arg3: memref<128x384xf32, #tpu.memory_space<vmem>>, %arg4: memref<1x384xf32, #tpu.memory_space<vmem>>, %arg5: memref<1x128xf32, #tpu.memory_space<vmem>>, %arg6: memref<64x128xf32, #tpu.memory_space<vmem>>, %arg7: memref<8x128xf32, #tpu.memory_space<vmem>>, %arg8: memref<64x384xf32, #tpu.memory_space<vmem>>) attributes {dimension_semantics = [#tpu.dimension_semantics<arbitrary>], iteration_bounds = array<i64: 1>, scalar_prefetch = 0 : i64, scratch_operands = 2 : i64, tpu.core_type = #tpu.core_type<tc>, window_params = [{transform_indices = @transform_0, window_bounds = array<i64: 64, 128>}, {pipeline_mode = #tpu.pipeline_mode<synchronous>, transform_indices = @transform_1, window_bounds = array<i64: 128, 384>}, {pipeline_mode = #tpu.pipeline_mode<synchronous>, transform_indices = @transform_2, window_bounds = array<i64: 128, 384>}, {pipeline_mode = #tpu.pipeline_mode<synchronous>, transform_indices = @transform_3, window_bounds = array<i64: 1, 384>}, {pipeline_mode = #tpu.pipeline_mode<synchronous>, transform_indices = @transform_4, window_bounds = array<i64: 1, 128>}, {transform_indices = @transform_5, window_bounds = array<i64: 64, 128>}]} {
    %c0_i32 = arith.constant 0 : i32
    %0 = arith.cmpi eq, %arg0, %c0_i32 : i32
    %1 = arith.extui %0 : i1 to i32
    %c0_i32_0 = arith.constant 0 : i32
    %2 = arith.cmpi ne, %1, %c0_i32_0 : i32
    scf.if %2 {
      %cst_65 = arith.constant 0.000000e+00 : f32
      %278 = vector.broadcast %cst_65 : f32 to vector<8x128xf32>
      %c0_66 = arith.constant 0 : index
      %c0_67 = arith.constant 0 : index
      %279 = vector.load %arg7[%c0_66, %c0_67] : memref<8x128xf32, #tpu.memory_space<vmem>>, vector<8x128xf32>
      tpu.vector_store %arg7[%c0_66, %c0_67], %278 {strides = array<i32>} : memref<8x128xf32, #tpu.memory_space<vmem>>, vector<8x128xf32>,
    } else {
    }
    %c0 = arith.constant 0 : index
    %c0_1 = arith.constant 0 : index
    %3 = vector.load %arg1[%c0, %c0_1] : memref<64x128xf32, #tpu.memory_space<vmem>>, vector<64x128xf32>
    %c0_2 = arith.constant 0 : index
    %c0_3 = arith.constant 0 : index
    %4 = vector.load %arg2[%c0_2, %c0_3] : memref<128x384xf32, #tpu.memory_space<vmem>>, vector<128x384xf32>
    %cst = arith.constant dense<0.000000e+00> : vector<64x384xf32>
    %5 = tpu.matmul %3, %4, %cst {dimension_numbers = #tpu.dot_dimension_numbers<[1], [0], [0], [1], [0, 0, 1, 1], [], []>} : vector<64x128xf32>, vector<128x384xf32>, vector<64x384xf32> -> vector<64x384xf32>
    %c0_4 = arith.constant 0 : index
    %c0_5 = arith.constant 0 : index
    %6 = vector.load %arg4[%c0_4, %c0_5] : memref<1x384xf32, #tpu.memory_space<vmem>>, vector<1x384xf32>
    %7 = vector.broadcast %6 : vector<1x384xf32> to vector<64x384xf32>
    %8 = arith.addf %5, %7 : vector<64x384xf32>
    %c0_6 = arith.constant 0 : index
    %c0_7 = arith.constant 0 : index
    %9 = vector.load %arg8[%c0_6, %c0_7] : memref<64x384xf32, #tpu.memory_space<vmem>>, vector<64x384xf32>
    tpu.vector_store %arg8[%c0_6, %c0_7], %8 {strides = array<i32>} : memref<64x384xf32, #tpu.memory_space<vmem>>, vector<64x384xf32>,
    %c0_8 = arith.constant 0 : index
    %c0_9 = arith.constant 0 : index
    %10 = vector.load %arg3[%c0_8, %c0_9] : memref<128x384xf32, #tpu.memory_space<vmem>>, vector<128x384xf32>
    %c0_10 = arith.constant 0 : index
    %c0_11 = arith.constant 0 : index
    %11 = vector.load %arg5[%c0_10, %c0_11] : memref<1x128xf32, #tpu.memory_space<vmem>>, vector<1x128xf32>
    %c0_12 = arith.constant 0 : index
    %c0_13 = arith.constant 0 : index
    %12 = vector.load %arg7[%c0_12, %c0_13] : memref<8x128xf32, #tpu.memory_space<vmem>>, vector<8x128xf32>
    %c0_i32_14 = arith.constant 0 : i32
    %c8_i32 = arith.constant 8 : i32
    %13 = arith.muli %c0_i32_14, %c8_i32 : i32
    %14 = tpu.assume_multiple %13, 8 : i32
    %15 = arith.index_cast %14 : i32 to index
    %c0_15 = arith.constant 0 : index
    %16 = vector.load %arg8[%15, %c0_15] : memref<64x384xf32, #tpu.memory_space<vmem>>, vector<8x384xf32>
    %cst_16 = arith.constant dense<0.000000e+00> : vector<8x384xf32>
    %17 = tpu.matmul %12, %10, %cst_16 {dimension_numbers = #tpu.dot_dimension_numbers<[1], [0], [0], [1], [0, 0, 1, 1], [], []>} : vector<8x128xf32>, vector<128x384xf32>, vector<8x384xf32> -> vector<8x384xf32>
    %18 = vector.extract_strided_slice %16 {offsets = [0, 0], sizes = [8, 128], strides = [1, 1]} : vector<8x384xf32> to vector<8x128xf32>
    %19 = vector.extract_strided_slice %17 {offsets = [0, 0], sizes = [8, 128], strides = [1, 1]} : vector<8x384xf32> to vector<8x128xf32>
    %20 = arith.addf %18, %19 : vector<8x128xf32>
    %21 = arith.negf %20 : vector<8x128xf32>
    %22 = math.exp %21 : vector<8x128xf32>
    %cst_17 = arith.constant 1.000000e+00 : f32
    %23 = vector.broadcast %cst_17 : f32 to vector<8x128xf32>
    %24 = arith.addf %23, %22 : vector<8x128xf32>
    %25 = arith.divf %23, %24 : vector<8x128xf32>
    %26 = vector.extract_strided_slice %16 {offsets = [0, 128], sizes = [8, 128], strides = [1, 1]} : vector<8x384xf32> to vector<8x128xf32>
    %27 = vector.extract_strided_slice %17 {offsets = [0, 128], sizes = [8, 128], strides = [1, 1]} : vector<8x384xf32> to vector<8x128xf32>
    %28 = arith.addf %26, %27 : vector<8x128xf32>
    %29 = arith.negf %28 : vector<8x128xf32>
    %30 = math.exp %29 : vector<8x128xf32>
    %cst_18 = arith.constant 1.000000e+00 : f32
    %31 = vector.broadcast %cst_18 : f32 to vector<8x128xf32>
    %32 = arith.addf %31, %30 : vector<8x128xf32>
    %33 = arith.divf %31, %32 : vector<8x128xf32>
    %34 = vector.extract_strided_slice %16 {offsets = [0, 256], sizes = [8, 128], strides = [1, 1]} : vector<8x384xf32> to vector<8x128xf32>
    %35 = vector.extract_strided_slice %17 {offsets = [0, 256], sizes = [8, 128], strides = [1, 1]} : vector<8x384xf32> to vector<8x128xf32>
    %36 = vector.broadcast %11 : vector<1x128xf32> to vector<8x128xf32>
    %37 = arith.addf %35, %36 : vector<8x128xf32>
    %38 = arith.mulf %25, %37 : vector<8x128xf32>
    %39 = arith.addf %34, %38 : vector<8x128xf32>
    %40 = math.tanh %39 : vector<8x128xf32>
    %41 = arith.subf %12, %40 : vector<8x128xf32>
    %42 = arith.mulf %33, %41 : vector<8x128xf32>
    %43 = arith.addf %40, %42 : vector<8x128xf32>
    %44 = arith.index_cast %14 : i32 to index
    %c0_19 = arith.constant 0 : index
    %45 = vector.load %arg6[%44, %c0_19] : memref<64x128xf32, #tpu.memory_space<vmem>>, vector<8x128xf32>
    tpu.vector_store %arg6[%44, %c0_19], %43 {strides = array<i32>} : memref<64x128xf32, #tpu.memory_space<vmem>>, vector<8x128xf32>,
    %c1_i32 = arith.constant 1 : i32
    %c8_i32_20 = arith.constant 8 : i32
    %46 = arith.muli %c1_i32, %c8_i32_20 : i32
    %47 = tpu.assume_multiple %46, 8 : i32
    %48 = arith.index_cast %47 : i32 to index
    %c0_21 = arith.constant 0 : index
    %49 = vector.load %arg8[%48, %c0_21] : memref<64x384xf32, #tpu.memory_space<vmem>>, vector<8x384xf32>
    %cst_22 = arith.constant dense<0.000000e+00> : vector<8x384xf32>
    %50 = tpu.matmul %43, %10, %cst_22 {dimension_numbers = #tpu.dot_dimension_numbers<[1], [0], [0], [1], [0, 0, 1, 1], [], []>} : vector<8x128xf32>, vector<128x384xf32>, vector<8x384xf32> -> vector<8x384xf32>
    %51 = vector.extract_strided_slice %49 {offsets = [0, 0], sizes = [8, 128], strides = [1, 1]} : vector<8x384xf32> to vector<8x128xf32>
    %52 = vector.extract_strided_slice %50 {offsets = [0, 0], sizes = [8, 128], strides = [1, 1]} : vector<8x384xf32> to vector<8x128xf32>
    %53 = arith.addf %51, %52 : vector<8x128xf32>
    %54 = arith.negf %53 : vector<8x128xf32>
    %55 = math.exp %54 : vector<8x128xf32>
    %cst_23 = arith.constant 1.000000e+00 : f32
    %56 = vector.broadcast %cst_23 : f32 to vector<8x128xf32>
    %57 = arith.addf %56, %55 : vector<8x128xf32>
    %58 = arith.divf %56, %57 : vector<8x128xf32>
    %59 = vector.extract_strided_slice %49 {offsets = [0, 128], sizes = [8, 128], strides = [1, 1]} : vector<8x384xf32> to vector<8x128xf32>
    %60 = vector.extract_strided_slice %50 {offsets = [0, 128], sizes = [8, 128], strides = [1, 1]} : vector<8x384xf32> to vector<8x128xf32>
    %61 = arith.addf %59, %60 : vector<8x128xf32>
    %62 = arith.negf %61 : vector<8x128xf32>
    %63 = math.exp %62 : vector<8x128xf32>
    %cst_24 = arith.constant 1.000000e+00 : f32
    %64 = vector.broadcast %cst_24 : f32 to vector<8x128xf32>
    %65 = arith.addf %64, %63 : vector<8x128xf32>
    %66 = arith.divf %64, %65 : vector<8x128xf32>
    %67 = vector.extract_strided_slice %49 {offsets = [0, 256], sizes = [8, 128], strides = [1, 1]} : vector<8x384xf32> to vector<8x128xf32>
    %68 = vector.extract_strided_slice %50 {offsets = [0, 256], sizes = [8, 128], strides = [1, 1]} : vector<8x384xf32> to vector<8x128xf32>
    %69 = vector.broadcast %11 : vector<1x128xf32> to vector<8x128xf32>
    %70 = arith.addf %68, %69 : vector<8x128xf32>
    %71 = arith.mulf %58, %70 : vector<8x128xf32>
    %72 = arith.addf %67, %71 : vector<8x128xf32>
    %73 = math.tanh %72 : vector<8x128xf32>
    %74 = arith.subf %43, %73 : vector<8x128xf32>
    %75 = arith.mulf %66, %74 : vector<8x128xf32>
    %76 = arith.addf %73, %75 : vector<8x128xf32>
    %77 = arith.index_cast %47 : i32 to index
    %c0_25 = arith.constant 0 : index
    %78 = vector.load %arg6[%77, %c0_25] : memref<64x128xf32, #tpu.memory_space<vmem>>, vector<8x128xf32>
    tpu.vector_store %arg6[%77, %c0_25], %76 {strides = array<i32>} : memref<64x128xf32, #tpu.memory_space<vmem>>, vector<8x128xf32>,
    %c2_i32 = arith.constant 2 : i32
    %c8_i32_26 = arith.constant 8 : i32
    %79 = arith.muli %c2_i32, %c8_i32_26 : i32
    %80 = tpu.assume_multiple %79, 8 : i32
    %81 = arith.index_cast %80 : i32 to index
    %c0_27 = arith.constant 0 : index
    %82 = vector.load %arg8[%81, %c0_27] : memref<64x384xf32, #tpu.memory_space<vmem>>, vector<8x384xf32>
    %cst_28 = arith.constant dense<0.000000e+00> : vector<8x384xf32>
    %83 = tpu.matmul %76, %10, %cst_28 {dimension_numbers = #tpu.dot_dimension_numbers<[1], [0], [0], [1], [0, 0, 1, 1], [], []>} : vector<8x128xf32>, vector<128x384xf32>, vector<8x384xf32> -> vector<8x384xf32>
    %84 = vector.extract_strided_slice %82 {offsets = [0, 0], sizes = [8, 128], strides = [1, 1]} : vector<8x384xf32> to vector<8x128xf32>
    %85 = vector.extract_strided_slice %83 {offsets = [0, 0], sizes = [8, 128], strides = [1, 1]} : vector<8x384xf32> to vector<8x128xf32>
    %86 = arith.addf %84, %85 : vector<8x128xf32>
    %87 = arith.negf %86 : vector<8x128xf32>
    %88 = math.exp %87 : vector<8x128xf32>
    %cst_29 = arith.constant 1.000000e+00 : f32
    %89 = vector.broadcast %cst_29 : f32 to vector<8x128xf32>
    %90 = arith.addf %89, %88 : vector<8x128xf32>
    %91 = arith.divf %89, %90 : vector<8x128xf32>
    %92 = vector.extract_strided_slice %82 {offsets = [0, 128], sizes = [8, 128], strides = [1, 1]} : vector<8x384xf32> to vector<8x128xf32>
    %93 = vector.extract_strided_slice %83 {offsets = [0, 128], sizes = [8, 128], strides = [1, 1]} : vector<8x384xf32> to vector<8x128xf32>
    %94 = arith.addf %92, %93 : vector<8x128xf32>
    %95 = arith.negf %94 : vector<8x128xf32>
    %96 = math.exp %95 : vector<8x128xf32>
    %cst_30 = arith.constant 1.000000e+00 : f32
    %97 = vector.broadcast %cst_30 : f32 to vector<8x128xf32>
    %98 = arith.addf %97, %96 : vector<8x128xf32>
    %99 = arith.divf %97, %98 : vector<8x128xf32>
    %100 = vector.extract_strided_slice %82 {offsets = [0, 256], sizes = [8, 128], strides = [1, 1]} : vector<8x384xf32> to vector<8x128xf32>
    %101 = vector.extract_strided_slice %83 {offsets = [0, 256], sizes = [8, 128], strides = [1, 1]} : vector<8x384xf32> to vector<8x128xf32>
    %102 = vector.broadcast %11 : vector<1x128xf32> to vector<8x128xf32>
    %103 = arith.addf %101, %102 : vector<8x128xf32>
    %104 = arith.mulf %91, %103 : vector<8x128xf32>
    %105 = arith.addf %100, %104 : vector<8x128xf32>
    %106 = math.tanh %105 : vector<8x128xf32>
    %107 = arith.subf %76, %106 : vector<8x128xf32>
    %108 = arith.mulf %99, %107 : vector<8x128xf32>
    %109 = arith.addf %106, %108 : vector<8x128xf32>
    %110 = arith.index_cast %80 : i32 to index
    %c0_31 = arith.constant 0 : index
    %111 = vector.load %arg6[%110, %c0_31] : memref<64x128xf32, #tpu.memory_space<vmem>>, vector<8x128xf32>
    tpu.vector_store %arg6[%110, %c0_31], %109 {strides = array<i32>} : memref<64x128xf32, #tpu.memory_space<vmem>>, vector<8x128xf32>,
    %c3_i32 = arith.constant 3 : i32
    %c8_i32_32 = arith.constant 8 : i32
    %112 = arith.muli %c3_i32, %c8_i32_32 : i32
    %113 = tpu.assume_multiple %112, 8 : i32
    %114 = arith.index_cast %113 : i32 to index
    %c0_33 = arith.constant 0 : index
    %115 = vector.load %arg8[%114, %c0_33] : memref<64x384xf32, #tpu.memory_space<vmem>>, vector<8x384xf32>
    %cst_34 = arith.constant dense<0.000000e+00> : vector<8x384xf32>
    %116 = tpu.matmul %109, %10, %cst_34 {dimension_numbers = #tpu.dot_dimension_numbers<[1], [0], [0], [1], [0, 0, 1, 1], [], []>} : vector<8x128xf32>, vector<128x384xf32>, vector<8x384xf32> -> vector<8x384xf32>
    %117 = vector.extract_strided_slice %115 {offsets = [0, 0], sizes = [8, 128], strides = [1, 1]} : vector<8x384xf32> to vector<8x128xf32>
    %118 = vector.extract_strided_slice %116 {offsets = [0, 0], sizes = [8, 128], strides = [1, 1]} : vector<8x384xf32> to vector<8x128xf32>
    %119 = arith.addf %117, %118 : vector<8x128xf32>
    %120 = arith.negf %119 : vector<8x128xf32>
    %121 = math.exp %120 : vector<8x128xf32>
    %cst_35 = arith.constant 1.000000e+00 : f32
    %122 = vector.broadcast %cst_35 : f32 to vector<8x128xf32>
    %123 = arith.addf %122, %121 : vector<8x128xf32>
    %124 = arith.divf %122, %123 : vector<8x128xf32>
    %125 = vector.extract_strided_slice %115 {offsets = [0, 128], sizes = [8, 128], strides = [1, 1]} : vector<8x384xf32> to vector<8x128xf32>
    %126 = vector.extract_strided_slice %116 {offsets = [0, 128], sizes = [8, 128], strides = [1, 1]} : vector<8x384xf32> to vector<8x128xf32>
    %127 = arith.addf %125, %126 : vector<8x128xf32>
    %128 = arith.negf %127 : vector<8x128xf32>
    %129 = math.exp %128 : vector<8x128xf32>
    %cst_36 = arith.constant 1.000000e+00 : f32
    %130 = vector.broadcast %cst_36 : f32 to vector<8x128xf32>
    %131 = arith.addf %130, %129 : vector<8x128xf32>
    %132 = arith.divf %130, %131 : vector<8x128xf32>
    %133 = vector.extract_strided_slice %115 {offsets = [0, 256], sizes = [8, 128], strides = [1, 1]} : vector<8x384xf32> to vector<8x128xf32>
    %134 = vector.extract_strided_slice %116 {offsets = [0, 256], sizes = [8, 128], strides = [1, 1]} : vector<8x384xf32> to vector<8x128xf32>
    %135 = vector.broadcast %11 : vector<1x128xf32> to vector<8x128xf32>
    %136 = arith.addf %134, %135 : vector<8x128xf32>
    %137 = arith.mulf %124, %136 : vector<8x128xf32>
    %138 = arith.addf %133, %137 : vector<8x128xf32>
    %139 = math.tanh %138 : vector<8x128xf32>
    %140 = arith.subf %109, %139 : vector<8x128xf32>
    %141 = arith.mulf %132, %140 : vector<8x128xf32>
    %142 = arith.addf %139, %141 : vector<8x128xf32>
    %143 = arith.index_cast %113 : i32 to index
    %c0_37 = arith.constant 0 : index
    %144 = vector.load %arg6[%143, %c0_37] : memref<64x128xf32, #tpu.memory_space<vmem>>, vector<8x128xf32>
    tpu.vector_store %arg6[%143, %c0_37], %142 {strides = array<i32>} : memref<64x128xf32, #tpu.memory_space<vmem>>, vector<8x128xf32>,
    %c4_i32 = arith.constant 4 : i32
    %c8_i32_38 = arith.constant 8 : i32
    %145 = arith.muli %c4_i32, %c8_i32_38 : i32
    %146 = tpu.assume_multiple %145, 8 : i32
    %147 = arith.index_cast %146 : i32 to index
    %c0_39 = arith.constant 0 : index
    %148 = vector.load %arg8[%147, %c0_39] : memref<64x384xf32, #tpu.memory_space<vmem>>, vector<8x384xf32>
    %cst_40 = arith.constant dense<0.000000e+00> : vector<8x384xf32>
    %149 = tpu.matmul %142, %10, %cst_40 {dimension_numbers = #tpu.dot_dimension_numbers<[1], [0], [0], [1], [0, 0, 1, 1], [], []>} : vector<8x128xf32>, vector<128x384xf32>, vector<8x384xf32> -> vector<8x384xf32>
    %150 = vector.extract_strided_slice %148 {offsets = [0, 0], sizes = [8, 128], strides = [1, 1]} : vector<8x384xf32> to vector<8x128xf32>
    %151 = vector.extract_strided_slice %149 {offsets = [0, 0], sizes = [8, 128], strides = [1, 1]} : vector<8x384xf32> to vector<8x128xf32>
    %152 = arith.addf %150, %151 : vector<8x128xf32>
    %153 = arith.negf %152 : vector<8x128xf32>
    %154 = math.exp %153 : vector<8x128xf32>
    %cst_41 = arith.constant 1.000000e+00 : f32
    %155 = vector.broadcast %cst_41 : f32 to vector<8x128xf32>
    %156 = arith.addf %155, %154 : vector<8x128xf32>
    %157 = arith.divf %155, %156 : vector<8x128xf32>
    %158 = vector.extract_strided_slice %148 {offsets = [0, 128], sizes = [8, 128], strides = [1, 1]} : vector<8x384xf32> to vector<8x128xf32>
    %159 = vector.extract_strided_slice %149 {offsets = [0, 128], sizes = [8, 128], strides = [1, 1]} : vector<8x384xf32> to vector<8x128xf32>
    %160 = arith.addf %158, %159 : vector<8x128xf32>
    %161 = arith.negf %160 : vector<8x128xf32>
    %162 = math.exp %161 : vector<8x128xf32>
    %cst_42 = arith.constant 1.000000e+00 : f32
    %163 = vector.broadcast %cst_42 : f32 to vector<8x128xf32>
    %164 = arith.addf %163, %162 : vector<8x128xf32>
    %165 = arith.divf %163, %164 : vector<8x128xf32>
    %166 = vector.extract_strided_slice %148 {offsets = [0, 256], sizes = [8, 128], strides = [1, 1]} : vector<8x384xf32> to vector<8x128xf32>
    %167 = vector.extract_strided_slice %149 {offsets = [0, 256], sizes = [8, 128], strides = [1, 1]} : vector<8x384xf32> to vector<8x128xf32>
    %168 = vector.broadcast %11 : vector<1x128xf32> to vector<8x128xf32>
    %169 = arith.addf %167, %168 : vector<8x128xf32>
    %170 = arith.mulf %157, %169 : vector<8x128xf32>
    %171 = arith.addf %166, %170 : vector<8x128xf32>
    %172 = math.tanh %171 : vector<8x128xf32>
    %173 = arith.subf %142, %172 : vector<8x128xf32>
    %174 = arith.mulf %165, %173 : vector<8x128xf32>
    %175 = arith.addf %172, %174 : vector<8x128xf32>
    %176 = arith.index_cast %146 : i32 to index
    %c0_43 = arith.constant 0 : index
    %177 = vector.load %arg6[%176, %c0_43] : memref<64x128xf32, #tpu.memory_space<vmem>>, vector<8x128xf32>
    tpu.vector_store %arg6[%176, %c0_43], %175 {strides = array<i32>} : memref<64x128xf32, #tpu.memory_space<vmem>>, vector<8x128xf32>,
    %c5_i32 = arith.constant 5 : i32
    %c8_i32_44 = arith.constant 8 : i32
    %178 = arith.muli %c5_i32, %c8_i32_44 : i32
    %179 = tpu.assume_multiple %178, 8 : i32
    %180 = arith.index_cast %179 : i32 to index
    %c0_45 = arith.constant 0 : index
    %181 = vector.load %arg8[%180, %c0_45] : memref<64x384xf32, #tpu.memory_space<vmem>>, vector<8x384xf32>
    %cst_46 = arith.constant dense<0.000000e+00> : vector<8x384xf32>
    %182 = tpu.matmul %175, %10, %cst_46 {dimension_numbers = #tpu.dot_dimension_numbers<[1], [0], [0], [1], [0, 0, 1, 1], [], []>} : vector<8x128xf32>, vector<128x384xf32>, vector<8x384xf32> -> vector<8x384xf32>
    %183 = vector.extract_strided_slice %181 {offsets = [0, 0], sizes = [8, 128], strides = [1, 1]} : vector<8x384xf32> to vector<8x128xf32>
    %184 = vector.extract_strided_slice %182 {offsets = [0, 0], sizes = [8, 128], strides = [1, 1]} : vector<8x384xf32> to vector<8x128xf32>
    %185 = arith.addf %183, %184 : vector<8x128xf32>
    %186 = arith.negf %185 : vector<8x128xf32>
    %187 = math.exp %186 : vector<8x128xf32>
    %cst_47 = arith.constant 1.000000e+00 : f32
    %188 = vector.broadcast %cst_47 : f32 to vector<8x128xf32>
    %189 = arith.addf %188, %187 : vector<8x128xf32>
    %190 = arith.divf %188, %189 : vector<8x128xf32>
    %191 = vector.extract_strided_slice %181 {offsets = [0, 128], sizes = [8, 128], strides = [1, 1]} : vector<8x384xf32> to vector<8x128xf32>
    %192 = vector.extract_strided_slice %182 {offsets = [0, 128], sizes = [8, 128], strides = [1, 1]} : vector<8x384xf32> to vector<8x128xf32>
    %193 = arith.addf %191, %192 : vector<8x128xf32>
    %194 = arith.negf %193 : vector<8x128xf32>
    %195 = math.exp %194 : vector<8x128xf32>
    %cst_48 = arith.constant 1.000000e+00 : f32
    %196 = vector.broadcast %cst_48 : f32 to vector<8x128xf32>
    %197 = arith.addf %196, %195 : vector<8x128xf32>
    %198 = arith.divf %196, %197 : vector<8x128xf32>
    %199 = vector.extract_strided_slice %181 {offsets = [0, 256], sizes = [8, 128], strides = [1, 1]} : vector<8x384xf32> to vector<8x128xf32>
    %200 = vector.extract_strided_slice %182 {offsets = [0, 256], sizes = [8, 128], strides = [1, 1]} : vector<8x384xf32> to vector<8x128xf32>
    %201 = vector.broadcast %11 : vector<1x128xf32> to vector<8x128xf32>
    %202 = arith.addf %200, %201 : vector<8x128xf32>
    %203 = arith.mulf %190, %202 : vector<8x128xf32>
    %204 = arith.addf %199, %203 : vector<8x128xf32>
    %205 = math.tanh %204 : vector<8x128xf32>
    %206 = arith.subf %175, %205 : vector<8x128xf32>
    %207 = arith.mulf %198, %206 : vector<8x128xf32>
    %208 = arith.addf %205, %207 : vector<8x128xf32>
    %209 = arith.index_cast %179 : i32 to index
    %c0_49 = arith.constant 0 : index
    %210 = vector.load %arg6[%209, %c0_49] : memref<64x128xf32, #tpu.memory_space<vmem>>, vector<8x128xf32>
    tpu.vector_store %arg6[%209, %c0_49], %208 {strides = array<i32>} : memref<64x128xf32, #tpu.memory_space<vmem>>, vector<8x128xf32>,
    %c6_i32 = arith.constant 6 : i32
    %c8_i32_50 = arith.constant 8 : i32
    %211 = arith.muli %c6_i32, %c8_i32_50 : i32
    %212 = tpu.assume_multiple %211, 8 : i32
    %213 = arith.index_cast %212 : i32 to index
    %c0_51 = arith.constant 0 : index
    %214 = vector.load %arg8[%213, %c0_51] : memref<64x384xf32, #tpu.memory_space<vmem>>, vector<8x384xf32>
    %cst_52 = arith.constant dense<0.000000e+00> : vector<8x384xf32>
    %215 = tpu.matmul %208, %10, %cst_52 {dimension_numbers = #tpu.dot_dimension_numbers<[1], [0], [0], [1], [0, 0, 1, 1], [], []>} : vector<8x128xf32>, vector<128x384xf32>, vector<8x384xf32> -> vector<8x384xf32>
    %216 = vector.extract_strided_slice %214 {offsets = [0, 0], sizes = [8, 128], strides = [1, 1]} : vector<8x384xf32> to vector<8x128xf32>
    %217 = vector.extract_strided_slice %215 {offsets = [0, 0], sizes = [8, 128], strides = [1, 1]} : vector<8x384xf32> to vector<8x128xf32>
    %218 = arith.addf %216, %217 : vector<8x128xf32>
    %219 = arith.negf %218 : vector<8x128xf32>
    %220 = math.exp %219 : vector<8x128xf32>
    %cst_53 = arith.constant 1.000000e+00 : f32
    %221 = vector.broadcast %cst_53 : f32 to vector<8x128xf32>
    %222 = arith.addf %221, %220 : vector<8x128xf32>
    %223 = arith.divf %221, %222 : vector<8x128xf32>
    %224 = vector.extract_strided_slice %214 {offsets = [0, 128], sizes = [8, 128], strides = [1, 1]} : vector<8x384xf32> to vector<8x128xf32>
    %225 = vector.extract_strided_slice %215 {offsets = [0, 128], sizes = [8, 128], strides = [1, 1]} : vector<8x384xf32> to vector<8x128xf32>
    %226 = arith.addf %224, %225 : vector<8x128xf32>
    %227 = arith.negf %226 : vector<8x128xf32>
    %228 = math.exp %227 : vector<8x128xf32>
    %cst_54 = arith.constant 1.000000e+00 : f32
    %229 = vector.broadcast %cst_54 : f32 to vector<8x128xf32>
    %230 = arith.addf %229, %228 : vector<8x128xf32>
    %231 = arith.divf %229, %230 : vector<8x128xf32>
    %232 = vector.extract_strided_slice %214 {offsets = [0, 256], sizes = [8, 128], strides = [1, 1]} : vector<8x384xf32> to vector<8x128xf32>
    %233 = vector.extract_strided_slice %215 {offsets = [0, 256], sizes = [8, 128], strides = [1, 1]} : vector<8x384xf32> to vector<8x128xf32>
    %234 = vector.broadcast %11 : vector<1x128xf32> to vector<8x128xf32>
    %235 = arith.addf %233, %234 : vector<8x128xf32>
    %236 = arith.mulf %223, %235 : vector<8x128xf32>
    %237 = arith.addf %232, %236 : vector<8x128xf32>
    %238 = math.tanh %237 : vector<8x128xf32>
    %239 = arith.subf %208, %238 : vector<8x128xf32>
    %240 = arith.mulf %231, %239 : vector<8x128xf32>
    %241 = arith.addf %238, %240 : vector<8x128xf32>
    %242 = arith.index_cast %212 : i32 to index
    %c0_55 = arith.constant 0 : index
    %243 = vector.load %arg6[%242, %c0_55] : memref<64x128xf32, #tpu.memory_space<vmem>>, vector<8x128xf32>
    tpu.vector_store %arg6[%242, %c0_55], %241 {strides = array<i32>} : memref<64x128xf32, #tpu.memory_space<vmem>>, vector<8x128xf32>,
    %c7_i32 = arith.constant 7 : i32
    %c8_i32_56 = arith.constant 8 : i32
    %244 = arith.muli %c7_i32, %c8_i32_56 : i32
    %245 = tpu.assume_multiple %244, 8 : i32
    %246 = arith.index_cast %245 : i32 to index
    %c0_57 = arith.constant 0 : index
    %247 = vector.load %arg8[%246, %c0_57] : memref<64x384xf32, #tpu.memory_space<vmem>>, vector<8x384xf32>
    %cst_58 = arith.constant dense<0.000000e+00> : vector<8x384xf32>
    %248 = tpu.matmul %241, %10, %cst_58 {dimension_numbers = #tpu.dot_dimension_numbers<[1], [0], [0], [1], [0, 0, 1, 1], [], []>} : vector<8x128xf32>, vector<128x384xf32>, vector<8x384xf32> -> vector<8x384xf32>
    %249 = vector.extract_strided_slice %247 {offsets = [0, 0], sizes = [8, 128], strides = [1, 1]} : vector<8x384xf32> to vector<8x128xf32>
    %250 = vector.extract_strided_slice %248 {offsets = [0, 0], sizes = [8, 128], strides = [1, 1]} : vector<8x384xf32> to vector<8x128xf32>
    %251 = arith.addf %249, %250 : vector<8x128xf32>
    %252 = arith.negf %251 : vector<8x128xf32>
    %253 = math.exp %252 : vector<8x128xf32>
    %cst_59 = arith.constant 1.000000e+00 : f32
    %254 = vector.broadcast %cst_59 : f32 to vector<8x128xf32>
    %255 = arith.addf %254, %253 : vector<8x128xf32>
    %256 = arith.divf %254, %255 : vector<8x128xf32>
    %257 = vector.extract_strided_slice %247 {offsets = [0, 128], sizes = [8, 128], strides = [1, 1]} : vector<8x384xf32> to vector<8x128xf32>
    %258 = vector.extract_strided_slice %248 {offsets = [0, 128], sizes = [8, 128], strides = [1, 1]} : vector<8x384xf32> to vector<8x128xf32>
    %259 = arith.addf %257, %258 : vector<8x128xf32>
    %260 = arith.negf %259 : vector<8x128xf32>
    %261 = math.exp %260 : vector<8x128xf32>
    %cst_60 = arith.constant 1.000000e+00 : f32
    %262 = vector.broadcast %cst_60 : f32 to vector<8x128xf32>
    %263 = arith.addf %262, %261 : vector<8x128xf32>
    %264 = arith.divf %262, %263 : vector<8x128xf32>
    %265 = vector.extract_strided_slice %247 {offsets = [0, 256], sizes = [8, 128], strides = [1, 1]} : vector<8x384xf32> to vector<8x128xf32>
    %266 = vector.extract_strided_slice %248 {offsets = [0, 256], sizes = [8, 128], strides = [1, 1]} : vector<8x384xf32> to vector<8x128xf32>
    %267 = vector.broadcast %11 : vector<1x128xf32> to vector<8x128xf32>
    %268 = arith.addf %266, %267 : vector<8x128xf32>
    %269 = arith.mulf %256, %268 : vector<8x128xf32>
    %270 = arith.addf %265, %269 : vector<8x128xf32>
    %271 = math.tanh %270 : vector<8x128xf32>
    %272 = arith.subf %241, %271 : vector<8x128xf32>
    %273 = arith.mulf %264, %272 : vector<8x128xf32>
    %274 = arith.addf %271, %273 : vector<8x128xf32>
    %275 = arith.index_cast %245 : i32 to index
    %c0_61 = arith.constant 0 : index
    %276 = vector.load %arg6[%275, %c0_61] : memref<64x128xf32, #tpu.memory_space<vmem>>, vector<8x128xf32>
    tpu.vector_store %arg6[%275, %c0_61], %274 {strides = array<i32>} : memref<64x128xf32, #tpu.memory_space<vmem>>, vector<8x128xf32>,
    %c8_i32_62 = arith.constant 8 : i32
    %c0_63 = arith.constant 0 : index
    %c0_64 = arith.constant 0 : index
    %277 = vector.load %arg7[%c0_63, %c0_64] : memref<8x128xf32, #tpu.memory_space<vmem>>, vector<8x128xf32>
    tpu.vector_store %arg7[%c0_63, %c0_64], %274 {strides = array<i32>} : memref<8x128xf32, #tpu.memory_space<vmem>>, vector<8x128xf32>,
    return
  }
  func.func @transform_0(%arg0: i32) -> (i32, i32) {
    %c0_i32 = arith.constant 0 : i32
    %c0_i32_0 = arith.constant 0 : i32
    return %arg0, %c0_i32 : i32, i32
  }
  func.func @transform_1(%arg0: i32) -> (i32, i32) {
    %c0_i32 = arith.constant 0 : i32
    %c0_i32_0 = arith.constant 0 : i32
    %c0_i32_1 = arith.constant 0 : i32
    return %c0_i32, %c0_i32_0 : i32, i32
  }
  func.func @transform_2(%arg0: i32) -> (i32, i32) {
    %c0_i32 = arith.constant 0 : i32
    %c0_i32_0 = arith.constant 0 : i32
    %c0_i32_1 = arith.constant 0 : i32
    return %c0_i32, %c0_i32_0 : i32, i32
  }
  func.func @transform_3(%arg0: i32) -> (i32, i32) {
    %c0_i32 = arith.constant 0 : i32
    %c0_i32_0 = arith.constant 0 : i32
    %c0_i32_1 = arith.constant 0 : i32
    return %c0_i32, %c0_i32_0 : i32, i32
  }
  func.func @transform_4(%arg0: i32) -> (i32, i32) {
    %c0_i32 = arith.constant 0 : i32
    %c0_i32_0 = arith.constant 0 : i32
    %c0_i32_1 = arith.constant 0 : i32
    return %c0_i32, %c0_i32_0 : i32, i32
  }
  func.func @transform_5(%arg0: i32) -> (i32, i32) {
    %c0_i32 = arith.constant 0 : i32
    %c0_i32_0 = arith.constant 0 : i32
    return %arg0, %c0_i32 : i32, i32
  }
}

</mosaic_0001>

<llo_original>
// kernel: gru_forward.2
$region0: #{gru_forward.2}
  #allocation0 [shape = 'u32[]', space=smem, size = 0x4, offset = 0x4, fixed_abs, tag = 'smem constant byte address 0x4 - core index']
  #allocation1 [shape = 'u32[144,128]{1,0:T(1,128)}', space=vmem, size = 0x12000, scoped, tag = 'internal scratch']
  #allocation2 [shape = 'f32[8,128]{1,0:T(8,128)}', space=vmem, size = 0x1000, scoped, tag = 'scratch operand']
  #allocation3 [shape = 'f32[64,384]{1,0:T(8,128)}', space=vmem, size = 0x18000, scoped, tag = 'scratch operand']
  %s0 = inlined_call_operand.vmem [shape: f32[64,128], index: 0, kind: input, shape index: {}]
  %s1 = inlined_call_operand.vmem [shape: f32[128,384], index: 1, kind: input, shape index: {}]
  %s2 = inlined_call_operand.vmem [shape: f32[128,384], index: 2, kind: input, shape index: {}]
  %s3 = inlined_call_operand.vmem [shape: f32[1,384], index: 3, kind: input, shape index: {}]
  %s4 = inlined_call_operand.vmem [shape: f32[1,128], index: 4, kind: input, shape index: {}]
  %s5 = inlined_call_operand.vmem [shape: f32[64,128], index: 5, kind: output, shape index: {}]
  %s6 = sld [smem:[#allocation0]]
  $region34: #{gru_forward.2} parent=0
    _
  %s8 = ssub.s32 1, %s6
  %s9 = scalar_select 0, %s8, %s6
  // Predicated region
  $region2: #{gru_forward.2} parent=0 // pred_check
    _
  $region3: #{gru_forward.2} parent=0 // pred_check_branch
    %11 = sbr.rel (0) target = $region5
  $region4: #{gru_forward.2} parent=0 // pred_region
    _
  $region5: #{gru_forward.2} parent=0 // pred_fallthru
    _
  // Predicated region
  $region6: #{gru_forward.2} parent=0 // pred_check
    _
  $region7: #{gru_forward.2} parent=0 // pred_check_branch
    %13 = sbr.rel (0) target = $region9
  $region8: #{gru_forward.2} parent=0 // pred_region
    _
  $region9: #{gru_forward.2} parent=0 // pred_fallthru
    _
  // Predicated region
  $region10: #{gru_forward.2} parent=0 // pred_check
    _
  $region11: #{gru_forward.2} parent=0 // pred_check_branch
    %15 = sbr.rel (0) target = $region13
  $region12: #{gru_forward.2} parent=0 // pred_region
    _
  $region13: #{gru_forward.2} parent=0 // pred_fallthru
    _
  // Predicated region
  $region14: #{gru_forward.2} parent=0 // pred_check
    _
  $region15: #{gru_forward.2} parent=0 // pred_check_branch
    %17 = sbr.rel (0) target = $region17
  $region16: #{gru_forward.2} parent=0 // pred_region
    _
  $region17: #{gru_forward.2} parent=0 // pred_fallthru
    _
  // Predicated region
  $region18: #{gru_forward.2} parent=0 // pred_check
    _
  $region19: #{gru_forward.2} parent=0 // pred_check_branch
    %19 = sbr.rel (0) target = $region21
  $region20: #{gru_forward.2} parent=0 // pred_region
    _
  $region21: #{gru_forward.2} parent=0 // pred_fallthru
    _
  %p20 = scmp.eq.s32.totalorder 0, 0
  // Predicated region
  $region22: #{gru_forward.2} parent=0 // pred_check
    %p21 = pneg %p20
  $region23: #{gru_forward.2} parent=0 // pred_check_branch
    %23 = sbr.rel (%p21) target = $region25
  $region24: #{gru_forward.2} parent=0 // pred_region
    %24 = vst [vmem:[#allocation2] sm:$0xff] 0.0
  $region25: #{gru_forward.2} parent=0 // pred_fallthru
    _
  %v25 = vld [vmem:[%s0] sm:$0xff]
  %v26 = vld [vmem:[%s0 + $0x8] sm:$0xff]
  %v27 = vld [vmem:[%s0 + $0x10] sm:$0xff]
  %v28 = vld [vmem:[%s0 + $0x18] sm:$0xff]
  %v29 = vld [vmem:[%s0 + $0x20] sm:$0xff]
  %v30 = vld [vmem:[%s0 + $0x28] sm:$0xff]
  %v31 = vld [vmem:[%s0 + $0x30] sm:$0xff]
  %v32 = vld [vmem:[%s0 + $0x38] sm:$0xff]
  %v33 = vld [vmem:[%s1] sm:$0xff]
  %v34 = vld [vmem:[%s1 + $0x8] sm:$0xff]
  %v35 = vld [vmem:[%s1 + $0x10] sm:$0xff]
  %v36 = vld [vmem:[%s1 + $0x18] sm:$0xff]
  %v37 = vld [vmem:[%s1 + $0x20] sm:$0xff]
  %v38 = vld [vmem:[%s1 + $0x28] sm:$0xff]
  %v39 = vld [vmem:[%s1 + $0x30] sm:$0xff]
  %v40 = vld [vmem:[%s1 + $0x38] sm:$0xff]
  %v41 = vld [vmem:[%s1 + $0x40] sm:$0xff]
  %v42 = vld [vmem:[%s1 + $0x48] sm:$0xff]
  %v43 = vld [vmem:[%s1 + $0x50] sm:$0xff]
  %v44 = vld [vmem:[%s1 + $0x58] sm:$0xff]
  %v45 = vld [vmem:[%s1 + $0x60] sm:$0xff]
  %v46 = vld [vmem:[%s1 + $0x68] sm:$0xff]
  %v47 = vld [vmem:[%s1 + $0x70] sm:$0xff]
  %v48 = vld [vmem:[%s1 + $0x78] sm:$0xff]
  %v49 = vld [vmem:[%s1 + $0x80] sm:$0xff]
  %v50 = vld [vmem:[%s1 + $0x88] sm:$0xff]
  %v51 = vld [vmem:[%s1 + $0x90] sm:$0xff]
  %v52 = vld [vmem:[%s1 + $0x98] sm:$0xff]
  %v53 = vld [vmem:[%s1 + $0xa0] sm:$0xff]
  %v54 = vld [vmem:[%s1 + $0xa8] sm:$0xff]
  %v55 = vld [vmem:[%s1 + $0xb0] sm:$0xff]
  %v56 = vld [vmem:[%s1 + $0xb8] sm:$0xff]
  %v57 = vld [vmem:[%s1 + $0xc0] sm:$0xff]
  %v58 = vld [vmem:[%s1 + $0xc8] sm:$0xff]
  %v59 = vld [vmem:[%s1 + $0xd0] sm:$0xff]
  %v60 = vld [vmem:[%s1 + $0xd8] sm:$0xff]
  %v61 = vld [vmem:[%s1 + $0xe0] sm:$0xff]
  %v62 = vld [vmem:[%s1 + $0xe8] sm:$0xff]
  %v63 = vld [vmem:[%s1 + $0xf0] sm:$0xff]
  %v64 = vld [vmem:[%s1 + $0xf8] sm:$0xff]
  %v65 = vld [vmem:[%s1 + $0x100] sm:$0xff]
  %v66 = vld [vmem:[%s1 + $0x108] sm:$0xff]
  %v67 = vld [vmem:[%s1 + $0x110] sm:$0xff]
  %v68 = vld [vmem:[%s1 + $0x118] sm:$0xff]
  %v69 = vld [vmem:[%s1 + $0x120] sm:$0xff]
  %v70 = vld [vmem:[%s1 + $0x128] sm:$0xff]
  %v71 = vld [vmem:[%s1 + $0x130] sm:$0xff]
  %v72 = vld [vmem:[%s1 + $0x138] sm:$0xff]
  %v73 = vld [vmem:[%s1 + $0x140] sm:$0xff]
  %v74 = vld [vmem:[%s1 + $0x148] sm:$0xff]
  %v75 = vld [vmem:[%s1 + $0x150] sm:$0xff]
  %v76 = vld [vmem:[%s1 + $0x158] sm:$0xff]
  %v77 = vld [vmem:[%s1 + $0x160] sm:$0xff]
  %v78 = vld [vmem:[%s1 + $0x168] sm:$0xff]
  %v79 = vld [vmem:[%s1 + $0x170] sm:$0xff]
  %v80 = vld [vmem:[%s1 + $0x178] sm:$0xff]
  %v81 = vld [vmem:[%s3] sm:$0x7]
  %v83 = vlaneseq
  %v84 = vshrl.u32 %v83, 7
  %v85 = vsub.s32 0, %v84
  %v86 = vrot.slane %v81, %v85
  %v87 = vlaneseq
  %v88 = vshrl.u32 %v87, 7
  %v89 = vsub.s32 1, %v88
  %v90 = vrot.slane %v81, %v89
  %v91 = vlaneseq
  %v92 = vshrl.u32 %v91, 7
  %v93 = vsub.s32 2, %v92
  %v94 = vrot.slane %v81, %v93
  %98 = vmatprep.subr.mxu0 %v34
  %99 = vmatpush1.msra.mxu0 %v33
  %100 = vmatprep.subr.mxu0 %v37
  %101 = vmatpush1.msra.mxu0 %v36
  %102 = vmatprep.subr.mxu0 %v40
  %103 = vmatpush1.msra.mxu0 %v39
  %104 = vmatprep.subr.mxu0 %v43
  %105 = vmatpush1.msra.mxu0 %v42
  %106 = vmatprep.subr.mxu0 %v46
  %107 = vmatpush1.msra.mxu0 %v45
  %108 = vmatprep.subr.mxu0 %v49
  %109 = vmatpush1.msra.mxu0 %v48
  %110 = vmatprep.subr.mxu0 %v52
  %111 = vmatpush1.msra.mxu0 %v51
  %112 = vmatprep.subr.mxu0 %v55
  %113 = vmatpush1.msra.mxu0 %v54
  %114 = vmatprep.subr.mxu0 %v58
  %115 = vmatpush1.msra.mxu0 %v57
  %116 = vmatprep.subr.mxu0 %v61
  %117 = vmatpush1.msra.mxu0 %v60
  %118 = vmatprep.subr.mxu0 %v64
  %119 = vmatpush1.msra.mxu0 %v63
  %120 = vmatprep.subr.mxu0 %v67
  %121 = vmatpush1.msra.mxu0 %v66
  %122 = vmatprep.subr.mxu0 %v70
  %123 = vmatpush1.msra.mxu0 %v69
  %124 = vmatprep.subr.mxu0 %v73
  %125 = vmatpush1.msra.mxu0 %v72
  %126 = vmatprep.subr.mxu0 %v76
  %127 = vmatpush1.msra.mxu0 %v75
  %128 = vmatprep.subr.mxu0 %v79
  %129 = vmatpush1.msra.mxu0 %v78
  %130 = vmatprep.subr.mxu0 0.0
  %131 = vmatpush1.msra.mxu0 0.0
  %132 = vmatprep.subr.mxu0 0.0
  %133 = vmatpush1.msra.mxu0 0.0
  %134 = vmatprep.subr.mxu0 0.0
  %135 = vmatpush1.msra.mxu0 0.0
  %136 = vmatprep.subr.mxu0 0.0
  %137 = vmatpush1.msra.mxu0 0.0
  %138 = vmatprep.subr.mxu0 0.0
  %139 = vmatpush1.msra.mxu0 0.0
  %140 = vmatprep.subr.mxu0 0.0
  %141 = vmatpush1.msra.mxu0 0.0
  %142 = vmatprep.subr.mxu0 0.0
  %143 = vmatpush1.msra.mxu0 0.0
  %144 = vmatprep.subr.mxu0 0.0
  %145 = vmatpush1.msra.mxu0 0.0
  %146 = vmatprep.subr.mxu0 0.0
  %147 = vmatpush1.msra.mxu0 0.0
  %148 = vmatprep.subr.mxu0 0.0
  %149 = vmatpush1.msra.mxu0 0.0
  %150 = vmatprep.subr.mxu0 0.0
  %151 = vmatpush1.msra.mxu0 0.0
  %152 = vmatprep.subr.mxu0 0.0
  %153 = vmatpush1.msra.mxu0 0.0
  %154 = vmatprep.subr.mxu0 0.0
  %155 = vmatpush1.msra.mxu0 0.0
  %156 = vmatprep.subr.mxu0 0.0
  %157 = vmatpush1.msra.mxu0 0.0
  %158 = vmatprep.subr.mxu0 0.0
  %159 = vmatpush1.msra.mxu0 0.0
  %160 = vmatprep.subr.mxu0 0.0
  %161 = vmatpush1.msra.mxu0 0.0
  %162 = vmatprep.mubr.f32.mxu0 0.0
  %163 = vmatmul.mubr.f32.gmra.mrb[0].mxu0 %v25
  %v164 = vpop.f32.mrb[0].mxu0
  %v165 = vadd.f32 %v86, %v164
  %v166 = vpop.f32.mrb[0].mxu0
  %v167 = vadd.f32 %v90, %v166
  %168 = vmatprep.mubr.f32.mxu0 0.0
  %169 = vmatmul.mubr.f32.gmra.mrb[0].mxu0 %v26
  %v170 = vpop.f32.mrb[0].mxu0
  %v171 = vadd.f32 %v86, %v170
  %v172 = vpop.f32.mrb[0].mxu0
  %v173 = vadd.f32 %v90, %v172
  %174 = vmatprep.mubr.f32.mxu0 0.0
  %175 = vmatmul.mubr.f32.gmra.mrb[0].mxu0 %v27
  %v176 = vpop.f32.mrb[0].mxu0
  %v177 = vadd.f32 %v86, %v176
  %v178 = vpop.f32.mrb[0].mxu0
  %v179 = vadd.f32 %v90, %v178
  %180 = vmatprep.mubr.f32.mxu0 0.0
  %181 = vmatmul.mubr.f32.gmra.mrb[0].mxu0 %v28
  %v182 = vpop.f32.mrb[0].mxu0
  %v183 = vadd.f32 %v86, %v182
  %v184 = vpop.f32.mrb[0].mxu0
  %v185 = vadd.f32 %v90, %v184
  %186 = vmatprep.mubr.f32.mxu0 0.0
  %187 = vmatmul.mubr.f32.gmra.mrb[0].mxu0 %v29
  %v188 = vpop.f32.mrb[0].mxu0
  %v189 = vadd.f32 %v86, %v188
  %v190 = vpop.f32.mrb[0].mxu0
  %v191 = vadd.f32 %v90, %v190
  %192 = vmatprep.mubr.f32.mxu0 0.0
  %193 = vmatmul.mubr.f32.gmra.mrb[0].mxu0 %v30
  %v194 = vpop.f32.mrb[0].mxu0
  %v195 = vadd.f32 %v86, %v194
  %v196 = vpop.f32.mrb[0].mxu0
  %v197 = vadd.f32 %v90, %v196
  %198 = vmatprep.mubr.f32.mxu0 0.0
  %199 = vmatmul.mubr.f32.gmra.mrb[0].mxu0 %v31
  %v200 = vpop.f32.mrb[0].mxu0
  %v201 = vadd.f32 %v86, %v200
  %v202 = vpop.f32.mrb[0].mxu0
  %v203 = vadd.f32 %v90, %v202
  %204 = vmatprep.mubr.f32.mxu0 0.0
  %205 = vmatmul.mubr.f32.gmra.mrb[0].mxu0 %v32
  %v206 = vpop.f32.mrb[0].mxu0
  %v207 = vadd.f32 %v86, %v206
  %v208 = vpop.f32.mrb[0].mxu0
  %v209 = vadd.f32 %v90, %v208
  %210 = vdwg.mxu0
  %211 = vmatprep.subr.mxu0 0.0
  %212 = vmatpush1.msra.mxu0 %v35
  %213 = vmatprep.subr.mxu0 0.0
  %214 = vmatpush1.msra.mxu0 %v38
  %215 = vmatprep.subr.mxu0 0.0
  %216 = vmatpush1.msra.mxu0 %v41
  %217 = vmatprep.subr.mxu0 0.0
  %218 = vmatpush1.msra.mxu0 %v44
  %219 = vmatprep.subr.mxu0 0.0
  %220 = vmatpush1.msra.mxu0 %v47
  %221 = vmatprep.subr.mxu0 0.0
  %222 = vmatpush1.msra.mxu0 %v50
  %223 = vmatprep.subr.mxu0 0.0
  %224 = vmatpush1.msra.mxu0 %v53
  %225 = vmatprep.subr.mxu0 0.0
  %226 = vmatpush1.msra.mxu0 %v56
  %227 = vmatprep.subr.mxu0 0.0
  %228 = vmatpush1.msra.mxu0 %v59
  %229 = vmatprep.subr.mxu0 0.0
  %230 = vmatpush1.msra.mxu0 %v62
  %231 = vmatprep.subr.mxu0 0.0
  %232 = vmatpush1.msra.mxu0 %v65
  %233 = vmatprep.subr.mxu0 0.0
  %234 = vmatpush1.msra.mxu0 %v68
  %235 = vmatprep.subr.mxu0 0.0
  %236 = vmatpush1.msra.mxu0 %v71
  %237 = vmatprep.subr.mxu0 0.0
  %238 = vmatpush1.msra.mxu0 %v74
  %239 = vmatprep.subr.mxu0 0.0
  %240 = vmatpush1.msra.mxu0 %v77
  %241 = vmatprep.subr.mxu0 0.0
  %242 = vmatpush1.msra.mxu0 %v80
  %243 = vmatprep.subr.mxu0 0.0
  %244 = vmatpush1.msra.mxu0 0.0
  %245 = vmatprep.subr.mxu0 0.0
  %246 = vmatpush1.msra.mxu0 0.0
  %247 = vmatprep.subr.mxu0 0.0
  %248 = vmatpush1.msra.mxu0 0.0
  %249 = vmatprep.subr.mxu0 0.0
  %250 = vmatpush1.msra.mxu0 0.0
  %251 = vmatprep.subr.mxu0 0.0
  %252 = vmatpush1.msra.mxu0 0.0
  %253 = vmatprep.subr.mxu0 0.0
  %254 = vmatpush1.msra.mxu0 0.0
  %255 = vmatprep.subr.mxu0 0.0
  %256 = vmatpush1.msra.mxu0 0.0
  %257 = vmatprep.subr.mxu0 0.0
  %258 = vmatpush1.msra.mxu0 0.0
  %259 = vmatprep.subr.mxu0 0.0
  %260 = vmatpush1.msra.mxu0 0.0
  %261 = vmatprep.subr.mxu0 0.0
  %262 = vmatpush1.msra.mxu0 0.0
  %263 = vmatprep.subr.mxu0 0.0
  %264 = vmatpush1.msra.mxu0 0.0
  %265 = vmatprep.subr.mxu0 0.0
  %266 = vmatpush1.msra.mxu0 0.0
  %267 = vmatprep.subr.mxu0 0.0
  %268 = vmatpush1.msra.mxu0 0.0
  %269 = vmatprep.subr.mxu0 0.0
  %270 = vmatpush1.msra.mxu0 0.0
  %271 = vmatprep.subr.mxu0 0.0
  %272 = vmatpush1.msra.mxu0 0.0
  %273 = vmatprep.subr.mxu0 0.0
  %274 = vmatpush1.msra.mxu0 0.0
  %275 = vmatprep.mubr.f32.mxu0 0.0
  %276 = vmatmul.mubr.f32.gmra.mrb[0].mxu0 %v25
  %v277 = vpop.f32.mrb[0].mxu0
  %v278 = vadd.f32 %v94, %v277
  %v279 = vpop.f32.mrb[0].mxu0
  %280 = vmatprep.mubr.f32.mxu0 0.0
  %281 = vmatmul.mubr.f32.gmra.mrb[0].mxu0 %v26
  %v282 = vpop.f32.mrb[0].mxu0
  %v283 = vadd.f32 %v94, %v282
  %v284 = vpop.f32.mrb[0].mxu0
  %285 = vmatprep.mubr.f32.mxu0 0.0
  %286 = vmatmul.mubr.f32.gmra.mrb[0].mxu0 %v27
  %v287 = vpop.f32.mrb[0].mxu0
  %v288 = vadd.f32 %v94, %v287
  %v289 = vpop.f32.mrb[0].mxu0
  %290 = vmatprep.mubr.f32.mxu0 0.0
  %291 = vmatmul.mubr.f32.gmra.mrb[0].mxu0 %v28
  %v292 = vpop.f32.mrb[0].mxu0
  %v293 = vadd.f32 %v94, %v292
  %v294 = vpop.f32.mrb[0].mxu0
  %295 = vmatprep.mubr.f32.mxu0 0.0
  %296 = vmatmul.mubr.f32.gmra.mrb[0].mxu0 %v29
  %v297 = vpop.f32.mrb[0].mxu0
  %v298 = vadd.f32 %v94, %v297
  %v299 = vpop.f32.mrb[0].mxu0
  %300 = vmatprep.mubr.f32.mxu0 0.0
  %301 = vmatmul.mubr.f32.gmra.mrb[0].mxu0 %v30
  %v302 = vpop.f32.mrb[0].mxu0
  %v303 = vadd.f32 %v94, %v302
  %v304 = vpop.f32.mrb[0].mxu0
  %305 = vmatprep.mubr.f32.mxu0 0.0
  %306 = vmatmul.mubr.f32.gmra.mrb[0].mxu0 %v31
  %v307 = vpop.f32.mrb[0].mxu0
  %v308 = vadd.f32 %v94, %v307
  %v309 = vpop.f32.mrb[0].mxu0
  %310 = vmatprep.mubr.f32.mxu0 0.0
  %311 = vmatmul.mubr.f32.gmra.mrb[0].mxu0 %v32
  %v312 = vpop.f32.mrb[0].mxu0
  %v313 = vadd.f32 %v94, %v312
  %v314 = vpop.f32.mrb[0].mxu0
  %315 = vdwg.mxu0
  %316 = vst [vmem:[#allocation3] sm:$0xff] %v165
  %317 = vst [vmem:[#allocation3 + $0x8] sm:$0xff] %v167
  %318 = vst [vmem:[#allocation3 + $0x10] sm:$0xff] %v278
  %319 = vst [vmem:[#allocation3 + $0x18] sm:$0xff] %v171
  %320 = vst [vmem:[#allocation3 + $0x20] sm:$0xff] %v173
  %321 = vst [vmem:[#allocation3 + $0x28] sm:$0xff] %v283
  %322 = vst [vmem:[#allocation3 + $0x30] sm:$0xff] %v177
  %323 = vst [vmem:[#allocation3 + $0x38] sm:$0xff] %v179
  %324 = vst [vmem:[#allocation3 + $0x40] sm:$0xff] %v288
  %325 = vst [vmem:[#allocation3 + $0x48] sm:$0xff] %v183
  %326 = vst [vmem:[#allocation3 + $0x50] sm:$0xff] %v185
  %327 = vst [vmem:[#allocation3 + $0x58] sm:$0xff] %v293
  %328 = vst [vmem:[#allocation3 + $0x60] sm:$0xff] %v189
  %329 = vst [vmem:[#allocation3 + $0x68] sm:$0xff] %v191
  %330 = vst [vmem:[#allocation3 + $0x70] sm:$0xff] %v298
  %331 = vst [vmem:[#allocation3 + $0x78] sm:$0xff] %v195
  %332 = vst [vmem:[#allocation3 + $0x80] sm:$0xff] %v197
  %333 = vst [vmem:[#allocation3 + $0x88] sm:$0xff] %v303
  %334 = vst [vmem:[#allocation3 + $0x90] sm:$0xff] %v201
  %335 = vst [vmem:[#allocation3 + $0x98] sm:$0xff] %v203
  %336 = vst [vmem:[#allocation3 + $0xa0] sm:$0xff] %v308
  %337 = vst [vmem:[#allocation3 + $0xa8] sm:$0xff] %v207
  %338 = vst [vmem:[#allocation3 + $0xb0] sm:$0xff] %v209
  %339 = vst [vmem:[#allocation3 + $0xb8] sm:$0xff] %v313
  %v340 = vld [vmem:[%s2] sm:$0xff]
  %v341 = vld [vmem:[%s2 + $0x8] sm:$0xff]
  %v342 = vld [vmem:[%s2 + $0x10] sm:$0xff]
  %v343 = vld [vmem:[%s2 + $0x18] sm:$0xff]
  %v344 = vld [vmem:[%s2 + $0x20] sm:$0xff]
  %v345 = vld [vmem:[%s2 + $0x28] sm:$0xff]
  %v346 = vld [vmem:[%s2 + $0x30] sm:$0xff]
  %v347 = vld [vmem:[%s2 + $0x38] sm:$0xff]
  %v348 = vld [vmem:[%s2 + $0x40] sm:$0xff]
  %v349 = vld [vmem:[%s2 + $0x48] sm:$0xff]
  %v350 = vld [vmem:[%s2 + $0x50] sm:$0xff]
  %v351 = vld [vmem:[%s2 + $0x58] sm:$0xff]
  %v352 = vld [vmem:[%s2 + $0x60] sm:$0xff]
  %v353 = vld [vmem:[%s2 + $0x68] sm:$0xff]
  %v354 = vld [vmem:[%s2 + $0x70] sm:$0xff]
  %v355 = vld [vmem:[%s2 + $0x78] sm:$0xff]
  %v356 = vld [vmem:[%s2 + $0x80] sm:$0xff]
  %v357 = vld [vmem:[%s2 + $0x88] sm:$0xff]
  %v358 = vld [vmem:[%s2 + $0x90] sm:$0xff]
  %v359 = vld [vmem:[%s2 + $0x98] sm:$0xff]
  %v360 = vld [vmem:[%s2 + $0xa0] sm:$0xff]
  %v361 = vld [vmem:[%s2 + $0xa8] sm:$0xff]
  %v362 = vld [vmem:[%s2 + $0xb0] sm:$0xff]
  %v363 = vld [vmem:[%s2 + $0xb8] sm:$0xff]
  %v364 = vld [vmem:[%s2 + $0xc0] sm:$0xff]
  %v365 = vld [vmem:[%s2 + $0xc8] sm:$0xff]
  %v366 = vld [vmem:[%s2 + $0xd0] sm:$0xff]
  %v367 = vld [vmem:[%s2 + $0xd8] sm:$0xff]
  %v368 = vld [vmem:[%s2 + $0xe0] sm:$0xff]
  %v369 = vld [vmem:[%s2 + $0xe8] sm:$0xff]
  %v370 = vld [vmem:[%s2 + $0xf0] sm:$0xff]
  %v371 = vld [vmem:[%s2 + $0xf8] sm:$0xff]
  %v372 = vld [vmem:[%s2 + $0x100] sm:$0xff]
  %v373 = vld [vmem:[%s2 + $0x108] sm:$0xff]
  %v374 = vld [vmem:[%s2 + $0x110] sm:$0xff]
  %v375 = vld [vmem:[%s2 + $0x118] sm:$0xff]
  %v376 = vld [vmem:[%s2 + $0x120] sm:$0xff]
  %v377 = vld [vmem:[%s2 + $0x128] sm:$0xff]
  %v378 = vld [vmem:[%s2 + $0x130] sm:$0xff]
  %v379 = vld [vmem:[%s2 + $0x138] sm:$0xff]
  %v380 = vld [vmem:[%s2 + $0x140] sm:$0xff]
  %v381 = vld [vmem:[%s2 + $0x148] sm:$0xff]
  %v382 = vld [vmem:[%s2 + $0x150] sm:$0xff]
  %v383 = vld [vmem:[%s2 + $0x158] sm:$0xff]
  %v384 = vld [vmem:[%s2 + $0x160] sm:$0xff]
  %v385 = vld [vmem:[%s2 + $0x168] sm:$0xff]
  %v386 = vld [vmem:[%s2 + $0x170] sm:$0xff]
  %v387 = vld [vmem:[%s2 + $0x178] sm:$0xff]
  %v388 = vld [vmem:[%s4] sm:$0x1]
  %v389 = vld [vmem:[#allocation2] sm:$0xff]
  %s390 = smul.u32 0, 3
  %s391 = smul.addr %s390, 8
  %s392 = scalar_lea.vmem [#allocation3], %s391
  %v393 = vld [vmem:[%s392] sm:$0xff]
  %v394 = vld [vmem:[%s392 + $0x8] sm:$0xff]
  %v395 = vld [vmem:[%s392 + $0x10] sm:$0xff]
  %396 = vmatprep.subr.mxu0 %v341
  %397 = vmatpush1.msra.mxu0 %v340
  %398 = vmatprep.subr.mxu0 %v344
  %399 = vmatpush1.msra.mxu0 %v343
  %400 = vmatprep.subr.mxu0 %v347
  %401 = vmatpush1.msra.mxu0 %v346
  %402 = vmatprep.subr.mxu0 %v350
  %403 = vmatpush1.msra.mxu0 %v349
  %404 = vmatprep.subr.mxu0 %v353
  %405 = vmatpush1.msra.mxu0 %v352
  %406 = vmatprep.subr.mxu0 %v356
  %407 = vmatpush1.msra.mxu0 %v355
  %408 = vmatprep.subr.mxu0 %v359
  %409 = vmatpush1.msra.mxu0 %v358
  %410 = vmatprep.subr.mxu0 %v362
  %411 = vmatpush1.msra.mxu0 %v361
  %412 = vmatprep.subr.mxu0 %v365
  %413 = vmatpush1.msra.mxu0 %v364
  %414 = vmatprep.subr.mxu0 %v368
  %415 = vmatpush1.msra.mxu0 %v367
  %416 = vmatprep.subr.mxu0 %v371
  %417 = vmatpush1.msra.mxu0 %v370
  %418 = vmatprep.subr.mxu0 %v374
  %419 = vmatpush1.msra.mxu0 %v373
  %420 = vmatprep.subr.mxu0 %v377
  %421 = vmatpush1.msra.mxu0 %v376
  %422 = vmatprep.subr.mxu0 %v380
  %423 = vmatpush1.msra.mxu0 %v379
  %424 = vmatprep.subr.mxu0 %v383
  %425 = vmatpush1.msra.mxu0 %v382
  %426 = vmatprep.subr.mxu0 %v386
  %427 = vmatpush1.msra.mxu0 %v385
  %428 = vmatprep.subr.mxu0 0.0
  %429 = vmatpush1.msra.mxu0 0.0
  %430 = vmatprep.subr.mxu0 0.0
  %431 = vmatpush1.msra.mxu0 0.0
  %432 = vmatprep.subr.mxu0 0.0
  %433 = vmatpush1.msra.mxu0 0.0
  %434 = vmatprep.subr.mxu0 0.0
  %435 = vmatpush1.msra.mxu0 0.0
  %436 = vmatprep.subr.mxu0 0.0
  %437 = vmatpush1.msra.mxu0 0.0
  %438 = vmatprep.subr.mxu0 0.0
  %439 = vmatpush1.msra.mxu0 0.0
  %440 = vmatprep.subr.mxu0 0.0
  %441 = vmatpush1.msra.mxu0 0.0
  %442 = vmatprep.subr.mxu0 0.0
  %443 = vmatpush1.msra.mxu0 0.0
  %444 = vmatprep.subr.mxu0 0.0
  %445 = vmatpush1.msra.mxu0 0.0
  %446 = vmatprep.subr.mxu0 0.0
  %447 = vmatpush1.msra.mxu0 0.0
  %448 = vmatprep.subr.mxu0 0.0
  %449 = vmatpush1.msra.mxu0 0.0
  %450 = vmatprep.subr.mxu0 0.0
  %451 = vmatpush1.msra.mxu0 0.0
  %452 = vmatprep.subr.mxu0 0.0
  %453 = vmatpush1.msra.mxu0 0.0
  %454 = vmatprep.subr.mxu0 0.0
  %455 = vmatpush1.msra.mxu0 0.0
  %456 = vmatprep.subr.mxu0 0.0
  %457 = vmatpush1.msra.mxu0 0.0
  %458 = vmatprep.subr.mxu0 0.0
  %459 = vmatpush1.msra.mxu0 0.0
  %460 = vmatprep.mubr.f32.mxu0 0.0
  %461 = vmatmul.mubr.f32.gmra.mrb[0].mxu0 %v389
  %v462 = vpop.f32.mrb[0].mxu0
  %v463 = vadd.f32 0.0, %v462
  %v464 = vpop.f32.mrb[0].mxu0
  %v465 = vadd.f32 0.0, %v464
  %466 = vdwg.mxu0
  %467 = vmatprep.subr.mxu0 0.0
  %468 = vmatpush1.msra.mxu0 %v342
  %469 = vmatprep.subr.mxu0 0.0
  %470 = vmatpush1.msra.mxu0 %v345
  %471 = vmatprep.subr.mxu0 0.0
  %472 = vmatpush1.msra.mxu0 %v348
  %473 = vmatprep.subr.mxu0 0.0
  %474 = vmatpush1.msra.mxu0 %v351
  %475 = vmatprep.subr.mxu0 0.0
  %476 = vmatpush1.msra.mxu0 %v354
  %477 = vmatprep.subr.mxu0 0.0
  %478 = vmatpush1.msra.mxu0 %v357
  %479 = vmatprep.subr.mxu0 0.0
  %480 = vmatpush1.msra.mxu0 %v360
  %481 = vmatprep.subr.mxu0 0.0
  %482 = vmatpush1.msra.mxu0 %v363
  %483 = vmatprep.subr.mxu0 0.0
  %484 = vmatpush1.msra.mxu0 %v366
  %485 = vmatprep.subr.mxu0 0.0
  %486 = vmatpush1.msra.mxu0 %v369
  %487 = vmatprep.subr.mxu0 0.0
  %488 = vmatpush1.msra.mxu0 %v372
  %489 = vmatprep.subr.mxu0 0.0
  %490 = vmatpush1.msra.mxu0 %v375
  %491 = vmatprep.subr.mxu0 0.0
  %492 = vmatpush1.msra.mxu0 %v378
  %493 = vmatprep.subr.mxu0 0.0
  %494 = vmatpush1.msra.mxu0 %v381
  %495 = vmatprep.subr.mxu0 0.0
  %496 = vmatpush1.msra.mxu0 %v384
  %497 = vmatprep.subr.mxu0 0.0
  %498 = vmatpush1.msra.mxu0 %v387
  %499 = vmatprep.subr.mxu0 0.0
  %500 = vmatpush1.msra.mxu0 0.0
  %501 = vmatprep.subr.mxu0 0.0
  %502 = vmatpush1.msra.mxu0 0.0
  %503 = vmatprep.subr.mxu0 0.0
  %504 = vmatpush1.msra.mxu0 0.0
  %505 = vmatprep.subr.mxu0 0.0
  %506 = vmatpush1.msra.mxu0 0.0
  %507 = vmatprep.subr.mxu0 0.0
  %508 = vmatpush1.msra.mxu0 0.0
  %509 = vmatprep.subr.mxu0 0.0
  %510 = vmatpush1.msra.mxu0 0.0
  %511 = vmatprep.subr.mxu0 0.0
  %512 = vmatpush1.msra.mxu0 0.0
  %513 = vmatprep.subr.mxu0 0.0
  %514 = vmatpush1.msra.mxu0 0.0
  %515 = vmatprep.subr.mxu0 0.0
  %516 = vmatpush1.msra.mxu0 0.0
  %517 = vmatprep.subr.mxu0 0.0
  %518 = vmatpush1.msra.mxu0 0.0
  %519 = vmatprep.subr.mxu0 0.0
  %520 = vmatpush1.msra.mxu0 0.0
  %521 = vmatprep.subr.mxu0 0.0
  %522 = vmatpush1.msra.mxu0 0.0
  %523 = vmatprep.subr.mxu0 0.0
  %524 = vmatpush1.msra.mxu0 0.0
  %525 = vmatprep.subr.mxu0 0.0
  %526 = vmatpush1.msra.mxu0 0.0
  %527 = vmatprep.subr.mxu0 0.0
  %528 = vmatpush1.msra.mxu0 0.0
  %529 = vmatprep.subr.mxu0 0.0
  %530 = vmatpush1.msra.mxu0 0.0
  %531 = vmatprep.mubr.f32.mxu0 0.0
  %532 = vmatmul.mubr.f32.gmra.mrb[0].mxu0 %v389
  %v533 = vpop.f32.mrb[0].mxu0
  %v534 = vadd.f32 0.0, %v533
  %v535 = vpop.f32.mrb[0].mxu0
  %536 = vdwg.mxu0
  %v537 = vadd.f32 %v393, %v463
  %v538 = vxor.u32 %v537, 2147483648
  %v539 = vmul.f32 %v538, 1.442695
  %v540 = vpow.pop %v539
  %v541 = vadd.f32 %v540, 1.0
  %v542 = vrcp.pop %v541
  %v543 = vmul.f32 1.0, %v542
  %v544 = vadd.f32 %v394, %v465
  %v545 = vxor.u32 %v544, 2147483648
  %v546 = vmul.f32 %v545, 1.442695
  %v547 = vpow.pop %v546
  %v548 = vadd.f32 %v547, 1.0
  %v549 = vrcp.pop %v548
  %v550 = vmul.f32 1.0, %v549
  %v552 = vlaneseq
  %v553 = vshrl.u32 %v552, 7
  %v554 = vsub.s32 0, %v553
  %v555 = vrot.slane %v388, %v554
  %v557 = vadd.f32 %v534, %v555
  %v558 = vmul.f32 %v543, %v557
  %v559 = vadd.f32 %v395, %v558
  %v560 = vtanh.pop %v559
  %v561 = vsub.f32 %v389, %v560
  %v562 = vmul.f32 %v550, %v561
  %v563 = vadd.f32 %v560, %v562
  %564 = vst [vmem:[%s5] sm:$0xff] %v563
  %s565 = smul.u32 1, 3
  %s566 = smul.addr %s565, 8
  %s567 = scalar_lea.vmem [#allocation3], %s566
  %v568 = vld [vmem:[%s567] sm:$0xff]
  %v569 = vld [vmem:[%s567 + $0x8] sm:$0xff]
  %v570 = vld [vmem:[%s567 + $0x10] sm:$0xff]
  %571 = vmatprep.subr.mxu0 %v341
  %572 = vmatpush1.msra.mxu0 %v340
  %573 = vmatprep.subr.mxu0 %v344
  %574 = vmatpush1.msra.mxu0 %v343
  %575 = vmatprep.subr.mxu0 %v347
  %576 = vmatpush1.msra.mxu0 %v346
  %577 = vmatprep.subr.mxu0 %v350
  %578 = vmatpush1.msra.mxu0 %v349
  %579 = vmatprep.subr.mxu0 %v353
  %580 = vmatpush1.msra.mxu0 %v352
  %581 = vmatprep.subr.mxu0 %v356
  %582 = vmatpush1.msra.mxu0 %v355
  %583 = vmatprep.subr.mxu0 %v359
  %584 = vmatpush1.msra.mxu0 %v358
  %585 = vmatprep.subr.mxu0 %v362
  %586 = vmatpush1.msra.mxu0 %v361
  %587 = vmatprep.subr.mxu0 %v365
  %588 = vmatpush1.msra.mxu0 %v364
  %589 = vmatprep.subr.mxu0 %v368
  %590 = vmatpush1.msra.mxu0 %v367
  %591 = vmatprep.subr.mxu0 %v371
  %592 = vmatpush1.msra.mxu0 %v370
  %593 = vmatprep.subr.mxu0 %v374
  %594 = vmatpush1.msra.mxu0 %v373
  %595 = vmatprep.subr.mxu0 %v377
  %596 = vmatpush1.msra.mxu0 %v376
  %597 = vmatprep.subr.mxu0 %v380
  %598 = vmatpush1.msra.mxu0 %v379
  %599 = vmatprep.subr.mxu0 %v383
  %600 = vmatpush1.msra.mxu0 %v382
  %601 = vmatprep.subr.mxu0 %v386
  %602 = vmatpush1.msra.mxu0 %v385
  %603 = vmatprep.subr.mxu0 0.0
  %604 = vmatpush1.msra.mxu0 0.0
  %605 = vmatprep.subr.mxu0 0.0
  %606 = vmatpush1.msra.mxu0 0.0
  %607 = vmatprep.subr.mxu0 0.0
  %608 = vmatpush1.msra.mxu0 0.0
  %609 = vmatprep.subr.mxu0 0.0
  %610 = vmatpush1.msra.mxu0 0.0
  %611 = vmatprep.subr.mxu0 0.0
  %612 = vmatpush1.msra.mxu0 0.0
  %613 = vmatprep.subr.mxu0 0.0
  %614 = vmatpush1.msra.mxu0 0.0
  %615 = vmatprep.subr.mxu0 0.0
  %616 = vmatpush1.msra.mxu0 0.0
  %617 = vmatprep.subr.mxu0 0.0
  %618 = vmatpush1.msra.mxu0 0.0
  %619 = vmatprep.subr.mxu0 0.0
  %620 = vmatpush1.msra.mxu0 0.0
  %621 = vmatprep.subr.mxu0 0.0
  %622 = vmatpush1.msra.mxu0 0.0
  %623 = vmatprep.subr.mxu0 0.0
  %624 = vmatpush1.msra.mxu0 0.0
  %625 = vmatprep.subr.mxu0 0.0
  %626 = vmatpush1.msra.mxu0 0.0
  %627 = vmatprep.subr.mxu0 0.0
  %628 = vmatpush1.msra.mxu0 0.0
  %629 = vmatprep.subr.mxu0 0.0
  %630 = vmatpush1.msra.mxu0 0.0
  %631 = vmatprep.subr.mxu0 0.0
  %632 = vmatpush1.msra.mxu0 0.0
  %633 = vmatprep.subr.mxu0 0.0
  %634 = vmatpush1.msra.mxu0 0.0
  %635 = vmatprep.mubr.f32.mxu0 0.0
  %636 = vmatmul.mubr.f32.gmra.mrb[0].mxu0 %v563
  %v637 = vpop.f32.mrb[0].mxu0
  %v638 = vadd.f32 0.0, %v637
  %v639 = vpop.f32.mrb[0].mxu0
  %v640 = vadd.f32 0.0, %v639
  %641 = vdwg.mxu0
  %642 = vmatprep.subr.mxu0 0.0
  %643 = vmatpush1.msra.mxu0 %v342
  %644 = vmatprep.subr.mxu0 0.0
  %645 = vmatpush1.msra.mxu0 %v345
  %646 = vmatprep.subr.mxu0 0.0
  %647 = vmatpush1.msra.mxu0 %v348
  %648 = vmatprep.subr.mxu0 0.0
  %649 = vmatpush1.msra.mxu0 %v351
  %650 = vmatprep.subr.mxu0 0.0
  %651 = vmatpush1.msra.mxu0 %v354
  %652 = vmatprep.subr.mxu0 0.0
  %653 = vmatpush1.msra.mxu0 %v357
  %654 = vmatprep.subr.mxu0 0.0
  %655 = vmatpush1.msra.mxu0 %v360
  %656 = vmatprep.subr.mxu0 0.0
  %657 = vmatpush1.msra.mxu0 %v363
  %658 = vmatprep.subr.mxu0 0.0
  %659 = vmatpush1.msra.mxu0 %v366
  %660 = vmatprep.subr.mxu0 0.0
  %661 = vmatpush1.msra.mxu0 %v369
  %662 = vmatprep.subr.mxu0 0.0
  %663 = vmatpush1.msra.mxu0 %v372
  %664 = vmatprep.subr.mxu0 0.0
  %665 = vmatpush1.msra.mxu0 %v375
  %666 = vmatprep.subr.mxu0 0.0
  %667 = vmatpush1.msra.mxu0 %v378
  %668 = vmatprep.subr.mxu0 0.0
  %669 = vmatpush1.msra.mxu0 %v381
  %670 = vmatprep.subr.mxu0 0.0
  %671 = vmatpush1.msra.mxu0 %v384
  %672 = vmatprep.subr.mxu0 0.0
  %673 = vmatpush1.msra.mxu0 %v387
  %674 = vmatprep.subr.mxu0 0.0
  %675 = vmatpush1.msra.mxu0 0.0
  %676 = vmatprep.subr.mxu0 0.0
  %677 = vmatpush1.msra.mxu0 0.0
  %678 = vmatprep.subr.mxu0 0.0
  %679 = vmatpush1.msra.mxu0 0.0
  %680 = vmatprep.subr.mxu0 0.0
  %681 = vmatpush1.msra.mxu0 0.0
  %682 = vmatprep.subr.mxu0 0.0
  %683 = vmatpush1.msra.mxu0 0.0
  %684 = vmatprep.subr.mxu0 0.0
  %685 = vmatpush1.msra.mxu0 0.0
  %686 = vmatprep.subr.mxu0 0.0
  %687 = vmatpush1.msra.mxu0 0.0
  %688 = vmatprep.subr.mxu0 0.0
  %689 = vmatpush1.msra.mxu0 0.0
  %690 = vmatprep.subr.mxu0 0.0
  %691 = vmatpush1.msra.mxu0 0.0
  %692 = vmatprep.subr.mxu0 0.0
  %693 = vmatpush1.msra.mxu0 0.0
  %694 = vmatprep.subr.mxu0 0.0
  %695 = vmatpush1.msra.mxu0 0.0
  %696 = vmatprep.subr.mxu0 0.0
  %697 = vmatpush1.msra.mxu0 0.0
  %698 = vmatprep.subr.mxu0 0.0
  %699 = vmatpush1.msra.mxu0 0.0
  %700 = vmatprep.subr.mxu0 0.0
  %701 = vmatpush1.msra.mxu0 0.0
  %702 = vmatprep.subr.mxu0 0.0
  %703 = vmatpush1.msra.mxu0 0.0
  %704 = vmatprep.subr.mxu0 0.0
  %705 = vmatpush1.msra.mxu0 0.0
  %706 = vmatprep.mubr.f32.mxu0 0.0
  %707 = vmatmul.mubr.f32.gmra.mrb[0].mxu0 %v563
  %v708 = vpop.f32.mrb[0].mxu0
  %v709 = vadd.f32 0.0, %v708
  %v710 = vpop.f32.mrb[0].mxu0
  %711 = vdwg.mxu0
  %v712 = vadd.f32 %v568, %v638
  %v713 = vxor.u32 %v712, 2147483648
  %v714 = vmul.f32 %v713, 1.442695
  %v715 = vpow.pop %v714
  %v716 = vadd.f32 %v715, 1.0
  %v717 = vrcp.pop %v716
  %v718 = vmul.f32 1.0, %v717
  %v719 = vadd.f32 %v569, %v640
  %v720 = vxor.u32 %v719, 2147483648
  %v721 = vmul.f32 %v720, 1.442695
  %v722 = vpow.pop %v721
  %v723 = vadd.f32 %v722, 1.0
  %v724 = vrcp.pop %v723
  %v725 = vmul.f32 1.0, %v724
  %v726 = vadd.f32 %v709, %v555
  %v727 = vmul.f32 %v718, %v726
  %v728 = vadd.f32 %v570, %v727
  %v729 = vtanh.pop %v728
  %v730 = vsub.f32 %v563, %v729
  %v731 = vmul.f32 %v725, %v730
  %v732 = vadd.f32 %v729, %v731
  %s733 = scalar_lea.vmem %s5, 8
  %734 = vst [vmem:[%s733] sm:$0xff] %v732
  %s735 = smul.u32 2, 3
  %s736 = smul.addr %s735, 8
  %s737 = scalar_lea.vmem [#allocation3], %s736
  %v738 = vld [vmem:[%s737] sm:$0xff]
  %v739 = vld [vmem:[%s737 + $0x8] sm:$0xff]
  %v740 = vld [vmem:[%s737 + $0x10] sm:$0xff]
  %741 = vmatprep.subr.mxu0 %v341
  %742 = vmatpush1.msra.mxu0 %v340
  %743 = vmatprep.subr.mxu0 %v344
  %744 = vmatpush1.msra.mxu0 %v343
  %745 = vmatprep.subr.mxu0 %v347
  %746 = vmatpush1.msra.mxu0 %v346
  %747 = vmatprep.subr.mxu0 %v350
  %748 = vmatpush1.msra.mxu0 %v349
  %749 = vmatprep.subr.mxu0 %v353
  %750 = vmatpush1.msra.mxu0 %v352
  %751 = vmatprep.subr.mxu0 %v356
  %752 = vmatpush1.msra.mxu0 %v355
  %753 = vmatprep.subr.mxu0 %v359
  %754 = vmatpush1.msra.mxu0 %v358
  %755 = vmatprep.subr.mxu0 %v362
  %756 = vmatpush1.msra.mxu0 %v361
  %757 = vmatprep.subr.mxu0 %v365
  %758 = vmatpush1.msra.mxu0 %v364
  %759 = vmatprep.subr.mxu0 %v368
  %760 = vmatpush1.msra.mxu0 %v367
  %761 = vmatprep.subr.mxu0 %v371
  %762 = vmatpush1.msra.mxu0 %v370
  %763 = vmatprep.subr.mxu0 %v374
  %764 = vmatpush1.msra.mxu0 %v373
  %765 = vmatprep.subr.mxu0 %v377
  %766 = vmatpush1.msra.mxu0 %v376
  %767 = vmatprep.subr.mxu0 %v380
  %768 = vmatpush1.msra.mxu0 %v379
  %769 = vmatprep.subr.mxu0 %v383
  %770 = vmatpush1.msra.mxu0 %v382
  %771 = vmatprep.subr.mxu0 %v386
  %772 = vmatpush1.msra.mxu0 %v385
  %773 = vmatprep.subr.mxu0 0.0
  %774 = vmatpush1.msra.mxu0 0.0
  %775 = vmatprep.subr.mxu0 0.0
  %776 = vmatpush1.msra.mxu0 0.0
  %777 = vmatprep.subr.mxu0 0.0
  %778 = vmatpush1.msra.mxu0 0.0
  %779 = vmatprep.subr.mxu0 0.0
  %780 = vmatpush1.msra.mxu0 0.0
  %781 = vmatprep.subr.mxu0 0.0
  %782 = vmatpush1.msra.mxu0 0.0
  %783 = vmatprep.subr.mxu0 0.0
  %784 = vmatpush1.msra.mxu0 0.0
  %785 = vmatprep.subr.mxu0 0.0
  %786 = vmatpush1.msra.mxu0 0.0
  %787 = vmatprep.subr.mxu0 0.0
  %788 = vmatpush1.msra.mxu0 0.0
  %789 = vmatprep.subr.mxu0 0.0
  %790 = vmatpush1.msra.mxu0 0.0
  %791 = vmatprep.subr.mxu0 0.0
  %792 = vmatpush1.msra.mxu0 0.0
  %793 = vmatprep.subr.mxu0 0.0
  %794 = vmatpush1.msra.mxu0 0.0
  %795 = vmatprep.subr.mxu0 0.0
  %796 = vmatpush1.msra.mxu0 0.0
  %797 = vmatprep.subr.mxu0 0.0
  %798 = vmatpush1.msra.mxu0 0.0
  %799 = vmatprep.subr.mxu0 0.0
  %800 = vmatpush1.msra.mxu0 0.0
  %801 = vmatprep.subr.mxu0 0.0
  %802 = vmatpush1.msra.mxu0 0.0
  %803 = vmatprep.subr.mxu0 0.0
  %804 = vmatpush1.msra.mxu0 0.0
  %805 = vmatprep.mubr.f32.mxu0 0.0
  %806 = vmatmul.mubr.f32.gmra.mrb[0].mxu0 %v732
  %v807 = vpop.f32.mrb[0].mxu0
  %v808 = vadd.f32 0.0, %v807
  %v809 = vpop.f32.mrb[0].mxu0
  %v810 = vadd.f32 0.0, %v809
  %811 = vdwg.mxu0
  %812 = vmatprep.subr.mxu0 0.0
  %813 = vmatpush1.msra.mxu0 %v342
  %814 = vmatprep.subr.mxu0 0.0
  %815 = vmatpush1.msra.mxu0 %v345
  %816 = vmatprep.subr.mxu0 0.0
  %817 = vmatpush1.msra.mxu0 %v348
  %818 = vmatprep.subr.mxu0 0.0
  %819 = vmatpush1.msra.mxu0 %v351
  %820 = vmatprep.subr.mxu0 0.0
  %821 = vmatpush1.msra.mxu0 %v354
  %822 = vmatprep.subr.mxu0 0.0
  %823 = vmatpush1.msra.mxu0 %v357
  %824 = vmatprep.subr.mxu0 0.0
  %825 = vmatpush1.msra.mxu0 %v360
  %826 = vmatprep.subr.mxu0 0.0
  %827 = vmatpush1.msra.mxu0 %v363
  %828 = vmatprep.subr.mxu0 0.0
  %829 = vmatpush1.msra.mxu0 %v366
  %830 = vmatprep.subr.mxu0 0.0
  %831 = vmatpush1.msra.mxu0 %v369
  %832 = vmatprep.subr.mxu0 0.0
  %833 = vmatpush1.msra.mxu0 %v372
  %834 = vmatprep.subr.mxu0 0.0
  %835 = vmatpush1.msra.mxu0 %v375
  %836 = vmatprep.subr.mxu0 0.0
  %837 = vmatpush1.msra.mxu0 %v378
  %838 = vmatprep.subr.mxu0 0.0
  %839 = vmatpush1.msra.mxu0 %v381
  %840 = vmatprep.subr.mxu0 0.0
  %841 = vmatpush1.msra.mxu0 %v384
  %842 = vmatprep.subr.mxu0 0.0
  %843 = vmatpush1.msra.mxu0 %v387
  %844 = vmatprep.subr.mxu0 0.0
  %845 = vmatpush1.msra.mxu0 0.0
  %846 = vmatprep.subr.mxu0 0.0
  %847 = vmatpush1.msra.mxu0 0.0
  %848 = vmatprep.subr.mxu0 0.0
  %849 = vmatpush1.msra.mxu0 0.0
  %850 = vmatprep.subr.mxu0 0.0
  %851 = vmatpush1.msra.mxu0 0.0
  %852 = vmatprep.subr.mxu0 0.0
  %853 = vmatpush1.msra.mxu0 0.0
  %854 = vmatprep.subr.mxu0 0.0
  %855 = vmatpush1.msra.mxu0 0.0
  %856 = vmatprep.subr.mxu0 0.0
  %857 = vmatpush1.msra.mxu0 0.0
  %858 = vmatprep.subr.mxu0 0.0
  %859 = vmatpush1.msra.mxu0 0.0
  %860 = vmatprep.subr.mxu0 0.0
  %861 = vmatpush1.msra.mxu0 0.0
  %862 = vmatprep.subr.mxu0 0.0
  %863 = vmatpush1.msra.mxu0 0.0
  %864 = vmatprep.subr.mxu0 0.0
  %865 = vmatpush1.msra.mxu0 0.0
  %866 = vmatprep.subr.mxu0 0.0
  %867 = vmatpush1.msra.mxu0 0.0
  %868 = vmatprep.subr.mxu0 0.0
  %869 = vmatpush1.msra.mxu0 0.0
  %870 = vmatprep.subr.mxu0 0.0
  %871 = vmatpush1.msra.mxu0 0.0
  %872 = vmatprep.subr.mxu0 0.0
  %873 = vmatpush1.msra.mxu0 0.0
  %874 = vmatprep.subr.mxu0 0.0
  %875 = vmatpush1.msra.mxu0 0.0
  %876 = vmatprep.mubr.f32.mxu0 0.0
  %877 = vmatmul.mubr.f32.gmra.mrb[0].mxu0 %v732
  %v878 = vpop.f32.mrb[0].mxu0
  %v879 = vadd.f32 0.0, %v878
  %v880 = vpop.f32.mrb[0].mxu0
  %881 = vdwg.mxu0
  %v882 = vadd.f32 %v738, %v808
  %v883 = vxor.u32 %v882, 2147483648
  %v884 = vmul.f32 %v883, 1.442695
  %v885 = vpow.pop %v884
  %v886 = vadd.f32 %v885, 1.0
  %v887 = vrcp.pop %v886
  %v888 = vmul.f32 1.0, %v887
  %v889 = vadd.f32 %v739, %v810
  %v890 = vxor.u32 %v889, 2147483648
  %v891 = vmul.f32 %v890, 1.442695
  %v892 = vpow.pop %v891
  %v893 = vadd.f32 %v892, 1.0
  %v894 = vrcp.pop %v893
  %v895 = vmul.f32 1.0, %v894
  %v896 = vadd.f32 %v879, %v555
  %v897 = vmul.f32 %v888, %v896
  %v898 = vadd.f32 %v740, %v897
  %v899 = vtanh.pop %v898
  %v900 = vsub.f32 %v732, %v899
  %v901 = vmul.f32 %v895, %v900
  %v902 = vadd.f32 %v899, %v901
  %s903 = scalar_lea.vmem %s5, 16
  %904 = vst [vmem:[%s903] sm:$0xff] %v902
  %s905 = smul.u32 3, 3
  %s906 = smul.addr %s905, 8
  %s907 = scalar_lea.vmem [#allocation3], %s906
  %v908 = vld [vmem:[%s907] sm:$0xff]
  %v909 = vld [vmem:[%s907 + $0x8] sm:$0xff]
  %v910 = vld [vmem:[%s907 + $0x10] sm:$0xff]
  %911 = vmatprep.subr.mxu0 %v341
  %912 = vmatpush1.msra.mxu0 %v340
  %913 = vmatprep.subr.mxu0 %v344
  %914 = vmatpush1.msra.mxu0 %v343
  %915 = vmatprep.subr.mxu0 %v347
  %916 = vmatpush1.msra.mxu0 %v346
  %917 = vmatprep.subr.mxu0 %v350
  %918 = vmatpush1.msra.mxu0 %v349
  %919 = vmatprep.subr.mxu0 %v353
  %920 = vmatpush1.msra.mxu0 %v352
  %921 = vmatprep.subr.mxu0 %v356
  %922 = vmatpush1.msra.mxu0 %v355
  %923 = vmatprep.subr.mxu0 %v359
  %924 = vmatpush1.msra.mxu0 %v358
  %925 = vmatprep.subr.mxu0 %v362
  %926 = vmatpush1.msra.mxu0 %v361
  %927 = vmatprep.subr.mxu0 %v365
  %928 = vmatpush1.msra.mxu0 %v364
  %929 = vmatprep.subr.mxu0 %v368
  %930 = vmatpush1.msra.mxu0 %v367
  %931 = vmatprep.subr.mxu0 %v371
  %932 = vmatpush1.msra.mxu0 %v370
  %933 = vmatprep.subr.mxu0 %v374
  %934 = vmatpush1.msra.mxu0 %v373
  %935 = vmatprep.subr.mxu0 %v377
  %936 = vmatpush1.msra.mxu0 %v376
  %937 = vmatprep.subr.mxu0 %v380
  %938 = vmatpush1.msra.mxu0 %v379
  %939 = vmatprep.subr.mxu0 %v383
  %940 = vmatpush1.msra.mxu0 %v382
  %941 = vmatprep.subr.mxu0 %v386
  %942 = vmatpush1.msra.mxu0 %v385
  %943 = vmatprep.subr.mxu0 0.0
  %944 = vmatpush1.msra.mxu0 0.0
  %945 = vmatprep.subr.mxu0 0.0
  %946 = vmatpush1.msra.mxu0 0.0
  %947 = vmatprep.subr.mxu0 0.0
  %948 = vmatpush1.msra.mxu0 0.0
  %949 = vmatprep.subr.mxu0 0.0
  %950 = vmatpush1.msra.mxu0 0.0
  %951 = vmatprep.subr.mxu0 0.0
  %952 = vmatpush1.msra.mxu0 0.0
  %953 = vmatprep.subr.mxu0 0.0
  %954 = vmatpush1.msra.mxu0 0.0
  %955 = vmatprep.subr.mxu0 0.0
  %956 = vmatpush1.msra.mxu0 0.0
  %957 = vmatprep.subr.mxu0 0.0
  %958 = vmatpush1.msra.mxu0 0.0
  %959 = vmatprep.subr.mxu0 0.0
  %960 = vmatpush1.msra.mxu0 0.0
  %961 = vmatprep.subr.mxu0 0.0
  %962 = vmatpush1.msra.mxu0 0.0
  %963 = vmatprep.subr.mxu0 0.0
  %964 = vmatpush1.msra.mxu0 0.0
  %965 = vmatprep.subr.mxu0 0.0
  %966 = vmatpush1.msra.mxu0 0.0
  %967 = vmatprep.subr.mxu0 0.0
  %968 = vmatpush1.msra.mxu0 0.0
  %969 = vmatprep.subr.mxu0 0.0
  %970 = vmatpush1.msra.mxu0 0.0
  %971 = vmatprep.subr.mxu0 0.0
  %972 = vmatpush1.msra.mxu0 0.0
  %973 = vmatprep.subr.mxu0 0.0
  %974 = vmatpush1.msra.mxu0 0.0
  %975 = vmatprep.mubr.f32.mxu0 0.0
  %976 = vmatmul.mubr.f32.gmra.mrb[0].mxu0 %v902
  %v977 = vpop.f32.mrb[0].mxu0
  %v978 = vadd.f32 0.0, %v977
  %v979 = vpop.f32.mrb[0].mxu0
  %v980 = vadd.f32 0.0, %v979
  %981 = vdwg.mxu0
  %982 = vmatprep.subr.mxu0 0.0
  %983 = vmatpush1.msra.mxu0 %v342
  %984 = vmatprep.subr.mxu0 0.0
  %985 = vmatpush1.msra.mxu0 %v345
  %986 = vmatprep.subr.mxu0 0.0
  %987 = vmatpush1.msra.mxu0 %v348
  %988 = vmatprep.subr.mxu0 0.0
  %989 = vmatpush1.msra.mxu0 %v351
  %990 = vmatprep.subr.mxu0 0.0
  %991 = vmatpush1.msra.mxu0 %v354
  %992 = vmatprep.subr.mxu0 0.0
  %993 = vmatpush1.msra.mxu0 %v357
  %994 = vmatprep.subr.mxu0 0.0
  %995 = vmatpush1.msra.mxu0 %v360
  %996 = vmatprep.subr.mxu0 0.0
  %997 = vmatpush1.msra.mxu0 %v363
  %998 = vmatprep.subr.mxu0 0.0
  %999 = vmatpush1.msra.mxu0 %v366
  %1000 = vmatprep.subr.mxu0 0.0
  %1001 = vmatpush1.msra.mxu0 %v369
  %1002 = vmatprep.subr.mxu0 0.0
  %1003 = vmatpush1.msra.mxu0 %v372
  %1004 = vmatprep.subr.mxu0 0.0
  %1005 = vmatpush1.msra.mxu0 %v375
  %1006 = vmatprep.subr.mxu0 0.0
  %1007 = vmatpush1.msra.mxu0 %v378
  %1008 = vmatprep.subr.mxu0 0.0
  %1009 = vmatpush1.msra.mxu0 %v381
  %1010 = vmatprep.subr.mxu0 0.0
  %1011 = vmatpush1.msra.mxu0 %v384
  %1012 = vmatprep.subr.mxu0 0.0
  %1013 = vmatpush1.msra.mxu0 %v387
  %1014 = vmatprep.subr.mxu0 0.0
  %1015 = vmatpush1.msra.mxu0 0.0
  %1016 = vmatprep.subr.mxu0 0.0
  %1017 = vmatpush1.msra.mxu0 0.0
  %1018 = vmatprep.subr.mxu0 0.0
  %1019 = vmatpush1.msra.mxu0 0.0
  %1020 = vmatprep.subr.mxu0 0.0
  %1021 = vmatpush1.msra.mxu0 0.0
  %1022 = vmatprep.subr.mxu0 0.0
  %1023 = vmatpush1.msra.mxu0 0.0
  %1024 = vmatprep.subr.mxu0 0.0
  %1025 = vmatpush1.msra.mxu0 0.0
  %1026 = vmatprep.subr.mxu0 0.0
  %1027 = vmatpush1.msra.mxu0 0.0
  %1028 = vmatprep.subr.mxu0 0.0
  %1029 = vmatpush1.msra.mxu0 0.0
  %1030 = vmatprep.subr.mxu0 0.0
  %1031 = vmatpush1.msra.mxu0 0.0
  %1032 = vmatprep.subr.mxu0 0.0
  %1033 = vmatpush1.msra.mxu0 0.0
  %1034 = vmatprep.subr.mxu0 0.0
  %1035 = vmatpush1.msra.mxu0 0.0
  %1036 = vmatprep.subr.mxu0 0.0
  %1037 = vmatpush1.msra.mxu0 0.0
  %1038 = vmatprep.subr.mxu0 0.0
  %1039 = vmatpush1.msra.mxu0 0.0
  %1040 = vmatprep.subr.mxu0 0.0
  %1041 = vmatpush1.msra.mxu0 0.0
  %1042 = vmatprep.subr.mxu0 0.0
  %1043 = vmatpush1.msra.mxu0 0.0
  %1044 = vmatprep.subr.mxu0 0.0
  %1045 = vmatpush1.msra.mxu0 0.0
  %1046 = vmatprep.mubr.f32.mxu0 0.0
  %1047 = vmatmul.mubr.f32.gmra.mrb[0].mxu0 %v902
  %v1048 = vpop.f32.mrb[0].mxu0
  %v1049 = vadd.f32 0.0, %v1048
  %v1050 = vpop.f32.mrb[0].mxu0
  %1051 = vdwg.mxu0
  %v1052 = vadd.f32 %v908, %v978
  %v1053 = vxor.u32 %v1052, 2147483648
  %v1054 = vmul.f32 %v1053, 1.442695
  %v1055 = vpow.pop %v1054
  %v1056 = vadd.f32 %v1055, 1.0
  %v1057 = vrcp.pop %v1056
  %v1058 = vmul.f32 1.0, %v1057
  %v1059 = vadd.f32 %v909, %v980
  %v1060 = vxor.u32 %v1059, 2147483648
  %v1061 = vmul.f32 %v1060, 1.442695
  %v1062 = vpow.pop %v1061
  %v1063 = vadd.f32 %v1062, 1.0
  %v1064 = vrcp.pop %v1063
  %v1065 = vmul.f32 1.0, %v1064
  %v1066 = vadd.f32 %v1049, %v555
  %v1067 = vmul.f32 %v1058, %v1066
  %v1068 = vadd.f32 %v910, %v1067
  %v1069 = vtanh.pop %v1068
  %v1070 = vsub.f32 %v902, %v1069
  %v1071 = vmul.f32 %v1065, %v1070
  %v1072 = vadd.f32 %v1069, %v1071
  %s1073 = scalar_lea.vmem %s5, 24
  %1074 = vst [vmem:[%s1073] sm:$0xff] %v1072
  %s1075 = smul.u32 4, 3
  %s1076 = smul.addr %s1075, 8
  %s1077 = scalar_lea.vmem [#allocation3], %s1076
  %v1078 = vld [vmem:[%s1077] sm:$0xff]
  %v1079 = vld [vmem:[%s1077 + $0x8] sm:$0xff]
  %v1080 = vld [vmem:[%s1077 + $0x10] sm:$0xff]
  %1081 = vmatprep.subr.mxu0 %v341
  %1082 = vmatpush1.msra.mxu0 %v340
  %1083 = vmatprep.subr.mxu0 %v344
  %1084 = vmatpush1.msra.mxu0 %v343
  %1085 = vmatprep.subr.mxu0 %v347
  %1086 = vmatpush1.msra.mxu0 %v346
  %1087 = vmatprep.subr.mxu0 %v350
  %1088 = vmatpush1.msra.mxu0 %v349
  %1089 = vmatprep.subr.mxu0 %v353
  %1090 = vmatpush1.msra.mxu0 %v352
  %1091 = vmatprep.subr.mxu0 %v356
  %1092 = vmatpush1.msra.mxu0 %v355
  %1093 = vmatprep.subr.mxu0 %v359
  %1094 = vmatpush1.msra.mxu0 %v358
  %1095 = vmatprep.subr.mxu0 %v362
  %1096 = vmatpush1.msra.mxu0 %v361
  %1097 = vmatprep.subr.mxu0 %v365
  %1098 = vmatpush1.msra.mxu0 %v364
  %1099 = vmatprep.subr.mxu0 %v368
  %1100 = vmatpush1.msra.mxu0 %v367
  %1101 = vmatprep.subr.mxu0 %v371
  %1102 = vmatpush1.msra.mxu0 %v370
  %1103 = vmatprep.subr.mxu0 %v374
  %1104 = vmatpush1.msra.mxu0 %v373
  %1105 = vmatprep.subr.mxu0 %v377
  %1106 = vmatpush1.msra.mxu0 %v376
  %1107 = vmatprep.subr.mxu0 %v380
  %1108 = vmatpush1.msra.mxu0 %v379
  %1109 = vmatprep.subr.mxu0 %v383
  %1110 = vmatpush1.msra.mxu0 %v382
  %1111 = vmatprep.subr.mxu0 %v386
  %1112 = vmatpush1.msra.mxu0 %v385
  %1113 = vmatprep.subr.mxu0 0.0
  %1114 = vmatpush1.msra.mxu0 0.0
  %1115 = vmatprep.subr.mxu0 0.0
  %1116 = vmatpush1.msra.mxu0 0.0
  %1117 = vmatprep.subr.mxu0 0.0
  %1118 = vmatpush1.msra.mxu0 0.0
  %1119 = vmatprep.subr.mxu0 0.0
  %1120 = vmatpush1.msra.mxu0 0.0
  %1121 = vmatprep.subr.mxu0 0.0
  %1122 = vmatpush1.msra.mxu0 0.0
  %1123 = vmatprep.subr.mxu0 0.0
  %1124 = vmatpush1.msra.mxu0 0.0
  %1125 = vmatprep.subr.mxu0 0.0
  %1126 = vmatpush1.msra.mxu0 0.0
  %1127 = vmatprep.subr.mxu0 0.0
  %1128 = vmatpush1.msra.mxu0 0.0
  %1129 = vmatprep.subr.mxu0 0.0
  %1130 = vmatpush1.msra.mxu0 0.0
  %1131 = vmatprep.subr.mxu0 0.0
  %1132 = vmatpush1.msra.mxu0 0.0
  %1133 = vmatprep.subr.mxu0 0.0
  %1134 = vmatpush1.msra.mxu0 0.0
  %1135 = vmatprep.subr.mxu0 0.0
  %1136 = vmatpush1.msra.mxu0 0.0
  %1137 = vmatprep.subr.mxu0 0.0
  %1138 = vmatpush1.msra.mxu0 0.0
  %1139 = vmatprep.subr.mxu0 0.0
  %1140 = vmatpush1.msra.mxu0 0.0
  %1141 = vmatprep.subr.mxu0 0.0
  %1142 = vmatpush1.msra.mxu0 0.0
  %1143 = vmatprep.subr.mxu0 0.0
  %1144 = vmatpush1.msra.mxu0 0.0
  %1145 = vmatprep.mubr.f32.mxu0 0.0
  %1146 = vmatmul.mubr.f32.gmra.mrb[0].mxu0 %v1072
  %v1147 = vpop.f32.mrb[0].mxu0
  %v1148 = vadd.f32 0.0, %v1147
  %v1149 = vpop.f32.mrb[0].mxu0
  %v1150 = vadd.f32 0.0, %v1149
  %1151 = vdwg.mxu0
  %1152 = vmatprep.subr.mxu0 0.0
  %1153 = vmatpush1.msra.mxu0 %v342
  %1154 = vmatprep.subr.mxu0 0.0
  %1155 = vmatpush1.msra.mxu0 %v345
  %1156 = vmatprep.subr.mxu0 0.0
  %1157 = vmatpush1.msra.mxu0 %v348
  %1158 = vmatprep.subr.mxu0 0.0
  %1159 = vmatpush1.msra.mxu0 %v351
  %1160 = vmatprep.subr.mxu0 0.0
  %1161 = vmatpush1.msra.mxu0 %v354
  %1162 = vmatprep.subr.mxu0 0.0
  %1163 = vmatpush1.msra.mxu0 %v357
  %1164 = vmatprep.subr.mxu0 0.0
  %1165 = vmatpush1.msra.mxu0 %v360
  %1166 = vmatprep.subr.mxu0 0.0
  %1167 = vmatpush1.msra.mxu0 %v363
  %1168 = vmatprep.subr.mxu0 0.0
  %1169 = vmatpush1.msra.mxu0 %v366
  %1170 = vmatprep.subr.mxu0 0.0
  %1171 = vmatpush1.msra.mxu0 %v369
  %1172 = vmatprep.subr.mxu0 0.0
  %1173 = vmatpush1.msra.mxu0 %v372
  %1174 = vmatprep.subr.mxu0 0.0
  %1175 = vmatpush1.msra.mxu0 %v375
  %1176 = vmatprep.subr.mxu0 0.0
  %1177 = vmatpush1.msra.mxu0 %v378
  %1178 = vmatprep.subr.mxu0 0.0
  %1179 = vmatpush1.msra.mxu0 %v381
  %1180 = vmatprep.subr.mxu0 0.0
  %1181 = vmatpush1.msra.mxu0 %v384
  %1182 = vmatprep.subr.mxu0 0.0
  %1183 = vmatpush1.msra.mxu0 %v387
  %1184 = vmatprep.subr.mxu0 0.0
  %1185 = vmatpush1.msra.mxu0 0.0
  %1186 = vmatprep.subr.mxu0 0.0
  %1187 = vmatpush1.msra.mxu0 0.0
  %1188 = vmatprep.subr.mxu0 0.0
  %1189 = vmatpush1.msra.mxu0 0.0
  %1190 = vmatprep.subr.mxu0 0.0
  %1191 = vmatpush1.msra.mxu0 0.0
  %1192 = vmatprep.subr.mxu0 0.0
  %1193 = vmatpush1.msra.mxu0 0.0
  %1194 = vmatprep.subr.mxu0 0.0
  %1195 = vmatpush1.msra.mxu0 0.0
  %1196 = vmatprep.subr.mxu0 0.0
  %1197 = vmatpush1.msra.mxu0 0.0
  %1198 = vmatprep.subr.mxu0 0.0
  %1199 = vmatpush1.msra.mxu0 0.0
  %1200 = vmatprep.subr.mxu0 0.0
  %1201 = vmatpush1.msra.mxu0 0.0
  %1202 = vmatprep.subr.mxu0 0.0
  %1203 = vmatpush1.msra.mxu0 0.0
  %1204 = vmatprep.subr.mxu0 0.0
  %1205 = vmatpush1.msra.mxu0 0.0
  %1206 = vmatprep.subr.mxu0 0.0
  %1207 = vmatpush1.msra.mxu0 0.0
  %1208 = vmatprep.subr.mxu0 0.0
  %1209 = vmatpush1.msra.mxu0 0.0
  %1210 = vmatprep.subr.mxu0 0.0
  %1211 = vmatpush1.msra.mxu0 0.0
  %1212 = vmatprep.subr.mxu0 0.0
  %1213 = vmatpush1.msra.mxu0 0.0
  %1214 = vmatprep.subr.mxu0 0.0
  %1215 = vmatpush1.msra.mxu0 0.0
  %1216 = vmatprep.mubr.f32.mxu0 0.0
  %1217 = vmatmul.mubr.f32.gmra.mrb[0].mxu0 %v1072
  %v1218 = vpop.f32.mrb[0].mxu0
  %v1219 = vadd.f32 0.0, %v1218
  %v1220 = vpop.f32.mrb[0].mxu0
  %1221 = vdwg.mxu0
  %v1222 = vadd.f32 %v1078, %v1148
  %v1223 = vxor.u32 %v1222, 2147483648
  %v1224 = vmul.f32 %v1223, 1.442695
  %v1225 = vpow.pop %v1224
  %v1226 = vadd.f32 %v1225, 1.0
  %v1227 = vrcp.pop %v1226
  %v1228 = vmul.f32 1.0, %v1227
  %v1229 = vadd.f32 %v1079, %v1150
  %v1230 = vxor.u32 %v1229, 2147483648
  %v1231 = vmul.f32 %v1230, 1.442695
  %v1232 = vpow.pop %v1231
  %v1233 = vadd.f32 %v1232, 1.0
  %v1234 = vrcp.pop %v1233
  %v1235 = vmul.f32 1.0, %v1234
  %v1236 = vadd.f32 %v1219, %v555
  %v1237 = vmul.f32 %v1228, %v1236
  %v1238 = vadd.f32 %v1080, %v1237
  %v1239 = vtanh.pop %v1238
  %v1240 = vsub.f32 %v1072, %v1239
  %v1241 = vmul.f32 %v1235, %v1240
  %v1242 = vadd.f32 %v1239, %v1241
  %s1243 = scalar_lea.vmem %s5, 32
  %1244 = vst [vmem:[%s1243] sm:$0xff] %v1242
  %s1245 = smul.u32 5, 3
  %s1246 = smul.addr %s1245, 8
  %s1247 = scalar_lea.vmem [#allocation3], %s1246
  %v1248 = vld [vmem:[%s1247] sm:$0xff]
  %v1249 = vld [vmem:[%s1247 + $0x8] sm:$0xff]
  %v1250 = vld [vmem:[%s1247 + $0x10] sm:$0xff]
  %1251 = vmatprep.subr.mxu0 %v341
  %1252 = vmatpush1.msra.mxu0 %v340
  %1253 = vmatprep.subr.mxu0 %v344
  %1254 = vmatpush1.msra.mxu0 %v343
  %1255 = vmatprep.subr.mxu0 %v347
  %1256 = vmatpush1.msra.mxu0 %v346
  %1257 = vmatprep.subr.mxu0 %v350
  %1258 = vmatpush1.msra.mxu0 %v349
  %1259 = vmatprep.subr.mxu0 %v353
  %1260 = vmatpush1.msra.mxu0 %v352
  %1261 = vmatprep.subr.mxu0 %v356
  %1262 = vmatpush1.msra.mxu0 %v355
  %1263 = vmatprep.subr.mxu0 %v359
  %1264 = vmatpush1.msra.mxu0 %v358
  %1265 = vmatprep.subr.mxu0 %v362
  %1266 = vmatpush1.msra.mxu0 %v361
  %1267 = vmatprep.subr.mxu0 %v365
  %1268 = vmatpush1.msra.mxu0 %v364
  %1269 = vmatprep.subr.mxu0 %v368
  %1270 = vmatpush1.msra.mxu0 %v367
  %1271 = vmatprep.subr.mxu0 %v371
  %1272 = vmatpush1.msra.mxu0 %v370
  %1273 = vmatprep.subr.mxu0 %v374
  %1274 = vmatpush1.msra.mxu0 %v373
  %1275 = vmatprep.subr.mxu0 %v377
  %1276 = vmatpush1.msra.mxu0 %v376
  %1277 = vmatprep.subr.mxu0 %v380
  %1278 = vmatpush1.msra.mxu0 %v379
  %1279 = vmatprep.subr.mxu0 %v383
  %1280 = vmatpush1.msra.mxu0 %v382
  %1281 = vmatprep.subr.mxu0 %v386
  %1282 = vmatpush1.msra.mxu0 %v385
  %1283 = vmatprep.subr.mxu0 0.0
  %1284 = vmatpush1.msra.mxu0 0.0
  %1285 = vmatprep.subr.mxu0 0.0
  %1286 = vmatpush1.msra.mxu0 0.0
  %1287 = vmatprep.subr.mxu0 0.0
  %1288 = vmatpush1.msra.mxu0 0.0
  %1289 = vmatprep.subr.mxu0 0.0
  %1290 = vmatpush1.msra.mxu0 0.0
  %1291 = vmatprep.subr.mxu0 0.0
  %1292 = vmatpush1.msra.mxu0 0.0
  %1293 = vmatprep.subr.mxu0 0.0
  %1294 = vmatpush1.msra.mxu0 0.0
  %1295 = vmatprep.subr.mxu0 0.0
  %1296 = vmatpush1.msra.mxu0 0.0
  %1297 = vmatprep.subr.mxu0 0.0
  %1298 = vmatpush1.msra.mxu0 0.0
  %1299 = vmatprep.subr.mxu0 0.0
  %1300 = vmatpush1.msra.mxu0 0.0
  %1301 = vmatprep.subr.mxu0 0.0
  %1302 = vmatpush1.msra.mxu0 0.0
  %1303 = vmatprep.subr.mxu0 0.0
  %1304 = vmatpush1.msra.mxu0 0.0
  %1305 = vmatprep.subr.mxu0 0.0
  %1306 = vmatpush1.msra.mxu0 0.0
  %1307 = vmatprep.subr.mxu0 0.0
  %1308 = vmatpush1.msra.mxu0 0.0
  %1309 = vmatprep.subr.mxu0 0.0
  %1310 = vmatpush1.msra.mxu0 0.0
  %1311 = vmatprep.subr.mxu0 0.0
  %1312 = vmatpush1.msra.mxu0 0.0
  %1313 = vmatprep.subr.mxu0 0.0
  %1314 = vmatpush1.msra.mxu0 0.0
  %1315 = vmatprep.mubr.f32.mxu0 0.0
  %1316 = vmatmul.mubr.f32.gmra.mrb[0].mxu0 %v1242
  %v1317 = vpop.f32.mrb[0].mxu0
  %v1318 = vadd.f32 0.0, %v1317
  %v1319 = vpop.f32.mrb[0].mxu0
  %v1320 = vadd.f32 0.0, %v1319
  %1321 = vdwg.mxu0
  %1322 = vmatprep.subr.mxu0 0.0
  %1323 = vmatpush1.msra.mxu0 %v342
  %1324 = vmatprep.subr.mxu0 0.0
  %1325 = vmatpush1.msra.mxu0 %v345
  %1326 = vmatprep.subr.mxu0 0.0
  %1327 = vmatpush1.msra.mxu0 %v348
  %1328 = vmatprep.subr.mxu0 0.0
  %1329 = vmatpush1.msra.mxu0 %v351
  %1330 = vmatprep.subr.mxu0 0.0
  %1331 = vmatpush1.msra.mxu0 %v354
  %1332 = vmatprep.subr.mxu0 0.0
  %1333 = vmatpush1.msra.mxu0 %v357
  %1334 = vmatprep.subr.mxu0 0.0
  %1335 = vmatpush1.msra.mxu0 %v360
  %1336 = vmatprep.subr.mxu0 0.0
  %1337 = vmatpush1.msra.mxu0 %v363
  %1338 = vmatprep.subr.mxu0 0.0
  %1339 = vmatpush1.msra.mxu0 %v366
  %1340 = vmatprep.subr.mxu0 0.0
  %1341 = vmatpush1.msra.mxu0 %v369
  %1342 = vmatprep.subr.mxu0 0.0
  %1343 = vmatpush1.msra.mxu0 %v372
  %1344 = vmatprep.subr.mxu0 0.0
  %1345 = vmatpush1.msra.mxu0 %v375
  %1346 = vmatprep.subr.mxu0 0.0
  %1347 = vmatpush1.msra.mxu0 %v378
  %1348 = vmatprep.subr.mxu0 0.0
  %1349 = vmatpush1.msra.mxu0 %v381
  %1350 = vmatprep.subr.mxu0 0.0
  %1351 = vmatpush1.msra.mxu0 %v384
  %1352 = vmatprep.subr.mxu0 0.0
  %1353 = vmatpush1.msra.mxu0 %v387
  %1354 = vmatprep.subr.mxu0 0.0
  %1355 = vmatpush1.msra.mxu0 0.0
  %1356 = vmatprep.subr.mxu0 0.0
  %1357 = vmatpush1.msra.mxu0 0.0
  %1358 = vmatprep.subr.mxu0 0.0
  %1359 = vmatpush1.msra.mxu0 0.0
  %1360 = vmatprep.subr.mxu0 0.0
  %1361 = vmatpush1.msra.mxu0 0.0
  %1362 = vmatprep.subr.mxu0 0.0
  %1363 = vmatpush1.msra.mxu0 0.0
  %1364 = vmatprep.subr.mxu0 0.0
  %1365 = vmatpush1.msra.mxu0 0.0
  %1366 = vmatprep.subr.mxu0 0.0
  %1367 = vmatpush1.msra.mxu0 0.0
  %1368 = vmatprep.subr.mxu0 0.0
  %1369 = vmatpush1.msra.mxu0 0.0
  %1370 = vmatprep.subr.mxu0 0.0
  %1371 = vmatpush1.msra.mxu0 0.0
  %1372 = vmatprep.subr.mxu0 0.0
  %1373 = vmatpush1.msra.mxu0 0.0
  %1374 = vmatprep.subr.mxu0 0.0
  %1375 = vmatpush1.msra.mxu0 0.0
  %1376 = vmatprep.subr.mxu0 0.0
  %1377 = vmatpush1.msra.mxu0 0.0
  %1378 = vmatprep.subr.mxu0 0.0
  %1379 = vmatpush1.msra.mxu0 0.0
  %1380 = vmatprep.subr.mxu0 0.0
  %1381 = vmatpush1.msra.mxu0 0.0
  %1382 = vmatprep.subr.mxu0 0.0
  %1383 = vmatpush1.msra.mxu0 0.0
  %1384 = vmatprep.subr.mxu0 0.0
  %1385 = vmatpush1.msra.mxu0 0.0
  %1386 = vmatprep.mubr.f32.mxu0 0.0
  %1387 = vmatmul.mubr.f32.gmra.mrb[0].mxu0 %v1242
  %v1388 = vpop.f32.mrb[0].mxu0
  %v1389 = vadd.f32 0.0, %v1388
  %v1390 = vpop.f32.mrb[0].mxu0
  %1391 = vdwg.mxu0
  %v1392 = vadd.f32 %v1248, %v1318
  %v1393 = vxor.u32 %v1392, 2147483648
  %v1394 = vmul.f32 %v1393, 1.442695
  %v1395 = vpow.pop %v1394
  %v1396 = vadd.f32 %v1395, 1.0
  %v1397 = vrcp.pop %v1396
  %v1398 = vmul.f32 1.0, %v1397
  %v1399 = vadd.f32 %v1249, %v1320
  %v1400 = vxor.u32 %v1399, 2147483648
  %v1401 = vmul.f32 %v1400, 1.442695
  %v1402 = vpow.pop %v1401
  %v1403 = vadd.f32 %v1402, 1.0
  %v1404 = vrcp.pop %v1403
  %v1405 = vmul.f32 1.0, %v1404
  %v1406 = vadd.f32 %v1389, %v555
  %v1407 = vmul.f32 %v1398, %v1406
  %v1408 = vadd.f32 %v1250, %v1407
  %v1409 = vtanh.pop %v1408
  %v1410 = vsub.f32 %v1242, %v1409
  %v1411 = vmul.f32 %v1405, %v1410
  %v1412 = vadd.f32 %v1409, %v1411
  %s1413 = scalar_lea.vmem %s5, 40
  %1414 = vst [vmem:[%s1413] sm:$0xff] %v1412
  %s1415 = smul.u32 6, 3
  %s1416 = smul.addr %s1415, 8
  %s1417 = scalar_lea.vmem [#allocation3], %s1416
  %v1418 = vld [vmem:[%s1417] sm:$0xff]
  %v1419 = vld [vmem:[%s1417 + $0x8] sm:$0xff]
  %v1420 = vld [vmem:[%s1417 + $0x10] sm:$0xff]
  %1421 = vmatprep.subr.mxu0 %v341
  %1422 = vmatpush1.msra.mxu0 %v340
  %1423 = vmatprep.subr.mxu0 %v344
  %1424 = vmatpush1.msra.mxu0 %v343
  %1425 = vmatprep.subr.mxu0 %v347
  %1426 = vmatpush1.msra.mxu0 %v346
  %1427 = vmatprep.subr.mxu0 %v350
  %1428 = vmatpush1.msra.mxu0 %v349
  %1429 = vmatprep.subr.mxu0 %v353
  %1430 = vmatpush1.msra.mxu0 %v352
  %1431 = vmatprep.subr.mxu0 %v356
  %1432 = vmatpush1.msra.mxu0 %v355
  %1433 = vmatprep.subr.mxu0 %v359
  %1434 = vmatpush1.msra.mxu0 %v358
  %1435 = vmatprep.subr.mxu0 %v362
  %1436 = vmatpush1.msra.mxu0 %v361
  %1437 = vmatprep.subr.mxu0 %v365
  %1438 = vmatpush1.msra.mxu0 %v364
  %1439 = vmatprep.subr.mxu0 %v368
  %1440 = vmatpush1.msra.mxu0 %v367
  %1441 = vmatprep.subr.mxu0 %v371
  %1442 = vmatpush1.msra.mxu0 %v370
  %1443 = vmatprep.subr.mxu0 %v374
  %1444 = vmatpush1.msra.mxu0 %v373
  %1445 = vmatprep.subr.mxu0 %v377
  %1446 = vmatpush1.msra.mxu0 %v376
  %1447 = vmatprep.subr.mxu0 %v380
  %1448 = vmatpush1.msra.mxu0 %v379
  %1449 = vmatprep.subr.mxu0 %v383
  %1450 = vmatpush1.msra.mxu0 %v382
  %1451 = vmatprep.subr.mxu0 %v386
  %1452 = vmatpush1.msra.mxu0 %v385
  %1453 = vmatprep.subr.mxu0 0.0
  %1454 = vmatpush1.msra.mxu0 0.0
  %1455 = vmatprep.subr.mxu0 0.0
  %1456 = vmatpush1.msra.mxu0 0.0
  %1457 = vmatprep.subr.mxu0 0.0
  %1458 = vmatpush1.msra.mxu0 0.0
  %1459 = vmatprep.subr.mxu0 0.0
  %1460 = vmatpush1.msra.mxu0 0.0
  %1461 = vmatprep.subr.mxu0 0.0
  %1462 = vmatpush1.msra.mxu0 0.0
  %1463 = vmatprep.subr.mxu0 0.0
  %1464 = vmatpush1.msra.mxu0 0.0
  %1465 = vmatprep.subr.mxu0 0.0
  %1466 = vmatpush1.msra.mxu0 0.0
  %1467 = vmatprep.subr.mxu0 0.0
  %1468 = vmatpush1.msra.mxu0 0.0
  %1469 = vmatprep.subr.mxu0 0.0
  %1470 = vmatpush1.msra.mxu0 0.0
  %1471 = vmatprep.subr.mxu0 0.0
  %1472 = vmatpush1.msra.mxu0 0.0
  %1473 = vmatprep.subr.mxu0 0.0
  %1474 = vmatpush1.msra.mxu0 0.0
  %1475 = vmatprep.subr.mxu0 0.0
  %1476 = vmatpush1.msra.mxu0 0.0
  %1477 = vmatprep.subr.mxu0 0.0
  %1478 = vmatpush1.msra.mxu0 0.0
  %1479 = vmatprep.subr.mxu0 0.0
  %1480 = vmatpush1.msra.mxu0 0.0
  %1481 = vmatprep.subr.mxu0 0.0
  %1482 = vmatpush1.msra.mxu0 0.0
  %1483 = vmatprep.subr.mxu0 0.0
  %1484 = vmatpush1.msra.mxu0 0.0
  %1485 = vmatprep.mubr.f32.mxu0 0.0
  %1486 = vmatmul.mubr.f32.gmra.mrb[0].mxu0 %v1412
  %v1487 = vpop.f32.mrb[0].mxu0
  %v1488 = vadd.f32 0.0, %v1487
  %v1489 = vpop.f32.mrb[0].mxu0
  %v1490 = vadd.f32 0.0, %v1489
  %1491 = vdwg.mxu0
  %1492 = vmatprep.subr.mxu0 0.0
  %1493 = vmatpush1.msra.mxu0 %v342
  %1494 = vmatprep.subr.mxu0 0.0
  %1495 = vmatpush1.msra.mxu0 %v345
  %1496 = vmatprep.subr.mxu0 0.0
  %1497 = vmatpush1.msra.mxu0 %v348
  %1498 = vmatprep.subr.mxu0 0.0
  %1499 = vmatpush1.msra.mxu0 %v351
  %1500 = vmatprep.subr.mxu0 0.0
  %1501 = vmatpush1.msra.mxu0 %v354
  %1502 = vmatprep.subr.mxu0 0.0
  %1503 = vmatpush1.msra.mxu0 %v357
  %1504 = vmatprep.subr.mxu0 0.0
  %1505 = vmatpush1.msra.mxu0 %v360
  %1506 = vmatprep.subr.mxu0 0.0
  %1507 = vmatpush1.msra.mxu0 %v363
  %1508 = vmatprep.subr.mxu0 0.0
  %1509 = vmatpush1.msra.mxu0 %v366
  %1510 = vmatprep.subr.mxu0 0.0
  %1511 = vmatpush1.msra.mxu0 %v369
  %1512 = vmatprep.subr.mxu0 0.0
  %1513 = vmatpush1.msra.mxu0 %v372
  %1514 = vmatprep.subr.mxu0 0.0
  %1515 = vmatpush1.msra.mxu0 %v375
  %1516 = vmatprep.subr.mxu0 0.0
  %1517 = vmatpush1.msra.mxu0 %v378
  %1518 = vmatprep.subr.mxu0 0.0
  %1519 = vmatpush1.msra.mxu0 %v381
  %1520 = vmatprep.subr.mxu0 0.0
  %1521 = vmatpush1.msra.mxu0 %v384
  %1522 = vmatprep.subr.mxu0 0.0
  %1523 = vmatpush1.msra.mxu0 %v387
  %1524 = vmatprep.subr.mxu0 0.0
  %1525 = vmatpush1.msra.mxu0 0.0
  %1526 = vmatprep.subr.mxu0 0.0
  %1527 = vmatpush1.msra.mxu0 0.0
  %1528 = vmatprep.subr.mxu0 0.0
  %1529 = vmatpush1.msra.mxu0 0.0
  %1530 = vmatprep.subr.mxu0 0.0
  %1531 = vmatpush1.msra.mxu0 0.0
  %1532 = vmatprep.subr.mxu0 0.0
  %1533 = vmatpush1.msra.mxu0 0.0
  %1534 = vmatprep.subr.mxu0 0.0
  %1535 = vmatpush1.msra.mxu0 0.0
  %1536 = vmatprep.subr.mxu0 0.0
  %1537 = vmatpush1.msra.mxu0 0.0
  %1538 = vmatprep.subr.mxu0 0.0
  %1539 = vmatpush1.msra.mxu0 0.0
  %1540 = vmatprep.subr.mxu0 0.0
  %1541 = vmatpush1.msra.mxu0 0.0
  %1542 = vmatprep.subr.mxu0 0.0
  %1543 = vmatpush1.msra.mxu0 0.0
  %1544 = vmatprep.subr.mxu0 0.0
  %1545 = vmatpush1.msra.mxu0 0.0
  %1546 = vmatprep.subr.mxu0 0.0
  %1547 = vmatpush1.msra.mxu0 0.0
  %1548 = vmatprep.subr.mxu0 0.0
  %1549 = vmatpush1.msra.mxu0 0.0
  %1550 = vmatprep.subr.mxu0 0.0
  %1551 = vmatpush1.msra.mxu0 0.0
  %1552 = vmatprep.subr.mxu0 0.0
  %1553 = vmatpush1.msra.mxu0 0.0
  %1554 = vmatprep.subr.mxu0 0.0
  %1555 = vmatpush1.msra.mxu0 0.0
  %1556 = vmatprep.mubr.f32.mxu0 0.0
  %1557 = vmatmul.mubr.f32.gmra.mrb[0].mxu0 %v1412
  %v1558 = vpop.f32.mrb[0].mxu0
  %v1559 = vadd.f32 0.0, %v1558
  %v1560 = vpop.f32.mrb[0].mxu0
  %1561 = vdwg.mxu0
  %v1562 = vadd.f32 %v1418, %v1488
  %v1563 = vxor.u32 %v1562, 2147483648
  %v1564 = vmul.f32 %v1563, 1.442695
  %v1565 = vpow.pop %v1564
  %v1566 = vadd.f32 %v1565, 1.0
  %v1567 = vrcp.pop %v1566
  %v1568 = vmul.f32 1.0, %v1567
  %v1569 = vadd.f32 %v1419, %v1490
  %v1570 = vxor.u32 %v1569, 2147483648
  %v1571 = vmul.f32 %v1570, 1.442695
  %v1572 = vpow.pop %v1571
  %v1573 = vadd.f32 %v1572, 1.0
  %v1574 = vrcp.pop %v1573
  %v1575 = vmul.f32 1.0, %v1574
  %v1576 = vadd.f32 %v1559, %v555
  %v1577 = vmul.f32 %v1568, %v1576
  %v1578 = vadd.f32 %v1420, %v1577
  %v1579 = vtanh.pop %v1578
  %v1580 = vsub.f32 %v1412, %v1579
  %v1581 = vmul.f32 %v1575, %v1580
  %v1582 = vadd.f32 %v1579, %v1581
  %s1583 = scalar_lea.vmem %s5, 48
  %1584 = vst [vmem:[%s1583] sm:$0xff] %v1582
  %s1585 = smul.u32 7, 3
  %s1586 = smul.addr %s1585, 8
  %s1587 = scalar_lea.vmem [#allocation3], %s1586
  %v1588 = vld [vmem:[%s1587] sm:$0xff]
  %v1589 = vld [vmem:[%s1587 + $0x8] sm:$0xff]
  %v1590 = vld [vmem:[%s1587 + $0x10] sm:$0xff]
  %1591 = vmatprep.subr.mxu0 %v341
  %1592 = vmatpush1.msra.mxu0 %v340
  %1593 = vmatprep.subr.mxu0 %v344
  %1594 = vmatpush1.msra.mxu0 %v343
  %1595 = vmatprep.subr.mxu0 %v347
  %1596 = vmatpush1.msra.mxu0 %v346
  %1597 = vmatprep.subr.mxu0 %v350
  %1598 = vmatpush1.msra.mxu0 %v349
  %1599 = vmatprep.subr.mxu0 %v353
  %1600 = vmatpush1.msra.mxu0 %v352
  %1601 = vmatprep.subr.mxu0 %v356
  %1602 = vmatpush1.msra.mxu0 %v355
  %1603 = vmatprep.subr.mxu0 %v359
  %1604 = vmatpush1.msra.mxu0 %v358
  %1605 = vmatprep.subr.mxu0 %v362
  %1606 = vmatpush1.msra.mxu0 %v361
  %1607 = vmatprep.subr.mxu0 %v365
  %1608 = vmatpush1.msra.mxu0 %v364
  %1609 = vmatprep.subr.mxu0 %v368
  %1610 = vmatpush1.msra.mxu0 %v367
  %1611 = vmatprep.subr.mxu0 %v371
  %1612 = vmatpush1.msra.mxu0 %v370
  %1613 = vmatprep.subr.mxu0 %v374
  %1614 = vmatpush1.msra.mxu0 %v373
  %1615 = vmatprep.subr.mxu0 %v377
  %1616 = vmatpush1.msra.mxu0 %v376
  %1617 = vmatprep.subr.mxu0 %v380
  %1618 = vmatpush1.msra.mxu0 %v379
  %1619 = vmatprep.subr.mxu0 %v383
  %1620 = vmatpush1.msra.mxu0 %v382
  %1621 = vmatprep.subr.mxu0 %v386
  %1622 = vmatpush1.msra.mxu0 %v385
  %1623 = vmatprep.subr.mxu0 0.0
  %1624 = vmatpush1.msra.mxu0 0.0
  %1625 = vmatprep.subr.mxu0 0.0
  %1626 = vmatpush1.msra.mxu0 0.0
  %1627 = vmatprep.subr.mxu0 0.0
  %1628 = vmatpush1.msra.mxu0 0.0
  %1629 = vmatprep.subr.mxu0 0.0
  %1630 = vmatpush1.msra.mxu0 0.0
  %1631 = vmatprep.subr.mxu0 0.0
  %1632 = vmatpush1.msra.mxu0 0.0
  %1633 = vmatprep.subr.mxu0 0.0
  %1634 = vmatpush1.msra.mxu0 0.0
  %1635 = vmatprep.subr.mxu0 0.0
  %1636 = vmatpush1.msra.mxu0 0.0
  %1637 = vmatprep.subr.mxu0 0.0
  %1638 = vmatpush1.msra.mxu0 0.0
  %1639 = vmatprep.subr.mxu0 0.0
  %1640 = vmatpush1.msra.mxu0 0.0
  %1641 = vmatprep.subr.mxu0 0.0
  %1642 = vmatpush1.msra.mxu0 0.0
  %1643 = vmatprep.subr.mxu0 0.0
  %1644 = vmatpush1.msra.mxu0 0.0
  %1645 = vmatprep.subr.mxu0 0.0
  %1646 = vmatpush1.msra.mxu0 0.0
  %1647 = vmatprep.subr.mxu0 0.0
  %1648 = vmatpush1.msra.mxu0 0.0
  %1649 = vmatprep.subr.mxu0 0.0
  %1650 = vmatpush1.msra.mxu0 0.0
  %1651 = vmatprep.subr.mxu0 0.0
  %1652 = vmatpush1.msra.mxu0 0.0
  %1653 = vmatprep.subr.mxu0 0.0
  %1654 = vmatpush1.msra.mxu0 0.0
  %1655 = vmatprep.mubr.f32.mxu0 0.0
  %1656 = vmatmul.mubr.f32.gmra.mrb[0].mxu0 %v1582
  %v1657 = vpop.f32.mrb[0].mxu0
  %v1658 = vadd.f32 0.0, %v1657
  %v1659 = vpop.f32.mrb[0].mxu0
  %v1660 = vadd.f32 0.0, %v1659
  %1661 = vdwg.mxu0
  %1662 = vmatprep.subr.mxu0 0.0
  %1663 = vmatpush1.msra.mxu0 %v342
  %1664 = vmatprep.subr.mxu0 0.0
  %1665 = vmatpush1.msra.mxu0 %v345
  %1666 = vmatprep.subr.mxu0 0.0
  %1667 = vmatpush1.msra.mxu0 %v348
  %1668 = vmatprep.subr.mxu0 0.0
  %1669 = vmatpush1.msra.mxu0 %v351
  %1670 = vmatprep.subr.mxu0 0.0
  %1671 = vmatpush1.msra.mxu0 %v354
  %1672 = vmatprep.subr.mxu0 0.0
  %1673 = vmatpush1.msra.mxu0 %v357
  %1674 = vmatprep.subr.mxu0 0.0
  %1675 = vmatpush1.msra.mxu0 %v360
  %1676 = vmatprep.subr.mxu0 0.0
  %1677 = vmatpush1.msra.mxu0 %v363
  %1678 = vmatprep.subr.mxu0 0.0
  %1679 = vmatpush1.msra.mxu0 %v366
  %1680 = vmatprep.subr.mxu0 0.0
  %1681 = vmatpush1.msra.mxu0 %v369
  %1682 = vmatprep.subr.mxu0 0.0
  %1683 = vmatpush1.msra.mxu0 %v372
  %1684 = vmatprep.subr.mxu0 0.0
  %1685 = vmatpush1.msra.mxu0 %v375
  %1686 = vmatprep.subr.mxu0 0.0
  %1687 = vmatpush1.msra.mxu0 %v378
  %1688 = vmatprep.subr.mxu0 0.0
  %1689 = vmatpush1.msra.mxu0 %v381
  %1690 = vmatprep.subr.mxu0 0.0
  %1691 = vmatpush1.msra.mxu0 %v384
  %1692 = vmatprep.subr.mxu0 0.0
  %1693 = vmatpush1.msra.mxu0 %v387
  %1694 = vmatprep.subr.mxu0 0.0
  %1695 = vmatpush1.msra.mxu0 0.0
  %1696 = vmatprep.subr.mxu0 0.0
  %1697 = vmatpush1.msra.mxu0 0.0
  %1698 = vmatprep.subr.mxu0 0.0
  %1699 = vmatpush1.msra.mxu0 0.0
  %1700 = vmatprep.subr.mxu0 0.0
  %1701 = vmatpush1.msra.mxu0 0.0
  %1702 = vmatprep.subr.mxu0 0.0
  %1703 = vmatpush1.msra.mxu0 0.0
  %1704 = vmatprep.subr.mxu0 0.0
  %1705 = vmatpush1.msra.mxu0 0.0
  %1706 = vmatprep.subr.mxu0 0.0
  %1707 = vmatpush1.msra.mxu0 0.0
  %1708 = vmatprep.subr.mxu0 0.0
  %1709 = vmatpush1.msra.mxu0 0.0
  %1710 = vmatprep.subr.mxu0 0.0
  %1711 = vmatpush1.msra.mxu0 0.0
  %1712 = vmatprep.subr.mxu0 0.0
  %1713 = vmatpush1.msra.mxu0 0.0
  %1714 = vmatprep.subr.mxu0 0.0
  %1715 = vmatpush1.msra.mxu0 0.0
  %1716 = vmatprep.subr.mxu0 0.0
  %1717 = vmatpush1.msra.mxu0 0.0
  %1718 = vmatprep.subr.mxu0 0.0
  %1719 = vmatpush1.msra.mxu0 0.0
  %1720 = vmatprep.subr.mxu0 0.0
  %1721 = vmatpush1.msra.mxu0 0.0
  %1722 = vmatprep.subr.mxu0 0.0
  %1723 = vmatpush1.msra.mxu0 0.0
  %1724 = vmatprep.subr.mxu0 0.0
  %1725 = vmatpush1.msra.mxu0 0.0
  %1726 = vmatprep.mubr.f32.mxu0 0.0
  %1727 = vmatmul.mubr.f32.gmra.mrb[0].mxu0 %v1582
  %v1728 = vpop.f32.mrb[0].mxu0
  %v1729 = vadd.f32 0.0, %v1728
  %v1730 = vpop.f32.mrb[0].mxu0
  %1731 = vdwg.mxu0
  %v1732 = vadd.f32 %v1588, %v1658
  %v1733 = vxor.u32 %v1732, 2147483648
  %v1734 = vmul.f32 %v1733, 1.442695
  %v1735 = vpow.pop %v1734
  %v1736 = vadd.f32 %v1735, 1.0
  %v1737 = vrcp.pop %v1736
  %v1738 = vmul.f32 1.0, %v1737
  %v1739 = vadd.f32 %v1589, %v1660
  %v1740 = vxor.u32 %v1739, 2147483648
  %v1741 = vmul.f32 %v1740, 1.442695
  %v1742 = vpow.pop %v1741
  %v1743 = vadd.f32 %v1742, 1.0
  %v1744 = vrcp.pop %v1743
  %v1745 = vmul.f32 1.0, %v1744
  %v1746 = vadd.f32 %v1729, %v555
  %v1747 = vmul.f32 %v1738, %v1746
  %v1748 = vadd.f32 %v1590, %v1747
  %v1749 = vtanh.pop %v1748
  %v1750 = vsub.f32 %v1582, %v1749
  %v1751 = vmul.f32 %v1745, %v1750
  %v1752 = vadd.f32 %v1749, %v1751
  %s1753 = scalar_lea.vmem %s5, 56
  %1754 = vst [vmem:[%s1753] sm:$0xff] %v1752
  %1755 = vst [vmem:[#allocation2] sm:$0xff] %v1752
  // Predicated region
  $region26: #{gru_forward.2} parent=0 // pred_check
    _
  $region27: #{gru_forward.2} parent=0 // pred_check_branch
    %1757 = sbr.rel (0) target = $region29
  $region28: #{gru_forward.2} parent=0 // pred_region
    _
  $region29: #{gru_forward.2} parent=0 // pred_fallthru
    _
  // Predicated region
  $region30: #{gru_forward.2} parent=0 // pred_check
    _
  $region31: #{gru_forward.2} parent=0 // pred_check_branch
    %1759 = sbr.rel (0) target = $region33
  $region32: #{gru_forward.2} parent=0 // pred_region
    _
  $region33: #{gru_forward.2} parent=0 // pred_fallthru
    _

// kernel: gru_forward.3
$region0: #{gru_forward.3}
  #allocation0 [shape = 'u32[]', space=smem, size = 0x4, offset = 0x4, fixed_abs, tag = 'smem constant byte address 0x4 - core index']
  #allocation1 [shape = 'u32[144,128]{1,0:T(1,128)}', space=vmem, size = 0x12000, scoped, tag = 'internal scratch']
  #allocation2 [shape = 'f32[8,128]{1,0:T(8,128)}', space=vmem, size = 0x1000, scoped, tag = 'scratch operand']
  #allocation3 [shape = 'f32[64,384]{1,0:T(8,128)}', space=vmem, size = 0x18000, scoped, tag = 'scratch operand']
  %s0 = inlined_call_operand.vmem [shape: f32[64,128], index: 0, kind: input, shape index: {}]
  %s1 = inlined_call_operand.vmem [shape: f32[128,384], index: 1, kind: input, shape index: {}]
  %s2 = inlined_call_operand.vmem [shape: f32[128,384], index: 2, kind: input, shape index: {}]
  %s3 = inlined_call_operand.vmem [shape: f32[1,384], index: 3, kind: input, shape index: {}]
  %s4 = inlined_call_operand.vmem [shape: f32[1,128], index: 4, kind: input, shape index: {}]
  %s5 = inlined_call_operand.vmem [shape: f32[128,128], index: 5, kind: input, shape index: {}]
  %s6 = inlined_call_operand.vmem [shape: f32[1,128], index: 6, kind: input, shape index: {}]
  %s7 = inlined_call_operand.vmem [shape: f32[8,128], index: 7, kind: output, shape index: {}]
  %s8 = sld [smem:[#allocation0]]
  $region46: #{gru_forward.3} parent=0
    _
  %s10 = ssub.s32 1, %s8
  %s11 = scalar_select 0, %s10, %s8
  // Predicated region
  $region2: #{gru_forward.3} parent=0 // pred_check
    _
  $region3: #{gru_forward.3} parent=0 // pred_check_branch
    %13 = sbr.rel (0) target = $region5
  $region4: #{gru_forward.3} parent=0 // pred_region
    _
  $region5: #{gru_forward.3} parent=0 // pred_fallthru
    _
  // Predicated region
  $region6: #{gru_forward.3} parent=0 // pred_check
    _
  $region7: #{gru_forward.3} parent=0 // pred_check_branch
    %15 = sbr.rel (0) target = $region9
  $region8: #{gru_forward.3} parent=0 // pred_region
    _
  $region9: #{gru_forward.3} parent=0 // pred_fallthru
    _
  // Predicated region
  $region10: #{gru_forward.3} parent=0 // pred_check
    _
  $region11: #{gru_forward.3} parent=0 // pred_check_branch
    %17 = sbr.rel (0) target = $region13
  $region12: #{gru_forward.3} parent=0 // pred_region
    _
  $region13: #{gru_forward.3} parent=0 // pred_fallthru
    _
  // Predicated region
  $region14: #{gru_forward.3} parent=0 // pred_check
    _
  $region15: #{gru_forward.3} parent=0 // pred_check_branch
    %19 = sbr.rel (0) target = $region17
  $region16: #{gru_forward.3} parent=0 // pred_region
    _
  $region17: #{gru_forward.3} parent=0 // pred_fallthru
    _
  // Predicated region
  $region18: #{gru_forward.3} parent=0 // pred_check
    _
  $region19: #{gru_forward.3} parent=0 // pred_check_branch
    %21 = sbr.rel (0) target = $region21
  $region20: #{gru_forward.3} parent=0 // pred_region
    _
  $region21: #{gru_forward.3} parent=0 // pred_fallthru
    _
  // Predicated region
  $region22: #{gru_forward.3} parent=0 // pred_check
    _
  $region23: #{gru_forward.3} parent=0 // pred_check_branch
    %23 = sbr.rel (0) target = $region25
  $region24: #{gru_forward.3} parent=0 // pred_region
    _
  $region25: #{gru_forward.3} parent=0 // pred_fallthru
    _
  // Predicated region
  $region26: #{gru_forward.3} parent=0 // pred_check
    _
  $region27: #{gru_forward.3} parent=0 // pred_check_branch
    %25 = sbr.rel (0) target = $region29
  $region28: #{gru_forward.3} parent=0 // pred_region
    _
  $region29: #{gru_forward.3} parent=0 // pred_fallthru
    _
  %p26 = scmp.eq.s32.totalorder 0, 0
  // Predicated region
  $region30: #{gru_forward.3} parent=0 // pred_check
    %p27 = pneg %p26
  $region31: #{gru_forward.3} parent=0 // pred_check_branch
    %29 = sbr.rel (%p27) target = $region33
  $region32: #{gru_forward.3} parent=0 // pred_region
    %30 = vst [vmem:[#allocation2] sm:$0xff] 0.0
  $region33: #{gru_forward.3} parent=0 // pred_fallthru
    _
  %v31 = vld [vmem:[%s0] sm:$0xff]
  %v32 = vld [vmem:[%s0 + $0x8] sm:$0xff]
  %v33 = vld [vmem:[%s0 + $0x10] sm:$0xff]
  %v34 = vld [vmem:[%s0 + $0x18] sm:$0xff]
  %v35 = vld [vmem:[%s0 + $0x20] sm:$0xff]
  %v36 = vld [vmem:[%s0 + $0x28] sm:$0xff]
  %v37 = vld [vmem:[%s0 + $0x30] sm:$0xff]
  %v38 = vld [vmem:[%s0 + $0x38] sm:$0xff]
  %v39 = vld [vmem:[%s1] sm:$0xff]
  %v40 = vld [vmem:[%s1 + $0x8] sm:$0xff]
  %v41 = vld [vmem:[%s1 + $0x10] sm:$0xff]
  %v42 = vld [vmem:[%s1 + $0x18] sm:$0xff]
  %v43 = vld [vmem:[%s1 + $0x20] sm:$0xff]
  %v44 = vld [vmem:[%s1 + $0x28] sm:$0xff]
  %v45 = vld [vmem:[%s1 + $0x30] sm:$0xff]
  %v46 = vld [vmem:[%s1 + $0x38] sm:$0xff]
  %v47 = vld [vmem:[%s1 + $0x40] sm:$0xff]
  %v48 = vld [vmem:[%s1 + $0x48] sm:$0xff]
  %v49 = vld [vmem:[%s1 + $0x50] sm:$0xff]
  %v50 = vld [vmem:[%s1 + $0x58] sm:$0xff]
  %v51 = vld [vmem:[%s1 + $0x60] sm:$0xff]
  %v52 = vld [vmem:[%s1 + $0x68] sm:$0xff]
  %v53 = vld [vmem:[%s1 + $0x70] sm:$0xff]
  %v54 = vld [vmem:[%s1 + $0x78] sm:$0xff]
  %v55 = vld [vmem:[%s1 + $0x80] sm:$0xff]
  %v56 = vld [vmem:[%s1 + $0x88] sm:$0xff]
  %v57 = vld [vmem:[%s1 + $0x90] sm:$0xff]
  %v58 = vld [vmem:[%s1 + $0x98] sm:$0xff]
  %v59 = vld [vmem:[%s1 + $0xa0] sm:$0xff]
  %v60 = vld [vmem:[%s1 + $0xa8] sm:$0xff]
  %v61 = vld [vmem:[%s1 + $0xb0] sm:$0xff]
  %v62 = vld [vmem:[%s1 + $0xb8] sm:$0xff]
  %v63 = vld [vmem:[%s1 + $0xc0] sm:$0xff]
  %v64 = vld [vmem:[%s1 + $0xc8] sm:$0xff]
  %v65 = vld [vmem:[%s1 + $0xd0] sm:$0xff]
  %v66 = vld [vmem:[%s1 + $0xd8] sm:$0xff]
  %v67 = vld [vmem:[%s1 + $0xe0] sm:$0xff]
  %v68 = vld [vmem:[%s1 + $0xe8] sm:$0xff]
  %v69 = vld [vmem:[%s1 + $0xf0] sm:$0xff]
  %v70 = vld [vmem:[%s1 + $0xf8] sm:$0xff]
  %v71 = vld [vmem:[%s1 + $0x100] sm:$0xff]
  %v72 = vld [vmem:[%s1 + $0x108] sm:$0xff]
  %v73 = vld [vmem:[%s1 + $0x110] sm:$0xff]
  %v74 = vld [vmem:[%s1 + $0x118] sm:$0xff]
  %v75 = vld [vmem:[%s1 + $0x120] sm:$0xff]
  %v76 = vld [vmem:[%s1 + $0x128] sm:$0xff]
  %v77 = vld [vmem:[%s1 + $0x130] sm:$0xff]
  %v78 = vld [vmem:[%s1 + $0x138] sm:$0xff]
  %v79 = vld [vmem:[%s1 + $0x140] sm:$0xff]
  %v80 = vld [vmem:[%s1 + $0x148] sm:$0xff]
  %v81 = vld [vmem:[%s1 + $0x150] sm:$0xff]
  %v82 = vld [vmem:[%s1 + $0x158] sm:$0xff]
  %v83 = vld [vmem:[%s1 + $0x160] sm:$0xff]
  %v84 = vld [vmem:[%s1 + $0x168] sm:$0xff]
  %v85 = vld [vmem:[%s1 + $0x170] sm:$0xff]
  %v86 = vld [vmem:[%s1 + $0x178] sm:$0xff]
  %v87 = vld [vmem:[%s3] sm:$0x7]
  %v89 = vlaneseq
  %v90 = vshrl.u32 %v89, 7
  %v91 = vsub.s32 0, %v90
  %v92 = vrot.slane %v87, %v91
  %v93 = vlaneseq
  %v94 = vshrl.u32 %v93, 7
  %v95 = vsub.s32 1, %v94
  %v96 = vrot.slane %v87, %v95
  %v97 = vlaneseq
  %v98 = vshrl.u32 %v97, 7
  %v99 = vsub.s32 2, %v98
  %v100 = vrot.slane %v87, %v99
  %104 = vmatprep.subr.mxu0 %v40
  %105 = vmatpush1.msra.mxu0 %v39
  %106 = vmatprep.subr.mxu0 %v43
  %107 = vmatpush1.msra.mxu0 %v42
  %108 = vmatprep.subr.mxu0 %v46
  %109 = vmatpush1.msra.mxu0 %v45
  %110 = vmatprep.subr.mxu0 %v49
  %111 = vmatpush1.msra.mxu0 %v48
  %112 = vmatprep.subr.mxu0 %v52
  %113 = vmatpush1.msra.mxu0 %v51
  %114 = vmatprep.subr.mxu0 %v55
  %115 = vmatpush1.msra.mxu0 %v54
  %116 = vmatprep.subr.mxu0 %v58
  %117 = vmatpush1.msra.mxu0 %v57
  %118 = vmatprep.subr.mxu0 %v61
  %119 = vmatpush1.msra.mxu0 %v60
  %120 = vmatprep.subr.mxu0 %v64
  %121 = vmatpush1.msra.mxu0 %v63
  %122 = vmatprep.subr.mxu0 %v67
  %123 = vmatpush1.msra.mxu0 %v66
  %124 = vmatprep.subr.mxu0 %v70
  %125 = vmatpush1.msra.mxu0 %v69
  %126 = vmatprep.subr.mxu0 %v73
  %127 = vmatpush1.msra.mxu0 %v72
  %128 = vmatprep.subr.mxu0 %v76
  %129 = vmatpush1.msra.mxu0 %v75
  %130 = vmatprep.subr.mxu0 %v79
  %131 = vmatpush1.msra.mxu0 %v78
  %132 = vmatprep.subr.mxu0 %v82
  %133 = vmatpush1.msra.mxu0 %v81
  %134 = vmatprep.subr.mxu0 %v85
  %135 = vmatpush1.msra.mxu0 %v84
  %136 = vmatprep.subr.mxu0 0.0
  %137 = vmatpush1.msra.mxu0 0.0
  %138 = vmatprep.subr.mxu0 0.0
  %139 = vmatpush1.msra.mxu0 0.0
  %140 = vmatprep.subr.mxu0 0.0
  %141 = vmatpush1.msra.mxu0 0.0
  %142 = vmatprep.subr.mxu0 0.0
  %143 = vmatpush1.msra.mxu0 0.0
  %144 = vmatprep.subr.mxu0 0.0
  %145 = vmatpush1.msra.mxu0 0.0
  %146 = vmatprep.subr.mxu0 0.0
  %147 = vmatpush1.msra.mxu0 0.0
  %148 = vmatprep.subr.mxu0 0.0
  %149 = vmatpush1.msra.mxu0 0.0
  %150 = vmatprep.subr.mxu0 0.0
  %151 = vmatpush1.msra.mxu0 0.0
  %152 = vmatprep.subr.mxu0 0.0
  %153 = vmatpush1.msra.mxu0 0.0
  %154 = vmatprep.subr.mxu0 0.0
  %155 = vmatpush1.msra.mxu0 0.0
  %156 = vmatprep.subr.mxu0 0.0
  %157 = vmatpush1.msra.mxu0 0.0
  %158 = vmatprep.subr.mxu0 0.0
  %159 = vmatpush1.msra.mxu0 0.0
  %160 = vmatprep.subr.mxu0 0.0
  %161 = vmatpush1.msra.mxu0 0.0
  %162 = vmatprep.subr.mxu0 0.0
  %163 = vmatpush1.msra.mxu0 0.0
  %164 = vmatprep.subr.mxu0 0.0
  %165 = vmatpush1.msra.mxu0 0.0
  %166 = vmatprep.subr.mxu0 0.0
  %167 = vmatpush1.msra.mxu0 0.0
  %168 = vmatprep.mubr.f32.mxu0 0.0
  %169 = vmatmul.mubr.f32.gmra.mrb[0].mxu0 %v31
  %v170 = vpop.f32.mrb[0].mxu0
  %v171 = vadd.f32 %v92, %v170
  %v172 = vpop.f32.mrb[0].mxu0
  %v173 = vadd.f32 %v96, %v172
  %174 = vmatprep.mubr.f32.mxu0 0.0
  %175 = vmatmul.mubr.f32.gmra.mrb[0].mxu0 %v32
  %v176 = vpop.f32.mrb[0].mxu0
  %v177 = vadd.f32 %v92, %v176
  %v178 = vpop.f32.mrb[0].mxu0
  %v179 = vadd.f32 %v96, %v178
  %180 = vmatprep.mubr.f32.mxu0 0.0
  %181 = vmatmul.mubr.f32.gmra.mrb[0].mxu0 %v33
  %v182 = vpop.f32.mrb[0].mxu0
  %v183 = vadd.f32 %v92, %v182
  %v184 = vpop.f32.mrb[0].mxu0
  %v185 = vadd.f32 %v96, %v184
  %186 = vmatprep.mubr.f32.mxu0 0.0
  %187 = vmatmul.mubr.f32.gmra.mrb[0].mxu0 %v34
  %v188 = vpop.f32.mrb[0].mxu0
  %v189 = vadd.f32 %v92, %v188
  %v190 = vpop.f32.mrb[0].mxu0
  %v191 = vadd.f32 %v96, %v190
  %192 = vmatprep.mubr.f32.mxu0 0.0
  %193 = vmatmul.mubr.f32.gmra.mrb[0].mxu0 %v35
  %v194 = vpop.f32.mrb[0].mxu0
  %v195 = vadd.f32 %v92, %v194
  %v196 = vpop.f32.mrb[0].mxu0
  %v197 = vadd.f32 %v96, %v196
  %198 = vmatprep.mubr.f32.mxu0 0.0
  %199 = vmatmul.mubr.f32.gmra.mrb[0].mxu0 %v36
  %v200 = vpop.f32.mrb[0].mxu0
  %v201 = vadd.f32 %v92, %v200
  %v202 = vpop.f32.mrb[0].mxu0
  %v203 = vadd.f32 %v96, %v202
  %204 = vmatprep.mubr.f32.mxu0 0.0
  %205 = vmatmul.mubr.f32.gmra.mrb[0].mxu0 %v37
  %v206 = vpop.f32.mrb[0].mxu0
  %v207 = vadd.f32 %v92, %v206
  %v208 = vpop.f32.mrb[0].mxu0
  %v209 = vadd.f32 %v96, %v208
  %210 = vmatprep.mubr.f32.mxu0 0.0
  %211 = vmatmul.mubr.f32.gmra.mrb[0].mxu0 %v38
  %v212 = vpop.f32.mrb[0].mxu0
  %v213 = vadd.f32 %v92, %v212
  %v214 = vpop.f32.mrb[0].mxu0
  %v215 = vadd.f32 %v96, %v214
  %216 = vdwg.mxu0
  %217 = vmatprep.subr.mxu0 0.0
  %218 = vmatpush1.msra.mxu0 %v41
  %219 = vmatprep.subr.mxu0 0.0
  %220 = vmatpush1.msra.mxu0 %v44
  %221 = vmatprep.subr.mxu0 0.0
  %222 = vmatpush1.msra.mxu0 %v47
  %223 = vmatprep.subr.mxu0 0.0
  %224 = vmatpush1.msra.mxu0 %v50
  %225 = vmatprep.subr.mxu0 0.0
  %226 = vmatpush1.msra.mxu0 %v53
  %227 = vmatprep.subr.mxu0 0.0
  %228 = vmatpush1.msra.mxu0 %v56
  %229 = vmatprep.subr.mxu0 0.0
  %230 = vmatpush1.msra.mxu0 %v59
  %231 = vmatprep.subr.mxu0 0.0
  %232 = vmatpush1.msra.mxu0 %v62
  %233 = vmatprep.subr.mxu0 0.0
  %234 = vmatpush1.msra.mxu0 %v65
  %235 = vmatprep.subr.mxu0 0.0
  %236 = vmatpush1.msra.mxu0 %v68
  %237 = vmatprep.subr.mxu0 0.0
  %238 = vmatpush1.msra.mxu0 %v71
  %239 = vmatprep.subr.mxu0 0.0
  %240 = vmatpush1.msra.mxu0 %v74
  %241 = vmatprep.subr.mxu0 0.0
  %242 = vmatpush1.msra.mxu0 %v77
  %243 = vmatprep.subr.mxu0 0.0
  %244 = vmatpush1.msra.mxu0 %v80
  %245 = vmatprep.subr.mxu0 0.0
  %246 = vmatpush1.msra.mxu0 %v83
  %247 = vmatprep.subr.mxu0 0.0
  %248 = vmatpush1.msra.mxu0 %v86
  %249 = vmatprep.subr.mxu0 0.0
  %250 = vmatpush1.msra.mxu0 0.0
  %251 = vmatprep.subr.mxu0 0.0
  %252 = vmatpush1.msra.mxu0 0.0
  %253 = vmatprep.subr.mxu0 0.0
  %254 = vmatpush1.msra.mxu0 0.0
  %255 = vmatprep.subr.mxu0 0.0
  %256 = vmatpush1.msra.mxu0 0.0
  %257 = vmatprep.subr.mxu0 0.0
  %258 = vmatpush1.msra.mxu0 0.0
  %259 = vmatprep.subr.mxu0 0.0
  %260 = vmatpush1.msra.mxu0 0.0
  %261 = vmatprep.subr.mxu0 0.0
  %262 = vmatpush1.msra.mxu0 0.0
  %263 = vmatprep.subr.mxu0 0.0
  %264 = vmatpush1.msra.mxu0 0.0
  %265 = vmatprep.subr.mxu0 0.0
  %266 = vmatpush1.msra.mxu0 0.0
  %267 = vmatprep.subr.mxu0 0.0
  %268 = vmatpush1.msra.mxu0 0.0
  %269 = vmatprep.subr.mxu0 0.0
  %270 = vmatpush1.msra.mxu0 0.0
  %271 = vmatprep.subr.mxu0 0.0
  %272 = vmatpush1.msra.mxu0 0.0
  %273 = vmatprep.subr.mxu0 0.0
  %274 = vmatpush1.msra.mxu0 0.0
  %275 = vmatprep.subr.mxu0 0.0
  %276 = vmatpush1.msra.mxu0 0.0
  %277 = vmatprep.subr.mxu0 0.0
  %278 = vmatpush1.msra.mxu0 0.0
  %279 = vmatprep.subr.mxu0 0.0
  %280 = vmatpush1.msra.mxu0 0.0
  %281 = vmatprep.mubr.f32.mxu0 0.0
  %282 = vmatmul.mubr.f32.gmra.mrb[0].mxu0 %v31
  %v283 = vpop.f32.mrb[0].mxu0
  %v284 = vadd.f32 %v100, %v283
  %v285 = vpop.f32.mrb[0].mxu0
  %286 = vmatprep.mubr.f32.mxu0 0.0
  %287 = vmatmul.mubr.f32.gmra.mrb[0].mxu0 %v32
  %v288 = vpop.f32.mrb[0].mxu0
  %v289 = vadd.f32 %v100, %v288
  %v290 = vpop.f32.mrb[0].mxu0
  %291 = vmatprep.mubr.f32.mxu0 0.0
  %292 = vmatmul.mubr.f32.gmra.mrb[0].mxu0 %v33
  %v293 = vpop.f32.mrb[0].mxu0
  %v294 = vadd.f32 %v100, %v293
  %v295 = vpop.f32.mrb[0].mxu0
  %296 = vmatprep.mubr.f32.mxu0 0.0
  %297 = vmatmul.mubr.f32.gmra.mrb[0].mxu0 %v34
  %v298 = vpop.f32.mrb[0].mxu0
  %v299 = vadd.f32 %v100, %v298
  %v300 = vpop.f32.mrb[0].mxu0
  %301 = vmatprep.mubr.f32.mxu0 0.0
  %302 = vmatmul.mubr.f32.gmra.mrb[0].mxu0 %v35
  %v303 = vpop.f32.mrb[0].mxu0
  %v304 = vadd.f32 %v100, %v303
  %v305 = vpop.f32.mrb[0].mxu0
  %306 = vmatprep.mubr.f32.mxu0 0.0
  %307 = vmatmul.mubr.f32.gmra.mrb[0].mxu0 %v36
  %v308 = vpop.f32.mrb[0].mxu0
  %v309 = vadd.f32 %v100, %v308
  %v310 = vpop.f32.mrb[0].mxu0
  %311 = vmatprep.mubr.f32.mxu0 0.0
  %312 = vmatmul.mubr.f32.gmra.mrb[0].mxu0 %v37
  %v313 = vpop.f32.mrb[0].mxu0
  %v314 = vadd.f32 %v100, %v313
  %v315 = vpop.f32.mrb[0].mxu0
  %316 = vmatprep.mubr.f32.mxu0 0.0
  %317 = vmatmul.mubr.f32.gmra.mrb[0].mxu0 %v38
  %v318 = vpop.f32.mrb[0].mxu0
  %v319 = vadd.f32 %v100, %v318
  %v320 = vpop.f32.mrb[0].mxu0
  %321 = vdwg.mxu0
  %322 = vst [vmem:[#allocation3] sm:$0xff] %v171
  %323 = vst [vmem:[#allocation3 + $0x8] sm:$0xff] %v173
  %324 = vst [vmem:[#allocation3 + $0x10] sm:$0xff] %v284
  %325 = vst [vmem:[#allocation3 + $0x18] sm:$0xff] %v177
  %326 = vst [vmem:[#allocation3 + $0x20] sm:$0xff] %v179
  %327 = vst [vmem:[#allocation3 + $0x28] sm:$0xff] %v289
  %328 = vst [vmem:[#allocation3 + $0x30] sm:$0xff] %v183
  %329 = vst [vmem:[#allocation3 + $0x38] sm:$0xff] %v185
  %330 = vst [vmem:[#allocation3 + $0x40] sm:$0xff] %v294
  %331 = vst [vmem:[#allocation3 + $0x48] sm:$0xff] %v189
  %332 = vst [vmem:[#allocation3 + $0x50] sm:$0xff] %v191
  %333 = vst [vmem:[#allocation3 + $0x58] sm:$0xff] %v299
  %334 = vst [vmem:[#allocation3 + $0x60] sm:$0xff] %v195
  %335 = vst [vmem:[#allocation3 + $0x68] sm:$0xff] %v197
  %336 = vst [vmem:[#allocation3 + $0x70] sm:$0xff] %v304
  %337 = vst [vmem:[#allocation3 + $0x78] sm:$0xff] %v201
  %338 = vst [vmem:[#allocation3 + $0x80] sm:$0xff] %v203
  %339 = vst [vmem:[#allocation3 + $0x88] sm:$0xff] %v309
  %340 = vst [vmem:[#allocation3 + $0x90] sm:$0xff] %v207
  %341 = vst [vmem:[#allocation3 + $0x98] sm:$0xff] %v209
  %342 = vst [vmem:[#allocation3 + $0xa0] sm:$0xff] %v314
  %343 = vst [vmem:[#allocation3 + $0xa8] sm:$0xff] %v213
  %344 = vst [vmem:[#allocation3 + $0xb0] sm:$0xff] %v215
  %345 = vst [vmem:[#allocation3 + $0xb8] sm:$0xff] %v319
  %v346 = vld [vmem:[%s2] sm:$0xff]
  %v347 = vld [vmem:[%s2 + $0x8] sm:$0xff]
  %v348 = vld [vmem:[%s2 + $0x10] sm:$0xff]
  %v349 = vld [vmem:[%s2 + $0x18] sm:$0xff]
  %v350 = vld [vmem:[%s2 + $0x20] sm:$0xff]
  %v351 = vld [vmem:[%s2 + $0x28] sm:$0xff]
  %v352 = vld [vmem:[%s2 + $0x30] sm:$0xff]
  %v353 = vld [vmem:[%s2 + $0x38] sm:$0xff]
  %v354 = vld [vmem:[%s2 + $0x40] sm:$0xff]
  %v355 = vld [vmem:[%s2 + $0x48] sm:$0xff]
  %v356 = vld [vmem:[%s2 + $0x50] sm:$0xff]
  %v357 = vld [vmem:[%s2 + $0x58] sm:$0xff]
  %v358 = vld [vmem:[%s2 + $0x60] sm:$0xff]
  %v359 = vld [vmem:[%s2 + $0x68] sm:$0xff]
  %v360 = vld [vmem:[%s2 + $0x70] sm:$0xff]
  %v361 = vld [vmem:[%s2 + $0x78] sm:$0xff]
  %v362 = vld [vmem:[%s2 + $0x80] sm:$0xff]
  %v363 = vld [vmem:[%s2 + $0x88] sm:$0xff]
  %v364 = vld [vmem:[%s2 + $0x90] sm:$0xff]
  %v365 = vld [vmem:[%s2 + $0x98] sm:$0xff]
  %v366 = vld [vmem:[%s2 + $0xa0] sm:$0xff]
  %v367 = vld [vmem:[%s2 + $0xa8] sm:$0xff]
  %v368 = vld [vmem:[%s2 + $0xb0] sm:$0xff]
  %v369 = vld [vmem:[%s2 + $0xb8] sm:$0xff]
  %v370 = vld [vmem:[%s2 + $0xc0] sm:$0xff]
  %v371 = vld [vmem:[%s2 + $0xc8] sm:$0xff]
  %v372 = vld [vmem:[%s2 + $0xd0] sm:$0xff]
  %v373 = vld [vmem:[%s2 + $0xd8] sm:$0xff]
  %v374 = vld [vmem:[%s2 + $0xe0] sm:$0xff]
  %v375 = vld [vmem:[%s2 + $0xe8] sm:$0xff]
  %v376 = vld [vmem:[%s2 + $0xf0] sm:$0xff]
  %v377 = vld [vmem:[%s2 + $0xf8] sm:$0xff]
  %v378 = vld [vmem:[%s2 + $0x100] sm:$0xff]
  %v379 = vld [vmem:[%s2 + $0x108] sm:$0xff]
  %v380 = vld [vmem:[%s2 + $0x110] sm:$0xff]
  %v381 = vld [vmem:[%s2 + $0x118] sm:$0xff]
  %v382 = vld [vmem:[%s2 + $0x120] sm:$0xff]
  %v383 = vld [vmem:[%s2 + $0x128] sm:$0xff]
  %v384 = vld [vmem:[%s2 + $0x130] sm:$0xff]
  %v385 = vld [vmem:[%s2 + $0x138] sm:$0xff]
  %v386 = vld [vmem:[%s2 + $0x140] sm:$0xff]
  %v387 = vld [vmem:[%s2 + $0x148] sm:$0xff]
  %v388 = vld [vmem:[%s2 + $0x150] sm:$0xff]
  %v389 = vld [vmem:[%s2 + $0x158] sm:$0xff]
  %v390 = vld [vmem:[%s2 + $0x160] sm:$0xff]
  %v391 = vld [vmem:[%s2 + $0x168] sm:$0xff]
  %v392 = vld [vmem:[%s2 + $0x170] sm:$0xff]
  %v393 = vld [vmem:[%s2 + $0x178] sm:$0xff]
  %v394 = vld [vmem:[%s4] sm:$0x1]
  %v395 = vld [vmem:[#allocation2] sm:$0xff]
  %s396 = smul.u32 0, 3
  %s397 = smul.addr %s396, 8
  %s398 = scalar_lea.vmem [#allocation3], %s397
  %v399 = vld [vmem:[%s398] sm:$0xff]
  %v400 = vld [vmem:[%s398 + $0x8] sm:$0xff]
  %v401 = vld [vmem:[%s398 + $0x10] sm:$0xff]
  %402 = vmatprep.subr.mxu0 %v347
  %403 = vmatpush1.msra.mxu0 %v346
  %404 = vmatprep.subr.mxu0 %v350
  %405 = vmatpush1.msra.mxu0 %v349
  %406 = vmatprep.subr.mxu0 %v353
  %407 = vmatpush1.msra.mxu0 %v352
  %408 = vmatprep.subr.mxu0 %v356
  %409 = vmatpush1.msra.mxu0 %v355
  %410 = vmatprep.subr.mxu0 %v359
  %411 = vmatpush1.msra.mxu0 %v358
  %412 = vmatprep.subr.mxu0 %v362
  %413 = vmatpush1.msra.mxu0 %v361
  %414 = vmatprep.subr.mxu0 %v365
  %415 = vmatpush1.msra.mxu0 %v364
  %416 = vmatprep.subr.mxu0 %v368
  %417 = vmatpush1.msra.mxu0 %v367
  %418 = vmatprep.subr.mxu0 %v371
  %419 = vmatpush1.msra.mxu0 %v370
  %420 = vmatprep.subr.mxu0 %v374
  %421 = vmatpush1.msra.mxu0 %v373
  %422 = vmatprep.subr.mxu0 %v377
  %423 = vmatpush1.msra.mxu0 %v376
  %424 = vmatprep.subr.mxu0 %v380
  %425 = vmatpush1.msra.mxu0 %v379
  %426 = vmatprep.subr.mxu0 %v383
  %427 = vmatpush1.msra.mxu0 %v382
  %428 = vmatprep.subr.mxu0 %v386
  %429 = vmatpush1.msra.mxu0 %v385
  %430 = vmatprep.subr.mxu0 %v389
  %431 = vmatpush1.msra.mxu0 %v388
  %432 = vmatprep.subr.mxu0 %v392
  %433 = vmatpush1.msra.mxu0 %v391
  %434 = vmatprep.subr.mxu0 0.0
  %435 = vmatpush1.msra.mxu0 0.0
  %436 = vmatprep.subr.mxu0 0.0
  %437 = vmatpush1.msra.mxu0 0.0
  %438 = vmatprep.subr.mxu0 0.0
  %439 = vmatpush1.msra.mxu0 0.0
  %440 = vmatprep.subr.mxu0 0.0
  %441 = vmatpush1.msra.mxu0 0.0
  %442 = vmatprep.subr.mxu0 0.0
  %443 = vmatpush1.msra.mxu0 0.0
  %444 = vmatprep.subr.mxu0 0.0
  %445 = vmatpush1.msra.mxu0 0.0
  %446 = vmatprep.subr.mxu0 0.0
  %447 = vmatpush1.msra.mxu0 0.0
  %448 = vmatprep.subr.mxu0 0.0
  %449 = vmatpush1.msra.mxu0 0.0
  %450 = vmatprep.subr.mxu0 0.0
  %451 = vmatpush1.msra.mxu0 0.0
  %452 = vmatprep.subr.mxu0 0.0
  %453 = vmatpush1.msra.mxu0 0.0
  %454 = vmatprep.subr.mxu0 0.0
  %455 = vmatpush1.msra.mxu0 0.0
  %456 = vmatprep.subr.mxu0 0.0
  %457 = vmatpush1.msra.mxu0 0.0
  %458 = vmatprep.subr.mxu0 0.0
  %459 = vmatpush1.msra.mxu0 0.0
  %460 = vmatprep.subr.mxu0 0.0
  %461 = vmatpush1.msra.mxu0 0.0
  %462 = vmatprep.subr.mxu0 0.0
  %463 = vmatpush1.msra.mxu0 0.0
  %464 = vmatprep.subr.mxu0 0.0
  %465 = vmatpush1.msra.mxu0 0.0
  %466 = vmatprep.mubr.f32.mxu0 0.0
  %467 = vmatmul.mubr.f32.gmra.mrb[0].mxu0 %v395
  %v468 = vpop.f32.mrb[0].mxu0
  %v469 = vadd.f32 0.0, %v468
  %v470 = vpop.f32.mrb[0].mxu0
  %v471 = vadd.f32 0.0, %v470
  %472 = vdwg.mxu0
  %473 = vmatprep.subr.mxu0 0.0
  %474 = vmatpush1.msra.mxu0 %v348
  %475 = vmatprep.subr.mxu0 0.0
  %476 = vmatpush1.msra.mxu0 %v351
  %477 = vmatprep.subr.mxu0 0.0
  %478 = vmatpush1.msra.mxu0 %v354
  %479 = vmatprep.subr.mxu0 0.0
  %480 = vmatpush1.msra.mxu0 %v357
  %481 = vmatprep.subr.mxu0 0.0
  %482 = vmatpush1.msra.mxu0 %v360
  %483 = vmatprep.subr.mxu0 0.0
  %484 = vmatpush1.msra.mxu0 %v363
  %485 = vmatprep.subr.mxu0 0.0
  %486 = vmatpush1.msra.mxu0 %v366
  %487 = vmatprep.subr.mxu0 0.0
  %488 = vmatpush1.msra.mxu0 %v369
  %489 = vmatprep.subr.mxu0 0.0
  %490 = vmatpush1.msra.mxu0 %v372
  %491 = vmatprep.subr.mxu0 0.0
  %492 = vmatpush1.msra.mxu0 %v375
  %493 = vmatprep.subr.mxu0 0.0
  %494 = vmatpush1.msra.mxu0 %v378
  %495 = vmatprep.subr.mxu0 0.0
  %496 = vmatpush1.msra.mxu0 %v381
  %497 = vmatprep.subr.mxu0 0.0
  %498 = vmatpush1.msra.mxu0 %v384
  %499 = vmatprep.subr.mxu0 0.0
  %500 = vmatpush1.msra.mxu0 %v387
  %501 = vmatprep.subr.mxu0 0.0
  %502 = vmatpush1.msra.mxu0 %v390
  %503 = vmatprep.subr.mxu0 0.0
  %504 = vmatpush1.msra.mxu0 %v393
  %505 = vmatprep.subr.mxu0 0.0
  %506 = vmatpush1.msra.mxu0 0.0
  %507 = vmatprep.subr.mxu0 0.0
  %508 = vmatpush1.msra.mxu0 0.0
  %509 = vmatprep.subr.mxu0 0.0
  %510 = vmatpush1.msra.mxu0 0.0
  %511 = vmatprep.subr.mxu0 0.0
  %512 = vmatpush1.msra.mxu0 0.0
  %513 = vmatprep.subr.mxu0 0.0
  %514 = vmatpush1.msra.mxu0 0.0
  %515 = vmatprep.subr.mxu0 0.0
  %516 = vmatpush1.msra.mxu0 0.0
  %517 = vmatprep.subr.mxu0 0.0
  %518 = vmatpush1.msra.mxu0 0.0
  %519 = vmatprep.subr.mxu0 0.0
  %520 = vmatpush1.msra.mxu0 0.0
  %521 = vmatprep.subr.mxu0 0.0
  %522 = vmatpush1.msra.mxu0 0.0
  %523 = vmatprep.subr.mxu0 0.0
  %524 = vmatpush1.msra.mxu0 0.0
  %525 = vmatprep.subr.mxu0 0.0
  %526 = vmatpush1.msra.mxu0 0.0
  %527 = vmatprep.subr.mxu0 0.0
  %528 = vmatpush1.msra.mxu0 0.0
  %529 = vmatprep.subr.mxu0 0.0
  %530 = vmatpush1.msra.mxu0 0.0
  %531 = vmatprep.subr.mxu0 0.0
  %532 = vmatpush1.msra.mxu0 0.0
  %533 = vmatprep.subr.mxu0 0.0
  %534 = vmatpush1.msra.mxu0 0.0
  %535 = vmatprep.subr.mxu0 0.0
  %536 = vmatpush1.msra.mxu0 0.0
  %537 = vmatprep.mubr.f32.mxu0 0.0
  %538 = vmatmul.mubr.f32.gmra.mrb[0].mxu0 %v395
  %v539 = vpop.f32.mrb[0].mxu0
  %v540 = vadd.f32 0.0, %v539
  %v541 = vpop.f32.mrb[0].mxu0
  %542 = vdwg.mxu0
  %v543 = vadd.f32 %v399, %v469
  %v544 = vxor.u32 %v543, 2147483648
  %v545 = vmul.f32 %v544, 1.442695
  %v546 = vpow.pop %v545
  %v547 = vadd.f32 %v546, 1.0
  %v548 = vrcp.pop %v547
  %v549 = vmul.f32 1.0, %v548
  %v550 = vadd.f32 %v400, %v471
  %v551 = vxor.u32 %v550, 2147483648
  %v552 = vmul.f32 %v551, 1.442695
  %v553 = vpow.pop %v552
  %v554 = vadd.f32 %v553, 1.0
  %v555 = vrcp.pop %v554
  %v556 = vmul.f32 1.0, %v555
  %v558 = vlaneseq
  %v559 = vshrl.u32 %v558, 7
  %v560 = vsub.s32 0, %v559
  %v561 = vrot.slane %v394, %v560
  %v563 = vadd.f32 %v540, %v561
  %v564 = vmul.f32 %v549, %v563
  %v565 = vadd.f32 %v401, %v564
  %v566 = vtanh.pop %v565
  %v567 = vsub.f32 %v395, %v566
  %v568 = vmul.f32 %v556, %v567
  %v569 = vadd.f32 %v566, %v568
  %s570 = smul.u32 1, 3
  %s571 = smul.addr %s570, 8
  %s572 = scalar_lea.vmem [#allocation3], %s571
  %v573 = vld [vmem:[%s572] sm:$0xff]
  %v574 = vld [vmem:[%s572 + $0x8] sm:$0xff]
  %v575 = vld [vmem:[%s572 + $0x10] sm:$0xff]
  %576 = vmatprep.subr.mxu0 %v347
  %577 = vmatpush1.msra.mxu0 %v346
  %578 = vmatprep.subr.mxu0 %v350
  %579 = vmatpush1.msra.mxu0 %v349
  %580 = vmatprep.subr.mxu0 %v353
  %581 = vmatpush1.msra.mxu0 %v352
  %582 = vmatprep.subr.mxu0 %v356
  %583 = vmatpush1.msra.mxu0 %v355
  %584 = vmatprep.subr.mxu0 %v359
  %585 = vmatpush1.msra.mxu0 %v358
  %586 = vmatprep.subr.mxu0 %v362
  %587 = vmatpush1.msra.mxu0 %v361
  %588 = vmatprep.subr.mxu0 %v365
  %589 = vmatpush1.msra.mxu0 %v364
  %590 = vmatprep.subr.mxu0 %v368
  %591 = vmatpush1.msra.mxu0 %v367
  %592 = vmatprep.subr.mxu0 %v371
  %593 = vmatpush1.msra.mxu0 %v370
  %594 = vmatprep.subr.mxu0 %v374
  %595 = vmatpush1.msra.mxu0 %v373
  %596 = vmatprep.subr.mxu0 %v377
  %597 = vmatpush1.msra.mxu0 %v376
  %598 = vmatprep.subr.mxu0 %v380
  %599 = vmatpush1.msra.mxu0 %v379
  %600 = vmatprep.subr.mxu0 %v383
  %601 = vmatpush1.msra.mxu0 %v382
  %602 = vmatprep.subr.mxu0 %v386
  %603 = vmatpush1.msra.mxu0 %v385
  %604 = vmatprep.subr.mxu0 %v389
  %605 = vmatpush1.msra.mxu0 %v388
  %606 = vmatprep.subr.mxu0 %v392
  %607 = vmatpush1.msra.mxu0 %v391
  %608 = vmatprep.subr.mxu0 0.0
  %609 = vmatpush1.msra.mxu0 0.0
  %610 = vmatprep.subr.mxu0 0.0
  %611 = vmatpush1.msra.mxu0 0.0
  %612 = vmatprep.subr.mxu0 0.0
  %613 = vmatpush1.msra.mxu0 0.0
  %614 = vmatprep.subr.mxu0 0.0
  %615 = vmatpush1.msra.mxu0 0.0
  %616 = vmatprep.subr.mxu0 0.0
  %617 = vmatpush1.msra.mxu0 0.0
  %618 = vmatprep.subr.mxu0 0.0
  %619 = vmatpush1.msra.mxu0 0.0
  %620 = vmatprep.subr.mxu0 0.0
  %621 = vmatpush1.msra.mxu0 0.0
  %622 = vmatprep.subr.mxu0 0.0
  %623 = vmatpush1.msra.mxu0 0.0
  %624 = vmatprep.subr.mxu0 0.0
  %625 = vmatpush1.msra.mxu0 0.0
  %626 = vmatprep.subr.mxu0 0.0
  %627 = vmatpush1.msra.mxu0 0.0
  %628 = vmatprep.subr.mxu0 0.0
  %629 = vmatpush1.msra.mxu0 0.0
  %630 = vmatprep.subr.mxu0 0.0
  %631 = vmatpush1.msra.mxu0 0.0
  %632 = vmatprep.subr.mxu0 0.0
  %633 = vmatpush1.msra.mxu0 0.0
  %634 = vmatprep.subr.mxu0 0.0
  %635 = vmatpush1.msra.mxu0 0.0
  %636 = vmatprep.subr.mxu0 0.0
  %637 = vmatpush1.msra.mxu0 0.0
  %638 = vmatprep.subr.mxu0 0.0
  %639 = vmatpush1.msra.mxu0 0.0
  %640 = vmatprep.mubr.f32.mxu0 0.0
  %641 = vmatmul.mubr.f32.gmra.mrb[0].mxu0 %v569
  %v642 = vpop.f32.mrb[0].mxu0
  %v643 = vadd.f32 0.0, %v642
  %v644 = vpop.f32.mrb[0].mxu0
  %v645 = vadd.f32 0.0, %v644
  %646 = vdwg.mxu0
  %647 = vmatprep.subr.mxu0 0.0
  %648 = vmatpush1.msra.mxu0 %v348
  %649 = vmatprep.subr.mxu0 0.0
  %650 = vmatpush1.msra.mxu0 %v351
  %651 = vmatprep.subr.mxu0 0.0
  %652 = vmatpush1.msra.mxu0 %v354
  %653 = vmatprep.subr.mxu0 0.0
  %654 = vmatpush1.msra.mxu0 %v357
  %655 = vmatprep.subr.mxu0 0.0
  %656 = vmatpush1.msra.mxu0 %v360
  %657 = vmatprep.subr.mxu0 0.0
  %658 = vmatpush1.msra.mxu0 %v363
  %659 = vmatprep.subr.mxu0 0.0
  %660 = vmatpush1.msra.mxu0 %v366
  %661 = vmatprep.subr.mxu0 0.0
  %662 = vmatpush1.msra.mxu0 %v369
  %663 = vmatprep.subr.mxu0 0.0
  %664 = vmatpush1.msra.mxu0 %v372
  %665 = vmatprep.subr.mxu0 0.0
  %666 = vmatpush1.msra.mxu0 %v375
  %667 = vmatprep.subr.mxu0 0.0
  %668 = vmatpush1.msra.mxu0 %v378
  %669 = vmatprep.subr.mxu0 0.0
  %670 = vmatpush1.msra.mxu0 %v381
  %671 = vmatprep.subr.mxu0 0.0
  %672 = vmatpush1.msra.mxu0 %v384
  %673 = vmatprep.subr.mxu0 0.0
  %674 = vmatpush1.msra.mxu0 %v387
  %675 = vmatprep.subr.mxu0 0.0
  %676 = vmatpush1.msra.mxu0 %v390
  %677 = vmatprep.subr.mxu0 0.0
  %678 = vmatpush1.msra.mxu0 %v393
  %679 = vmatprep.subr.mxu0 0.0
  %680 = vmatpush1.msra.mxu0 0.0
  %681 = vmatprep.subr.mxu0 0.0
  %682 = vmatpush1.msra.mxu0 0.0
  %683 = vmatprep.subr.mxu0 0.0
  %684 = vmatpush1.msra.mxu0 0.0
  %685 = vmatprep.subr.mxu0 0.0
  %686 = vmatpush1.msra.mxu0 0.0
  %687 = vmatprep.subr.mxu0 0.0
  %688 = vmatpush1.msra.mxu0 0.0
  %689 = vmatprep.subr.mxu0 0.0
  %690 = vmatpush1.msra.mxu0 0.0
  %691 = vmatprep.subr.mxu0 0.0
  %692 = vmatpush1.msra.mxu0 0.0
  %693 = vmatprep.subr.mxu0 0.0
  %694 = vmatpush1.msra.mxu0 0.0
  %695 = vmatprep.subr.mxu0 0.0
  %696 = vmatpush1.msra.mxu0 0.0
  %697 = vmatprep.subr.mxu0 0.0
  %698 = vmatpush1.msra.mxu0 0.0
  %699 = vmatprep.subr.mxu0 0.0
  %700 = vmatpush1.msra.mxu0 0.0
  %701 = vmatprep.subr.mxu0 0.0
  %702 = vmatpush1.msra.mxu0 0.0
  %703 = vmatprep.subr.mxu0 0.0
  %704 = vmatpush1.msra.mxu0 0.0
  %705 = vmatprep.subr.mxu0 0.0
  %706 = vmatpush1.msra.mxu0 0.0
  %707 = vmatprep.subr.mxu0 0.0
  %708 = vmatpush1.msra.mxu0 0.0
  %709 = vmatprep.subr.mxu0 0.0
  %710 = vmatpush1.msra.mxu0 0.0
  %711 = vmatprep.mubr.f32.mxu0 0.0
  %712 = vmatmul.mubr.f32.gmra.mrb[0].mxu0 %v569
  %v713 = vpop.f32.mrb[0].mxu0
  %v714 = vadd.f32 0.0, %v713
  %v715 = vpop.f32.mrb[0].mxu0
  %716 = vdwg.mxu0
  %v717 = vadd.f32 %v573, %v643
  %v718 = vxor.u32 %v717, 2147483648
  %v719 = vmul.f32 %v718, 1.442695
  %v720 = vpow.pop %v719
  %v721 = vadd.f32 %v720, 1.0
  %v722 = vrcp.pop %v721
  %v723 = vmul.f32 1.0, %v722
  %v724 = vadd.f32 %v574, %v645
  %v725 = vxor.u32 %v724, 2147483648
  %v726 = vmul.f32 %v725, 1.442695
  %v727 = vpow.pop %v726
  %v728 = vadd.f32 %v727, 1.0
  %v729 = vrcp.pop %v728
  %v730 = vmul.f32 1.0, %v729
  %v731 = vadd.f32 %v714, %v561
  %v732 = vmul.f32 %v723, %v731
  %v733 = vadd.f32 %v575, %v732
  %v734 = vtanh.pop %v733
  %v735 = vsub.f32 %v569, %v734
  %v736 = vmul.f32 %v730, %v735
  %v737 = vadd.f32 %v734, %v736
  %s738 = smul.u32 2, 3
  %s739 = smul.addr %s738, 8
  %s740 = scalar_lea.vmem [#allocation3], %s739
  %v741 = vld [vmem:[%s740] sm:$0xff]
  %v742 = vld [vmem:[%s740 + $0x8] sm:$0xff]
  %v743 = vld [vmem:[%s740 + $0x10] sm:$0xff]
  %744 = vmatprep.subr.mxu0 %v347
  %745 = vmatpush1.msra.mxu0 %v346
  %746 = vmatprep.subr.mxu0 %v350
  %747 = vmatpush1.msra.mxu0 %v349
  %748 = vmatprep.subr.mxu0 %v353
  %749 = vmatpush1.msra.mxu0 %v352
  %750 = vmatprep.subr.mxu0 %v356
  %751 = vmatpush1.msra.mxu0 %v355
  %752 = vmatprep.subr.mxu0 %v359
  %753 = vmatpush1.msra.mxu0 %v358
  %754 = vmatprep.subr.mxu0 %v362
  %755 = vmatpush1.msra.mxu0 %v361
  %756 = vmatprep.subr.mxu0 %v365
  %757 = vmatpush1.msra.mxu0 %v364
  %758 = vmatprep.subr.mxu0 %v368
  %759 = vmatpush1.msra.mxu0 %v367
  %760 = vmatprep.subr.mxu0 %v371
  %761 = vmatpush1.msra.mxu0 %v370
  %762 = vmatprep.subr.mxu0 %v374
  %763 = vmatpush1.msra.mxu0 %v373
  %764 = vmatprep.subr.mxu0 %v377
  %765 = vmatpush1.msra.mxu0 %v376
  %766 = vmatprep.subr.mxu0 %v380
  %767 = vmatpush1.msra.mxu0 %v379
  %768 = vmatprep.subr.mxu0 %v383
  %769 = vmatpush1.msra.mxu0 %v382
  %770 = vmatprep.subr.mxu0 %v386
  %771 = vmatpush1.msra.mxu0 %v385
  %772 = vmatprep.subr.mxu0 %v389
  %773 = vmatpush1.msra.mxu0 %v388
  %774 = vmatprep.subr.mxu0 %v392
  %775 = vmatpush1.msra.mxu0 %v391
  %776 = vmatprep.subr.mxu0 0.0
  %777 = vmatpush1.msra.mxu0 0.0
  %778 = vmatprep.subr.mxu0 0.0
  %779 = vmatpush1.msra.mxu0 0.0
  %780 = vmatprep.subr.mxu0 0.0
  %781 = vmatpush1.msra.mxu0 0.0
  %782 = vmatprep.subr.mxu0 0.0
  %783 = vmatpush1.msra.mxu0 0.0
  %784 = vmatprep.subr.mxu0 0.0
  %785 = vmatpush1.msra.mxu0 0.0
  %786 = vmatprep.subr.mxu0 0.0
  %787 = vmatpush1.msra.mxu0 0.0
  %788 = vmatprep.subr.mxu0 0.0
  %789 = vmatpush1.msra.mxu0 0.0
  %790 = vmatprep.subr.mxu0 0.0
  %791 = vmatpush1.msra.mxu0 0.0
  %792 = vmatprep.subr.mxu0 0.0
  %793 = vmatpush1.msra.mxu0 0.0
  %794 = vmatprep.subr.mxu0 0.0
  %795 = vmatpush1.msra.mxu0 0.0
  %796 = vmatprep.subr.mxu0 0.0
  %797 = vmatpush1.msra.mxu0 0.0
  %798 = vmatprep.subr.mxu0 0.0
  %799 = vmatpush1.msra.mxu0 0.0
  %800 = vmatprep.subr.mxu0 0.0
  %801 = vmatpush1.msra.mxu0 0.0
  %802 = vmatprep.subr.mxu0 0.0
  %803 = vmatpush1.msra.mxu0 0.0
  %804 = vmatprep.subr.mxu0 0.0
  %805 = vmatpush1.msra.mxu0 0.0
  %806 = vmatprep.subr.mxu0 0.0
  %807 = vmatpush1.msra.mxu0 0.0
  %808 = vmatprep.mubr.f32.mxu0 0.0
  %809 = vmatmul.mubr.f32.gmra.mrb[0].mxu0 %v737
  %v810 = vpop.f32.mrb[0].mxu0
  %v811 = vadd.f32 0.0, %v810
  %v812 = vpop.f32.mrb[0].mxu0
  %v813 = vadd.f32 0.0, %v812
  %814 = vdwg.mxu0
  %815 = vmatprep.subr.mxu0 0.0
  %816 = vmatpush1.msra.mxu0 %v348
  %817 = vmatprep.subr.mxu0 0.0
  %818 = vmatpush1.msra.mxu0 %v351
  %819 = vmatprep.subr.mxu0 0.0
  %820 = vmatpush1.msra.mxu0 %v354
  %821 = vmatprep.subr.mxu0 0.0
  %822 = vmatpush1.msra.mxu0 %v357
  %823 = vmatprep.subr.mxu0 0.0
  %824 = vmatpush1.msra.mxu0 %v360
  %825 = vmatprep.subr.mxu0 0.0
  %826 = vmatpush1.msra.mxu0 %v363
  %827 = vmatprep.subr.mxu0 0.0
  %828 = vmatpush1.msra.mxu0 %v366
  %829 = vmatprep.subr.mxu0 0.0
  %830 = vmatpush1.msra.mxu0 %v369
  %831 = vmatprep.subr.mxu0 0.0
  %832 = vmatpush1.msra.mxu0 %v372
  %833 = vmatprep.subr.mxu0 0.0
  %834 = vmatpush1.msra.mxu0 %v375
  %835 = vmatprep.subr.mxu0 0.0
  %836 = vmatpush1.msra.mxu0 %v378
  %837 = vmatprep.subr.mxu0 0.0
  %838 = vmatpush1.msra.mxu0 %v381
  %839 = vmatprep.subr.mxu0 0.0
  %840 = vmatpush1.msra.mxu0 %v384
  %841 = vmatprep.subr.mxu0 0.0
  %842 = vmatpush1.msra.mxu0 %v387
  %843 = vmatprep.subr.mxu0 0.0
  %844 = vmatpush1.msra.mxu0 %v390
  %845 = vmatprep.subr.mxu0 0.0
  %846 = vmatpush1.msra.mxu0 %v393
  %847 = vmatprep.subr.mxu0 0.0
  %848 = vmatpush1.msra.mxu0 0.0
  %849 = vmatprep.subr.mxu0 0.0
  %850 = vmatpush1.msra.mxu0 0.0
  %851 = vmatprep.subr.mxu0 0.0
  %852 = vmatpush1.msra.mxu0 0.0
  %853 = vmatprep.subr.mxu0 0.0
  %854 = vmatpush1.msra.mxu0 0.0
  %855 = vmatprep.subr.mxu0 0.0
  %856 = vmatpush1.msra.mxu0 0.0
  %857 = vmatprep.subr.mxu0 0.0
  %858 = vmatpush1.msra.mxu0 0.0
  %859 = vmatprep.subr.mxu0 0.0
  %860 = vmatpush1.msra.mxu0 0.0
  %861 = vmatprep.subr.mxu0 0.0
  %862 = vmatpush1.msra.mxu0 0.0
  %863 = vmatprep.subr.mxu0 0.0
  %864 = vmatpush1.msra.mxu0 0.0
  %865 = vmatprep.subr.mxu0 0.0
  %866 = vmatpush1.msra.mxu0 0.0
  %867 = vmatprep.subr.mxu0 0.0
  %868 = vmatpush1.msra.mxu0 0.0
  %869 = vmatprep.subr.mxu0 0.0
  %870 = vmatpush1.msra.mxu0 0.0
  %871 = vmatprep.subr.mxu0 0.0
  %872 = vmatpush1.msra.mxu0 0.0
  %873 = vmatprep.subr.mxu0 0.0
  %874 = vmatpush1.msra.mxu0 0.0
  %875 = vmatprep.subr.mxu0 0.0
  %876 = vmatpush1.msra.mxu0 0.0
  %877 = vmatprep.subr.mxu0 0.0
  %878 = vmatpush1.msra.mxu0 0.0
  %879 = vmatprep.mubr.f32.mxu0 0.0
  %880 = vmatmul.mubr.f32.gmra.mrb[0].mxu0 %v737
  %v881 = vpop.f32.mrb[0].mxu0
  %v882 = vadd.f32 0.0, %v881
  %v883 = vpop.f32.mrb[0].mxu0
  %884 = vdwg.mxu0
  %v885 = vadd.f32 %v741, %v811
  %v886 = vxor.u32 %v885, 2147483648
  %v887 = vmul.f32 %v886, 1.442695
  %v888 = vpow.pop %v887
  %v889 = vadd.f32 %v888, 1.0
  %v890 = vrcp.pop %v889
  %v891 = vmul.f32 1.0, %v890
  %v892 = vadd.f32 %v742, %v813
  %v893 = vxor.u32 %v892, 2147483648
  %v894 = vmul.f32 %v893, 1.442695
  %v895 = vpow.pop %v894
  %v896 = vadd.f32 %v895, 1.0
  %v897 = vrcp.pop %v896
  %v898 = vmul.f32 1.0, %v897
  %v899 = vadd.f32 %v882, %v561
  %v900 = vmul.f32 %v891, %v899
  %v901 = vadd.f32 %v743, %v900
  %v902 = vtanh.pop %v901
  %v903 = vsub.f32 %v737, %v902
  %v904 = vmul.f32 %v898, %v903
  %v905 = vadd.f32 %v902, %v904
  %s906 = smul.u32 3, 3
  %s907 = smul.addr %s906, 8
  %s908 = scalar_lea.vmem [#allocation3], %s907
  %v909 = vld [vmem:[%s908] sm:$0xff]
  %v910 = vld [vmem:[%s908 + $0x8] sm:$0xff]
  %v911 = vld [vmem:[%s908 + $0x10] sm:$0xff]
  %912 = vmatprep.subr.mxu0 %v347
  %913 = vmatpush1.msra.mxu0 %v346
  %914 = vmatprep.subr.mxu0 %v350
  %915 = vmatpush1.msra.mxu0 %v349
  %916 = vmatprep.subr.mxu0 %v353
  %917 = vmatpush1.msra.mxu0 %v352
  %918 = vmatprep.subr.mxu0 %v356
  %919 = vmatpush1.msra.mxu0 %v355
  %920 = vmatprep.subr.mxu0 %v359
  %921 = vmatpush1.msra.mxu0 %v358
  %922 = vmatprep.subr.mxu0 %v362
  %923 = vmatpush1.msra.mxu0 %v361
  %924 = vmatprep.subr.mxu0 %v365
  %925 = vmatpush1.msra.mxu0 %v364
  %926 = vmatprep.subr.mxu0 %v368
  %927 = vmatpush1.msra.mxu0 %v367
  %928 = vmatprep.subr.mxu0 %v371
  %929 = vmatpush1.msra.mxu0 %v370
  %930 = vmatprep.subr.mxu0 %v374
  %931 = vmatpush1.msra.mxu0 %v373
  %932 = vmatprep.subr.mxu0 %v377
  %933 = vmatpush1.msra.mxu0 %v376
  %934 = vmatprep.subr.mxu0 %v380
  %935 = vmatpush1.msra.mxu0 %v379
  %936 = vmatprep.subr.mxu0 %v383
  %937 = vmatpush1.msra.mxu0 %v382
  %938 = vmatprep.subr.mxu0 %v386
  %939 = vmatpush1.msra.mxu0 %v385
  %940 = vmatprep.subr.mxu0 %v389
  %941 = vmatpush1.msra.mxu0 %v388
  %942 = vmatprep.subr.mxu0 %v392
  %943 = vmatpush1.msra.mxu0 %v391
  %944 = vmatprep.subr.mxu0 0.0
  %945 = vmatpush1.msra.mxu0 0.0
  %946 = vmatprep.subr.mxu0 0.0
  %947 = vmatpush1.msra.mxu0 0.0
  %948 = vmatprep.subr.mxu0 0.0
  %949 = vmatpush1.msra.mxu0 0.0
  %950 = vmatprep.subr.mxu0 0.0
  %951 = vmatpush1.msra.mxu0 0.0
  %952 = vmatprep.subr.mxu0 0.0
  %953 = vmatpush1.msra.mxu0 0.0
  %954 = vmatprep.subr.mxu0 0.0
  %955 = vmatpush1.msra.mxu0 0.0
  %956 = vmatprep.subr.mxu0 0.0
  %957 = vmatpush1.msra.mxu0 0.0
  %958 = vmatprep.subr.mxu0 0.0
  %959 = vmatpush1.msra.mxu0 0.0
  %960 = vmatprep.subr.mxu0 0.0
  %961 = vmatpush1.msra.mxu0 0.0
  %962 = vmatprep.subr.mxu0 0.0
  %963 = vmatpush1.msra.mxu0 0.0
  %964 = vmatprep.subr.mxu0 0.0
  %965 = vmatpush1.msra.mxu0 0.0
  %966 = vmatprep.subr.mxu0 0.0
  %967 = vmatpush1.msra.mxu0 0.0
  %968 = vmatprep.subr.mxu0 0.0
  %969 = vmatpush1.msra.mxu0 0.0
  %970 = vmatprep.subr.mxu0 0.0
  %971 = vmatpush1.msra.mxu0 0.0
  %972 = vmatprep.subr.mxu0 0.0
  %973 = vmatpush1.msra.mxu0 0.0
  %974 = vmatprep.subr.mxu0 0.0
  %975 = vmatpush1.msra.mxu0 0.0
  %976 = vmatprep.mubr.f32.mxu0 0.0
  %977 = vmatmul.mubr.f32.gmra.mrb[0].mxu0 %v905
  %v978 = vpop.f32.mrb[0].mxu0
  %v979 = vadd.f32 0.0, %v978
  %v980 = vpop.f32.mrb[0].mxu0
  %v981 = vadd.f32 0.0, %v980
  %982 = vdwg.mxu0
  %983 = vmatprep.subr.mxu0 0.0
  %984 = vmatpush1.msra.mxu0 %v348
  %985 = vmatprep.subr.mxu0 0.0
  %986 = vmatpush1.msra.mxu0 %v351
  %987 = vmatprep.subr.mxu0 0.0
  %988 = vmatpush1.msra.mxu0 %v354
  %989 = vmatprep.subr.mxu0 0.0
  %990 = vmatpush1.msra.mxu0 %v357
  %991 = vmatprep.subr.mxu0 0.0
  %992 = vmatpush1.msra.mxu0 %v360
  %993 = vmatprep.subr.mxu0 0.0
  %994 = vmatpush1.msra.mxu0 %v363
  %995 = vmatprep.subr.mxu0 0.0
  %996 = vmatpush1.msra.mxu0 %v366
  %997 = vmatprep.subr.mxu0 0.0
  %998 = vmatpush1.msra.mxu0 %v369
  %999 = vmatprep.subr.mxu0 0.0
  %1000 = vmatpush1.msra.mxu0 %v372
  %1001 = vmatprep.subr.mxu0 0.0
  %1002 = vmatpush1.msra.mxu0 %v375
  %1003 = vmatprep.subr.mxu0 0.0
  %1004 = vmatpush1.msra.mxu0 %v378
  %1005 = vmatprep.subr.mxu0 0.0
  %1006 = vmatpush1.msra.mxu0 %v381
  %1007 = vmatprep.subr.mxu0 0.0
  %1008 = vmatpush1.msra.mxu0 %v384
  %1009 = vmatprep.subr.mxu0 0.0
  %1010 = vmatpush1.msra.mxu0 %v387
  %1011 = vmatprep.subr.mxu0 0.0
  %1012 = vmatpush1.msra.mxu0 %v390
  %1013 = vmatprep.subr.mxu0 0.0
  %1014 = vmatpush1.msra.mxu0 %v393
  %1015 = vmatprep.subr.mxu0 0.0
  %1016 = vmatpush1.msra.mxu0 0.0
  %1017 = vmatprep.subr.mxu0 0.0
  %1018 = vmatpush1.msra.mxu0 0.0
  %1019 = vmatprep.subr.mxu0 0.0
  %1020 = vmatpush1.msra.mxu0 0.0
  %1021 = vmatprep.subr.mxu0 0.0
  %1022 = vmatpush1.msra.mxu0 0.0
  %1023 = vmatprep.subr.mxu0 0.0
  %1024 = vmatpush1.msra.mxu0 0.0
  %1025 = vmatprep.subr.mxu0 0.0
  %1026 = vmatpush1.msra.mxu0 0.0
  %1027 = vmatprep.subr.mxu0 0.0
  %1028 = vmatpush1.msra.mxu0 0.0
  %1029 = vmatprep.subr.mxu0 0.0
  %1030 = vmatpush1.msra.mxu0 0.0
  %1031 = vmatprep.subr.mxu0 0.0
  %1032 = vmatpush1.msra.mxu0 0.0
  %1033 = vmatprep.subr.mxu0 0.0
  %1034 = vmatpush1.msra.mxu0 0.0
  %1035 = vmatprep.subr.mxu0 0.0
  %1036 = vmatpush1.msra.mxu0 0.0
  %1037 = vmatprep.subr.mxu0 0.0
  %1038 = vmatpush1.msra.mxu0 0.0
  %1039 = vmatprep.subr.mxu0 0.0
  %1040 = vmatpush1.msra.mxu0 0.0
  %1041 = vmatprep.subr.mxu0 0.0
  %1042 = vmatpush1.msra.mxu0 0.0
  %1043 = vmatprep.subr.mxu0 0.0
  %1044 = vmatpush1.msra.mxu0 0.0
  %1045 = vmatprep.subr.mxu0 0.0
  %1046 = vmatpush1.msra.mxu0 0.0
  %1047 = vmatprep.mubr.f32.mxu0 0.0
  %1048 = vmatmul.mubr.f32.gmra.mrb[0].mxu0 %v905
  %v1049 = vpop.f32.mrb[0].mxu0
  %v1050 = vadd.f32 0.0, %v1049
  %v1051 = vpop.f32.mrb[0].mxu0
  %1052 = vdwg.mxu0
  %v1053 = vadd.f32 %v909, %v979
  %v1054 = vxor.u32 %v1053, 2147483648
  %v1055 = vmul.f32 %v1054, 1.442695
  %v1056 = vpow.pop %v1055
  %v1057 = vadd.f32 %v1056, 1.0
  %v1058 = vrcp.pop %v1057
  %v1059 = vmul.f32 1.0, %v1058
  %v1060 = vadd.f32 %v910, %v981
  %v1061 = vxor.u32 %v1060, 2147483648
  %v1062 = vmul.f32 %v1061, 1.442695
  %v1063 = vpow.pop %v1062
  %v1064 = vadd.f32 %v1063, 1.0
  %v1065 = vrcp.pop %v1064
  %v1066 = vmul.f32 1.0, %v1065
  %v1067 = vadd.f32 %v1050, %v561
  %v1068 = vmul.f32 %v1059, %v1067
  %v1069 = vadd.f32 %v911, %v1068
  %v1070 = vtanh.pop %v1069
  %v1071 = vsub.f32 %v905, %v1070
  %v1072 = vmul.f32 %v1066, %v1071
  %v1073 = vadd.f32 %v1070, %v1072
  %s1074 = smul.u32 4, 3
  %s1075 = smul.addr %s1074, 8
  %s1076 = scalar_lea.vmem [#allocation3], %s1075
  %v1077 = vld [vmem:[%s1076] sm:$0xff]
  %v1078 = vld [vmem:[%s1076 + $0x8] sm:$0xff]
  %v1079 = vld [vmem:[%s1076 + $0x10] sm:$0xff]
  %1080 = vmatprep.subr.mxu0 %v347
  %1081 = vmatpush1.msra.mxu0 %v346
  %1082 = vmatprep.subr.mxu0 %v350
  %1083 = vmatpush1.msra.mxu0 %v349
  %1084 = vmatprep.subr.mxu0 %v353
  %1085 = vmatpush1.msra.mxu0 %v352
  %1086 = vmatprep.subr.mxu0 %v356
  %1087 = vmatpush1.msra.mxu0 %v355
  %1088 = vmatprep.subr.mxu0 %v359
  %1089 = vmatpush1.msra.mxu0 %v358
  %1090 = vmatprep.subr.mxu0 %v362
  %1091 = vmatpush1.msra.mxu0 %v361
  %1092 = vmatprep.subr.mxu0 %v365
  %1093 = vmatpush1.msra.mxu0 %v364
  %1094 = vmatprep.subr.mxu0 %v368
  %1095 = vmatpush1.msra.mxu0 %v367
  %1096 = vmatprep.subr.mxu0 %v371
  %1097 = vmatpush1.msra.mxu0 %v370
  %1098 = vmatprep.subr.mxu0 %v374
  %1099 = vmatpush1.msra.mxu0 %v373
  %1100 = vmatprep.subr.mxu0 %v377
  %1101 = vmatpush1.msra.mxu0 %v376
  %1102 = vmatprep.subr.mxu0 %v380
  %1103 = vmatpush1.msra.mxu0 %v379
  %1104 = vmatprep.subr.mxu0 %v383
  %1105 = vmatpush1.msra.mxu0 %v382
  %1106 = vmatprep.subr.mxu0 %v386
  %1107 = vmatpush1.msra.mxu0 %v385
  %1108 = vmatprep.subr.mxu0 %v389
  %1109 = vmatpush1.msra.mxu0 %v388
  %1110 = vmatprep.subr.mxu0 %v392
  %1111 = vmatpush1.msra.mxu0 %v391
  %1112 = vmatprep.subr.mxu0 0.0
  %1113 = vmatpush1.msra.mxu0 0.0
  %1114 = vmatprep.subr.mxu0 0.0
  %1115 = vmatpush1.msra.mxu0 0.0
  %1116 = vmatprep.subr.mxu0 0.0
  %1117 = vmatpush1.msra.mxu0 0.0
  %1118 = vmatprep.subr.mxu0 0.0
  %1119 = vmatpush1.msra.mxu0 0.0
  %1120 = vmatprep.subr.mxu0 0.0
  %1121 = vmatpush1.msra.mxu0 0.0
  %1122 = vmatprep.subr.mxu0 0.0
  %1123 = vmatpush1.msra.mxu0 0.0
  %1124 = vmatprep.subr.mxu0 0.0
  %1125 = vmatpush1.msra.mxu0 0.0
  %1126 = vmatprep.subr.mxu0 0.0
  %1127 = vmatpush1.msra.mxu0 0.0
  %1128 = vmatprep.subr.mxu0 0.0
  %1129 = vmatpush1.msra.mxu0 0.0
  %1130 = vmatprep.subr.mxu0 0.0
  %1131 = vmatpush1.msra.mxu0 0.0
  %1132 = vmatprep.subr.mxu0 0.0
  %1133 = vmatpush1.msra.mxu0 0.0
  %1134 = vmatprep.subr.mxu0 0.0
  %1135 = vmatpush1.msra.mxu0 0.0
  %1136 = vmatprep.subr.mxu0 0.0
  %1137 = vmatpush1.msra.mxu0 0.0
  %1138 = vmatprep.subr.mxu0 0.0
  %1139 = vmatpush1.msra.mxu0 0.0
  %1140 = vmatprep.subr.mxu0 0.0
  %1141 = vmatpush1.msra.mxu0 0.0
  %1142 = vmatprep.subr.mxu0 0.0
  %1143 = vmatpush1.msra.mxu0 0.0
  %1144 = vmatprep.mubr.f32.mxu0 0.0
  %1145 = vmatmul.mubr.f32.gmra.mrb[0].mxu0 %v1073
  %v1146 = vpop.f32.mrb[0].mxu0
  %v1147 = vadd.f32 0.0, %v1146
  %v1148 = vpop.f32.mrb[0].mxu0
  %v1149 = vadd.f32 0.0, %v1148
  %1150 = vdwg.mxu0
  %1151 = vmatprep.subr.mxu0 0.0
  %1152 = vmatpush1.msra.mxu0 %v348
  %1153 = vmatprep.subr.mxu0 0.0
  %1154 = vmatpush1.msra.mxu0 %v351
  %1155 = vmatprep.subr.mxu0 0.0
  %1156 = vmatpush1.msra.mxu0 %v354
  %1157 = vmatprep.subr.mxu0 0.0
  %1158 = vmatpush1.msra.mxu0 %v357
  %1159 = vmatprep.subr.mxu0 0.0
  %1160 = vmatpush1.msra.mxu0 %v360
  %1161 = vmatprep.subr.mxu0 0.0
  %1162 = vmatpush1.msra.mxu0 %v363
  %1163 = vmatprep.subr.mxu0 0.0
  %1164 = vmatpush1.msra.mxu0 %v366
  %1165 = vmatprep.subr.mxu0 0.0
  %1166 = vmatpush1.msra.mxu0 %v369
  %1167 = vmatprep.subr.mxu0 0.0
  %1168 = vmatpush1.msra.mxu0 %v372
  %1169 = vmatprep.subr.mxu0 0.0
  %1170 = vmatpush1.msra.mxu0 %v375
  %1171 = vmatprep.subr.mxu0 0.0
  %1172 = vmatpush1.msra.mxu0 %v378
  %1173 = vmatprep.subr.mxu0 0.0
  %1174 = vmatpush1.msra.mxu0 %v381
  %1175 = vmatprep.subr.mxu0 0.0
  %1176 = vmatpush1.msra.mxu0 %v384
  %1177 = vmatprep.subr.mxu0 0.0
  %1178 = vmatpush1.msra.mxu0 %v387
  %1179 = vmatprep.subr.mxu0 0.0
  %1180 = vmatpush1.msra.mxu0 %v390
  %1181 = vmatprep.subr.mxu0 0.0
  %1182 = vmatpush1.msra.mxu0 %v393
  %1183 = vmatprep.subr.mxu0 0.0
  %1184 = vmatpush1.msra.mxu0 0.0
  %1185 = vmatprep.subr.mxu0 0.0
  %1186 = vmatpush1.msra.mxu0 0.0
  %1187 = vmatprep.subr.mxu0 0.0
  %1188 = vmatpush1.msra.mxu0 0.0
  %1189 = vmatprep.subr.mxu0 0.0
  %1190 = vmatpush1.msra.mxu0 0.0
  %1191 = vmatprep.subr.mxu0 0.0
  %1192 = vmatpush1.msra.mxu0 0.0
  %1193 = vmatprep.subr.mxu0 0.0
  %1194 = vmatpush1.msra.mxu0 0.0
  %1195 = vmatprep.subr.mxu0 0.0
  %1196 = vmatpush1.msra.mxu0 0.0
  %1197 = vmatprep.subr.mxu0 0.0
  %1198 = vmatpush1.msra.mxu0 0.0
  %1199 = vmatprep.subr.mxu0 0.0
  %1200 = vmatpush1.msra.mxu0 0.0
  %1201 = vmatprep.subr.mxu0 0.0
  %1202 = vmatpush1.msra.mxu0 0.0
  %1203 = vmatprep.subr.mxu0 0.0
  %1204 = vmatpush1.msra.mxu0 0.0
  %1205 = vmatprep.subr.mxu0 0.0
  %1206 = vmatpush1.msra.mxu0 0.0
  %1207 = vmatprep.subr.mxu0 0.0
  %1208 = vmatpush1.msra.mxu0 0.0
  %1209 = vmatprep.subr.mxu0 0.0
  %1210 = vmatpush1.msra.mxu0 0.0
  %1211 = vmatprep.subr.mxu0 0.0
  %1212 = vmatpush1.msra.mxu0 0.0
  %1213 = vmatprep.subr.mxu0 0.0
  %1214 = vmatpush1.msra.mxu0 0.0
  %1215 = vmatprep.mubr.f32.mxu0 0.0
  %1216 = vmatmul.mubr.f32.gmra.mrb[0].mxu0 %v1073
  %v1217 = vpop.f32.mrb[0].mxu0
  %v1218 = vadd.f32 0.0, %v1217
  %v1219 = vpop.f32.mrb[0].mxu0
  %1220 = vdwg.mxu0
  %v1221 = vadd.f32 %v1077, %v1147
  %v1222 = vxor.u32 %v1221, 2147483648
  %v1223 = vmul.f32 %v1222, 1.442695
  %v1224 = vpow.pop %v1223
  %v1225 = vadd.f32 %v1224, 1.0
  %v1226 = vrcp.pop %v1225
  %v1227 = vmul.f32 1.0, %v1226
  %v1228 = vadd.f32 %v1078, %v1149
  %v1229 = vxor.u32 %v1228, 2147483648
  %v1230 = vmul.f32 %v1229, 1.442695
  %v1231 = vpow.pop %v1230
  %v1232 = vadd.f32 %v1231, 1.0
  %v1233 = vrcp.pop %v1232
  %v1234 = vmul.f32 1.0, %v1233
  %v1235 = vadd.f32 %v1218, %v561
  %v1236 = vmul.f32 %v1227, %v1235
  %v1237 = vadd.f32 %v1079, %v1236
  %v1238 = vtanh.pop %v1237
  %v1239 = vsub.f32 %v1073, %v1238
  %v1240 = vmul.f32 %v1234, %v1239
  %v1241 = vadd.f32 %v1238, %v1240
  %s1242 = smul.u32 5, 3
  %s1243 = smul.addr %s1242, 8
  %s1244 = scalar_lea.vmem [#allocation3], %s1243
  %v1245 = vld [vmem:[%s1244] sm:$0xff]
  %v1246 = vld [vmem:[%s1244 + $0x8] sm:$0xff]
  %v1247 = vld [vmem:[%s1244 + $0x10] sm:$0xff]
  %1248 = vmatprep.subr.mxu0 %v347
  %1249 = vmatpush1.msra.mxu0 %v346
  %1250 = vmatprep.subr.mxu0 %v350
  %1251 = vmatpush1.msra.mxu0 %v349
  %1252 = vmatprep.subr.mxu0 %v353
  %1253 = vmatpush1.msra.mxu0 %v352
  %1254 = vmatprep.subr.mxu0 %v356
  %1255 = vmatpush1.msra.mxu0 %v355
  %1256 = vmatprep.subr.mxu0 %v359
  %1257 = vmatpush1.msra.mxu0 %v358
  %1258 = vmatprep.subr.mxu0 %v362
  %1259 = vmatpush1.msra.mxu0 %v361
  %1260 = vmatprep.subr.mxu0 %v365
  %1261 = vmatpush1.msra.mxu0 %v364
  %1262 = vmatprep.subr.mxu0 %v368
  %1263 = vmatpush1.msra.mxu0 %v367
  %1264 = vmatprep.subr.mxu0 %v371
  %1265 = vmatpush1.msra.mxu0 %v370
  %1266 = vmatprep.subr.mxu0 %v374
  %1267 = vmatpush1.msra.mxu0 %v373
  %1268 = vmatprep.subr.mxu0 %v377
  %1269 = vmatpush1.msra.mxu0 %v376
  %1270 = vmatprep.subr.mxu0 %v380
  %1271 = vmatpush1.msra.mxu0 %v379
  %1272 = vmatprep.subr.mxu0 %v383
  %1273 = vmatpush1.msra.mxu0 %v382
  %1274 = vmatprep.subr.mxu0 %v386
  %1275 = vmatpush1.msra.mxu0 %v385
  %1276 = vmatprep.subr.mxu0 %v389
  %1277 = vmatpush1.msra.mxu0 %v388
  %1278 = vmatprep.subr.mxu0 %v392
  %1279 = vmatpush1.msra.mxu0 %v391
  %1280 = vmatprep.subr.mxu0 0.0
  %1281 = vmatpush1.msra.mxu0 0.0
  %1282 = vmatprep.subr.mxu0 0.0
  %1283 = vmatpush1.msra.mxu0 0.0
  %1284 = vmatprep.subr.mxu0 0.0
  %1285 = vmatpush1.msra.mxu0 0.0
  %1286 = vmatprep.subr.mxu0 0.0
  %1287 = vmatpush1.msra.mxu0 0.0
  %1288 = vmatprep.subr.mxu0 0.0
  %1289 = vmatpush1.msra.mxu0 0.0
  %1290 = vmatprep.subr.mxu0 0.0
  %1291 = vmatpush1.msra.mxu0 0.0
  %1292 = vmatprep.subr.mxu0 0.0
  %1293 = vmatpush1.msra.mxu0 0.0
  %1294 = vmatprep.subr.mxu0 0.0
  %1295 = vmatpush1.msra.mxu0 0.0
  %1296 = vmatprep.subr.mxu0 0.0
  %1297 = vmatpush1.msra.mxu0 0.0
  %1298 = vmatprep.subr.mxu0 0.0
  %1299 = vmatpush1.msra.mxu0 0.0
  %1300 = vmatprep.subr.mxu0 0.0
  %1301 = vmatpush1.msra.mxu0 0.0
  %1302 = vmatprep.subr.mxu0 0.0
  %1303 = vmatpush1.msra.mxu0 0.0
  %1304 = vmatprep.subr.mxu0 0.0
  %1305 = vmatpush1.msra.mxu0 0.0
  %1306 = vmatprep.subr.mxu0 0.0
  %1307 = vmatpush1.msra.mxu0 0.0
  %1308 = vmatprep.subr.mxu0 0.0
  %1309 = vmatpush1.msra.mxu0 0.0
  %1310 = vmatprep.subr.mxu0 0.0
  %1311 = vmatpush1.msra.mxu0 0.0
  %1312 = vmatprep.mubr.f32.mxu0 0.0
  %1313 = vmatmul.mubr.f32.gmra.mrb[0].mxu0 %v1241
  %v1314 = vpop.f32.mrb[0].mxu0
  %v1315 = vadd.f32 0.0, %v1314
  %v1316 = vpop.f32.mrb[0].mxu0
  %v1317 = vadd.f32 0.0, %v1316
  %1318 = vdwg.mxu0
  %1319 = vmatprep.subr.mxu0 0.0
  %1320 = vmatpush1.msra.mxu0 %v348
  %1321 = vmatprep.subr.mxu0 0.0
  %1322 = vmatpush1.msra.mxu0 %v351
  %1323 = vmatprep.subr.mxu0 0.0
  %1324 = vmatpush1.msra.mxu0 %v354
  %1325 = vmatprep.subr.mxu0 0.0
  %1326 = vmatpush1.msra.mxu0 %v357
  %1327 = vmatprep.subr.mxu0 0.0
  %1328 = vmatpush1.msra.mxu0 %v360
  %1329 = vmatprep.subr.mxu0 0.0
  %1330 = vmatpush1.msra.mxu0 %v363
  %1331 = vmatprep.subr.mxu0 0.0
  %1332 = vmatpush1.msra.mxu0 %v366
  %1333 = vmatprep.subr.mxu0 0.0
  %1334 = vmatpush1.msra.mxu0 %v369
  %1335 = vmatprep.subr.mxu0 0.0
  %1336 = vmatpush1.msra.mxu0 %v372
  %1337 = vmatprep.subr.mxu0 0.0
  %1338 = vmatpush1.msra.mxu0 %v375
  %1339 = vmatprep.subr.mxu0 0.0
  %1340 = vmatpush1.msra.mxu0 %v378
  %1341 = vmatprep.subr.mxu0 0.0
  %1342 = vmatpush1.msra.mxu0 %v381
  %1343 = vmatprep.subr.mxu0 0.0
  %1344 = vmatpush1.msra.mxu0 %v384
  %1345 = vmatprep.subr.mxu0 0.0
  %1346 = vmatpush1.msra.mxu0 %v387
  %1347 = vmatprep.subr.mxu0 0.0
  %1348 = vmatpush1.msra.mxu0 %v390
  %1349 = vmatprep.subr.mxu0 0.0
  %1350 = vmatpush1.msra.mxu0 %v393
  %1351 = vmatprep.subr.mxu0 0.0
  %1352 = vmatpush1.msra.mxu0 0.0
  %1353 = vmatprep.subr.mxu0 0.0
  %1354 = vmatpush1.msra.mxu0 0.0
  %1355 = vmatprep.subr.mxu0 0.0
  %1356 = vmatpush1.msra.mxu0 0.0
  %1357 = vmatprep.subr.mxu0 0.0
  %1358 = vmatpush1.msra.mxu0 0.0
  %1359 = vmatprep.subr.mxu0 0.0
  %1360 = vmatpush1.msra.mxu0 0.0
  %1361 = vmatprep.subr.mxu0 0.0
  %1362 = vmatpush1.msra.mxu0 0.0
  %1363 = vmatprep.subr.mxu0 0.0
  %1364 = vmatpush1.msra.mxu0 0.0
  %1365 = vmatprep.subr.mxu0 0.0
  %1366 = vmatpush1.msra.mxu0 0.0
  %1367 = vmatprep.subr.mxu0 0.0
  %1368 = vmatpush1.msra.mxu0 0.0
  %1369 = vmatprep.subr.mxu0 0.0
  %1370 = vmatpush1.msra.mxu0 0.0
  %1371 = vmatprep.subr.mxu0 0.0
  %1372 = vmatpush1.msra.mxu0 0.0
  %1373 = vmatprep.subr.mxu0 0.0
  %1374 = vmatpush1.msra.mxu0 0.0
  %1375 = vmatprep.subr.mxu0 0.0
  %1376 = vmatpush1.msra.mxu0 0.0
  %1377 = vmatprep.subr.mxu0 0.0
  %1378 = vmatpush1.msra.mxu0 0.0
  %1379 = vmatprep.subr.mxu0 0.0
  %1380 = vmatpush1.msra.mxu0 0.0
  %1381 = vmatprep.subr.mxu0 0.0
  %1382 = vmatpush1.msra.mxu0 0.0
  %1383 = vmatprep.mubr.f32.mxu0 0.0
  %1384 = vmatmul.mubr.f32.gmra.mrb[0].mxu0 %v1241
  %v1385 = vpop.f32.mrb[0].mxu0
  %v1386 = vadd.f32 0.0, %v1385
  %v1387 = vpop.f32.mrb[0].mxu0
  %1388 = vdwg.mxu0
  %v1389 = vadd.f32 %v1245, %v1315
  %v1390 = vxor.u32 %v1389, 2147483648
  %v1391 = vmul.f32 %v1390, 1.442695
  %v1392 = vpow.pop %v1391
  %v1393 = vadd.f32 %v1392, 1.0
  %v1394 = vrcp.pop %v1393
  %v1395 = vmul.f32 1.0, %v1394
  %v1396 = vadd.f32 %v1246, %v1317
  %v1397 = vxor.u32 %v1396, 2147483648
  %v1398 = vmul.f32 %v1397, 1.442695
  %v1399 = vpow.pop %v1398
  %v1400 = vadd.f32 %v1399, 1.0
  %v1401 = vrcp.pop %v1400
  %v1402 = vmul.f32 1.0, %v1401
  %v1403 = vadd.f32 %v1386, %v561
  %v1404 = vmul.f32 %v1395, %v1403
  %v1405 = vadd.f32 %v1247, %v1404
  %v1406 = vtanh.pop %v1405
  %v1407 = vsub.f32 %v1241, %v1406
  %v1408 = vmul.f32 %v1402, %v1407
  %v1409 = vadd.f32 %v1406, %v1408
  %s1410 = smul.u32 6, 3
  %s1411 = smul.addr %s1410, 8
  %s1412 = scalar_lea.vmem [#allocation3], %s1411
  %v1413 = vld [vmem:[%s1412] sm:$0xff]
  %v1414 = vld [vmem:[%s1412 + $0x8] sm:$0xff]
  %v1415 = vld [vmem:[%s1412 + $0x10] sm:$0xff]
  %1416 = vmatprep.subr.mxu0 %v347
  %1417 = vmatpush1.msra.mxu0 %v346
  %1418 = vmatprep.subr.mxu0 %v350
  %1419 = vmatpush1.msra.mxu0 %v349
  %1420 = vmatprep.subr.mxu0 %v353
  %1421 = vmatpush1.msra.mxu0 %v352
  %1422 = vmatprep.subr.mxu0 %v356
  %1423 = vmatpush1.msra.mxu0 %v355
  %1424 = vmatprep.subr.mxu0 %v359
  %1425 = vmatpush1.msra.mxu0 %v358
  %1426 = vmatprep.subr.mxu0 %v362
  %1427 = vmatpush1.msra.mxu0 %v361
  %1428 = vmatprep.subr.mxu0 %v365
  %1429 = vmatpush1.msra.mxu0 %v364
  %1430 = vmatprep.subr.mxu0 %v368
  %1431 = vmatpush1.msra.mxu0 %v367
  %1432 = vmatprep.subr.mxu0 %v371
  %1433 = vmatpush1.msra.mxu0 %v370
  %1434 = vmatprep.subr.mxu0 %v374
  %1435 = vmatpush1.msra.mxu0 %v373
  %1436 = vmatprep.subr.mxu0 %v377
  %1437 = vmatpush1.msra.mxu0 %v376
  %1438 = vmatprep.subr.mxu0 %v380
  %1439 = vmatpush1.msra.mxu0 %v379
  %1440 = vmatprep.subr.mxu0 %v383
  %1441 = vmatpush1.msra.mxu0 %v382
  %1442 = vmatprep.subr.mxu0 %v386
  %1443 = vmatpush1.msra.mxu0 %v385
  %1444 = vmatprep.subr.mxu0 %v389
  %1445 = vmatpush1.msra.mxu0 %v388
  %1446 = vmatprep.subr.mxu0 %v392
  %1447 = vmatpush1.msra.mxu0 %v391
  %1448 = vmatprep.subr.mxu0 0.0
  %1449 = vmatpush1.msra.mxu0 0.0
  %1450 = vmatprep.subr.mxu0 0.0
  %1451 = vmatpush1.msra.mxu0 0.0
  %1452 = vmatprep.subr.mxu0 0.0
  %1453 = vmatpush1.msra.mxu0 0.0
  %1454 = vmatprep.subr.mxu0 0.0
  %1455 = vmatpush1.msra.mxu0 0.0
  %1456 = vmatprep.subr.mxu0 0.0
  %1457 = vmatpush1.msra.mxu0 0.0
  %1458 = vmatprep.subr.mxu0 0.0
  %1459 = vmatpush1.msra.mxu0 0.0
  %1460 = vmatprep.subr.mxu0 0.0
  %1461 = vmatpush1.msra.mxu0 0.0
  %1462 = vmatprep.subr.mxu0 0.0
  %1463 = vmatpush1.msra.mxu0 0.0
  %1464 = vmatprep.subr.mxu0 0.0
  %1465 = vmatpush1.msra.mxu0 0.0
  %1466 = vmatprep.subr.mxu0 0.0
  %1467 = vmatpush1.msra.mxu0 0.0
  %1468 = vmatprep.subr.mxu0 0.0
  %1469 = vmatpush1.msra.mxu0 0.0
  %1470 = vmatprep.subr.mxu0 0.0
  %1471 = vmatpush1.msra.mxu0 0.0
  %1472 = vmatprep.subr.mxu0 0.0
  %1473 = vmatpush1.msra.mxu0 0.0
  %1474 = vmatprep.subr.mxu0 0.0
  %1475 = vmatpush1.msra.mxu0 0.0
  %1476 = vmatprep.subr.mxu0 0.0
  %1477 = vmatpush1.msra.mxu0 0.0
  %1478 = vmatprep.subr.mxu0 0.0
  %1479 = vmatpush1.msra.mxu0 0.0
  %1480 = vmatprep.mubr.f32.mxu0 0.0
  %1481 = vmatmul.mubr.f32.gmra.mrb[0].mxu0 %v1409
  %v1482 = vpop.f32.mrb[0].mxu0
  %v1483 = vadd.f32 0.0, %v1482
  %v1484 = vpop.f32.mrb[0].mxu0
  %v1485 = vadd.f32 0.0, %v1484
  %1486 = vdwg.mxu0
  %1487 = vmatprep.subr.mxu0 0.0
  %1488 = vmatpush1.msra.mxu0 %v348
  %1489 = vmatprep.subr.mxu0 0.0
  %1490 = vmatpush1.msra.mxu0 %v351
  %1491 = vmatprep.subr.mxu0 0.0
  %1492 = vmatpush1.msra.mxu0 %v354
  %1493 = vmatprep.subr.mxu0 0.0
  %1494 = vmatpush1.msra.mxu0 %v357
  %1495 = vmatprep.subr.mxu0 0.0
  %1496 = vmatpush1.msra.mxu0 %v360
  %1497 = vmatprep.subr.mxu0 0.0
  %1498 = vmatpush1.msra.mxu0 %v363
  %1499 = vmatprep.subr.mxu0 0.0
  %1500 = vmatpush1.msra.mxu0 %v366
  %1501 = vmatprep.subr.mxu0 0.0
  %1502 = vmatpush1.msra.mxu0 %v369
  %1503 = vmatprep.subr.mxu0 0.0
  %1504 = vmatpush1.msra.mxu0 %v372
  %1505 = vmatprep.subr.mxu0 0.0
  %1506 = vmatpush1.msra.mxu0 %v375
  %1507 = vmatprep.subr.mxu0 0.0
  %1508 = vmatpush1.msra.mxu0 %v378
  %1509 = vmatprep.subr.mxu0 0.0
  %1510 = vmatpush1.msra.mxu0 %v381
  %1511 = vmatprep.subr.mxu0 0.0
  %1512 = vmatpush1.msra.mxu0 %v384
  %1513 = vmatprep.subr.mxu0 0.0
  %1514 = vmatpush1.msra.mxu0 %v387
  %1515 = vmatprep.subr.mxu0 0.0
  %1516 = vmatpush1.msra.mxu0 %v390
  %1517 = vmatprep.subr.mxu0 0.0
  %1518 = vmatpush1.msra.mxu0 %v393
  %1519 = vmatprep.subr.mxu0 0.0
  %1520 = vmatpush1.msra.mxu0 0.0
  %1521 = vmatprep.subr.mxu0 0.0
  %1522 = vmatpush1.msra.mxu0 0.0
  %1523 = vmatprep.subr.mxu0 0.0
  %1524 = vmatpush1.msra.mxu0 0.0
  %1525 = vmatprep.subr.mxu0 0.0
  %1526 = vmatpush1.msra.mxu0 0.0
  %1527 = vmatprep.subr.mxu0 0.0
  %1528 = vmatpush1.msra.mxu0 0.0
  %1529 = vmatprep.subr.mxu0 0.0
  %1530 = vmatpush1.msra.mxu0 0.0
  %1531 = vmatprep.subr.mxu0 0.0
  %1532 = vmatpush1.msra.mxu0 0.0
  %1533 = vmatprep.subr.mxu0 0.0
  %1534 = vmatpush1.msra.mxu0 0.0
  %1535 = vmatprep.subr.mxu0 0.0
  %1536 = vmatpush1.msra.mxu0 0.0
  %1537 = vmatprep.subr.mxu0 0.0
  %1538 = vmatpush1.msra.mxu0 0.0
  %1539 = vmatprep.subr.mxu0 0.0
  %1540 = vmatpush1.msra.mxu0 0.0
  %1541 = vmatprep.subr.mxu0 0.0
  %1542 = vmatpush1.msra.mxu0 0.0
  %1543 = vmatprep.subr.mxu0 0.0
  %1544 = vmatpush1.msra.mxu0 0.0
  %1545 = vmatprep.subr.mxu0 0.0
  %1546 = vmatpush1.msra.mxu0 0.0
  %1547 = vmatprep.subr.mxu0 0.0
  %1548 = vmatpush1.msra.mxu0 0.0
  %1549 = vmatprep.subr.mxu0 0.0
  %1550 = vmatpush1.msra.mxu0 0.0
  %1551 = vmatprep.mubr.f32.mxu0 0.0
  %1552 = vmatmul.mubr.f32.gmra.mrb[0].mxu0 %v1409
  %v1553 = vpop.f32.mrb[0].mxu0
  %v1554 = vadd.f32 0.0, %v1553
  %v1555 = vpop.f32.mrb[0].mxu0
  %1556 = vdwg.mxu0
  %v1557 = vadd.f32 %v1413, %v1483
  %v1558 = vxor.u32 %v1557, 2147483648
  %v1559 = vmul.f32 %v1558, 1.442695
  %v1560 = vpow.pop %v1559
  %v1561 = vadd.f32 %v1560, 1.0
  %v1562 = vrcp.pop %v1561
  %v1563 = vmul.f32 1.0, %v1562
  %v1564 = vadd.f32 %v1414, %v1485
  %v1565 = vxor.u32 %v1564, 2147483648
  %v1566 = vmul.f32 %v1565, 1.442695
  %v1567 = vpow.pop %v1566
  %v1568 = vadd.f32 %v1567, 1.0
  %v1569 = vrcp.pop %v1568
  %v1570 = vmul.f32 1.0, %v1569
  %v1571 = vadd.f32 %v1554, %v561
  %v1572 = vmul.f32 %v1563, %v1571
  %v1573 = vadd.f32 %v1415, %v1572
  %v1574 = vtanh.pop %v1573
  %v1575 = vsub.f32 %v1409, %v1574
  %v1576 = vmul.f32 %v1570, %v1575
  %v1577 = vadd.f32 %v1574, %v1576
  %s1578 = smul.u32 7, 3
  %s1579 = smul.addr %s1578, 8
  %s1580 = scalar_lea.vmem [#allocation3], %s1579
  %v1581 = vld [vmem:[%s1580] sm:$0xff]
  %v1582 = vld [vmem:[%s1580 + $0x8] sm:$0xff]
  %v1583 = vld [vmem:[%s1580 + $0x10] sm:$0xff]
  %1584 = vmatprep.subr.mxu0 %v347
  %1585 = vmatpush1.msra.mxu0 %v346
  %1586 = vmatprep.subr.mxu0 %v350
  %1587 = vmatpush1.msra.mxu0 %v349
  %1588 = vmatprep.subr.mxu0 %v353
  %1589 = vmatpush1.msra.mxu0 %v352
  %1590 = vmatprep.subr.mxu0 %v356
  %1591 = vmatpush1.msra.mxu0 %v355
  %1592 = vmatprep.subr.mxu0 %v359
  %1593 = vmatpush1.msra.mxu0 %v358
  %1594 = vmatprep.subr.mxu0 %v362
  %1595 = vmatpush1.msra.mxu0 %v361
  %1596 = vmatprep.subr.mxu0 %v365
  %1597 = vmatpush1.msra.mxu0 %v364
  %1598 = vmatprep.subr.mxu0 %v368
  %1599 = vmatpush1.msra.mxu0 %v367
  %1600 = vmatprep.subr.mxu0 %v371
  %1601 = vmatpush1.msra.mxu0 %v370
  %1602 = vmatprep.subr.mxu0 %v374
  %1603 = vmatpush1.msra.mxu0 %v373
  %1604 = vmatprep.subr.mxu0 %v377
  %1605 = vmatpush1.msra.mxu0 %v376
  %1606 = vmatprep.subr.mxu0 %v380
  %1607 = vmatpush1.msra.mxu0 %v379
  %1608 = vmatprep.subr.mxu0 %v383
  %1609 = vmatpush1.msra.mxu0 %v382
  %1610 = vmatprep.subr.mxu0 %v386
  %1611 = vmatpush1.msra.mxu0 %v385
  %1612 = vmatprep.subr.mxu0 %v389
  %1613 = vmatpush1.msra.mxu0 %v388
  %1614 = vmatprep.subr.mxu0 %v392
  %1615 = vmatpush1.msra.mxu0 %v391
  %1616 = vmatprep.subr.mxu0 0.0
  %1617 = vmatpush1.msra.mxu0 0.0
  %1618 = vmatprep.subr.mxu0 0.0
  %1619 = vmatpush1.msra.mxu0 0.0
  %1620 = vmatprep.subr.mxu0 0.0
  %1621 = vmatpush1.msra.mxu0 0.0
  %1622 = vmatprep.subr.mxu0 0.0
  %1623 = vmatpush1.msra.mxu0 0.0
  %1624 = vmatprep.subr.mxu0 0.0
  %1625 = vmatpush1.msra.mxu0 0.0
  %1626 = vmatprep.subr.mxu0 0.0
  %1627 = vmatpush1.msra.mxu0 0.0
  %1628 = vmatprep.subr.mxu0 0.0
  %1629 = vmatpush1.msra.mxu0 0.0
  %1630 = vmatprep.subr.mxu0 0.0
  %1631 = vmatpush1.msra.mxu0 0.0
  %1632 = vmatprep.subr.mxu0 0.0
  %1633 = vmatpush1.msra.mxu0 0.0
  %1634 = vmatprep.subr.mxu0 0.0
  %1635 = vmatpush1.msra.mxu0 0.0
  %1636 = vmatprep.subr.mxu0 0.0
  %1637 = vmatpush1.msra.mxu0 0.0
  %1638 = vmatprep.subr.mxu0 0.0
  %1639 = vmatpush1.msra.mxu0 0.0
  %1640 = vmatprep.subr.mxu0 0.0
  %1641 = vmatpush1.msra.mxu0 0.0
  %1642 = vmatprep.subr.mxu0 0.0
  %1643 = vmatpush1.msra.mxu0 0.0
  %1644 = vmatprep.subr.mxu0 0.0
  %1645 = vmatpush1.msra.mxu0 0.0
  %1646 = vmatprep.subr.mxu0 0.0
  %1647 = vmatpush1.msra.mxu0 0.0
  %1648 = vmatprep.mubr.f32.mxu0 0.0
  %1649 = vmatmul.mubr.f32.gmra.mrb[0].mxu0 %v1577
  %v1650 = vpop.f32.mrb[0].mxu0
  %v1651 = vadd.f32 0.0, %v1650
  %v1652 = vpop.f32.mrb[0].mxu0
  %v1653 = vadd.f32 0.0, %v1652
  %1654 = vdwg.mxu0
  %1655 = vmatprep.subr.mxu0 0.0
  %1656 = vmatpush1.msra.mxu0 %v348
  %1657 = vmatprep.subr.mxu0 0.0
  %1658 = vmatpush1.msra.mxu0 %v351
  %1659 = vmatprep.subr.mxu0 0.0
  %1660 = vmatpush1.msra.mxu0 %v354
  %1661 = vmatprep.subr.mxu0 0.0
  %1662 = vmatpush1.msra.mxu0 %v357
  %1663 = vmatprep.subr.mxu0 0.0
  %1664 = vmatpush1.msra.mxu0 %v360
  %1665 = vmatprep.subr.mxu0 0.0
  %1666 = vmatpush1.msra.mxu0 %v363
  %1667 = vmatprep.subr.mxu0 0.0
  %1668 = vmatpush1.msra.mxu0 %v366
  %1669 = vmatprep.subr.mxu0 0.0
  %1670 = vmatpush1.msra.mxu0 %v369
  %1671 = vmatprep.subr.mxu0 0.0
  %1672 = vmatpush1.msra.mxu0 %v372
  %1673 = vmatprep.subr.mxu0 0.0
  %1674 = vmatpush1.msra.mxu0 %v375
  %1675 = vmatprep.subr.mxu0 0.0
  %1676 = vmatpush1.msra.mxu0 %v378
  %1677 = vmatprep.subr.mxu0 0.0
  %1678 = vmatpush1.msra.mxu0 %v381
  %1679 = vmatprep.subr.mxu0 0.0
  %1680 = vmatpush1.msra.mxu0 %v384
  %1681 = vmatprep.subr.mxu0 0.0
  %1682 = vmatpush1.msra.mxu0 %v387
  %1683 = vmatprep.subr.mxu0 0.0
  %1684 = vmatpush1.msra.mxu0 %v390
  %1685 = vmatprep.subr.mxu0 0.0
  %1686 = vmatpush1.msra.mxu0 %v393
  %1687 = vmatprep.subr.mxu0 0.0
  %1688 = vmatpush1.msra.mxu0 0.0
  %1689 = vmatprep.subr.mxu0 0.0
  %1690 = vmatpush1.msra.mxu0 0.0
  %1691 = vmatprep.subr.mxu0 0.0
  %1692 = vmatpush1.msra.mxu0 0.0
  %1693 = vmatprep.subr.mxu0 0.0
  %1694 = vmatpush1.msra.mxu0 0.0
  %1695 = vmatprep.subr.mxu0 0.0
  %1696 = vmatpush1.msra.mxu0 0.0
  %1697 = vmatprep.subr.mxu0 0.0
  %1698 = vmatpush1.msra.mxu0 0.0
  %1699 = vmatprep.subr.mxu0 0.0
  %1700 = vmatpush1.msra.mxu0 0.0
  %1701 = vmatprep.subr.mxu0 0.0
  %1702 = vmatpush1.msra.mxu0 0.0
  %1703 = vmatprep.subr.mxu0 0.0
  %1704 = vmatpush1.msra.mxu0 0.0
  %1705 = vmatprep.subr.mxu0 0.0
  %1706 = vmatpush1.msra.mxu0 0.0
  %1707 = vmatprep.subr.mxu0 0.0
  %1708 = vmatpush1.msra.mxu0 0.0
  %1709 = vmatprep.subr.mxu0 0.0
  %1710 = vmatpush1.msra.mxu0 0.0
  %1711 = vmatprep.subr.mxu0 0.0
  %1712 = vmatpush1.msra.mxu0 0.0
  %1713 = vmatprep.subr.mxu0 0.0
  %1714 = vmatpush1.msra.mxu0 0.0
  %1715 = vmatprep.subr.mxu0 0.0
  %1716 = vmatpush1.msra.mxu0 0.0
  %1717 = vmatprep.subr.mxu0 0.0
  %1718 = vmatpush1.msra.mxu0 0.0
  %1719 = vmatprep.mubr.f32.mxu0 0.0
  %1720 = vmatmul.mubr.f32.gmra.mrb[0].mxu0 %v1577
  %v1721 = vpop.f32.mrb[0].mxu0
  %v1722 = vadd.f32 0.0, %v1721
  %v1723 = vpop.f32.mrb[0].mxu0
  %1724 = vdwg.mxu0
  %v1725 = vadd.f32 %v1581, %v1651
  %v1726 = vxor.u32 %v1725, 2147483648
  %v1727 = vmul.f32 %v1726, 1.442695
  %v1728 = vpow.pop %v1727
  %v1729 = vadd.f32 %v1728, 1.0
  %v1730 = vrcp.pop %v1729
  %v1731 = vmul.f32 1.0, %v1730
  %v1732 = vadd.f32 %v1582, %v1653
  %v1733 = vxor.u32 %v1732, 2147483648
  %v1734 = vmul.f32 %v1733, 1.442695
  %v1735 = vpow.pop %v1734
  %v1736 = vadd.f32 %v1735, 1.0
  %v1737 = vrcp.pop %v1736
  %v1738 = vmul.f32 1.0, %v1737
  %v1739 = vadd.f32 %v1722, %v561
  %v1740 = vmul.f32 %v1731, %v1739
  %v1741 = vadd.f32 %v1583, %v1740
  %v1742 = vtanh.pop %v1741
  %v1743 = vsub.f32 %v1577, %v1742
  %v1744 = vmul.f32 %v1738, %v1743
  %v1745 = vadd.f32 %v1742, %v1744
  %1746 = vst [vmem:[#allocation2] sm:$0xff] %v1745
  // Predicated region
  $region34: #{gru_forward.3} parent=0 // pred_check
    %p1747 = pneg %p26
  $region35: #{gru_forward.3} parent=0 // pred_check_branch
    %1749 = sbr.rel (%p1747) target = $region37
  $region36: #{gru_forward.3} parent=0 // pred_region
    %v1750 = vld [vmem:[%s5] sm:$0xff]
    %v1751 = vld [vmem:[%s5 + $0x8] sm:$0xff]
    %v1752 = vld [vmem:[%s5 + $0x10] sm:$0xff]
    %v1753 = vld [vmem:[%s5 + $0x18] sm:$0xff]
    %v1754 = vld [vmem:[%s5 + $0x20] sm:$0xff]
    %v1755 = vld [vmem:[%s5 + $0x28] sm:$0xff]
    %v1756 = vld [vmem:[%s5 + $0x30] sm:$0xff]
    %v1757 = vld [vmem:[%s5 + $0x38] sm:$0xff]
    %v1758 = vld [vmem:[%s5 + $0x40] sm:$0xff]
    %v1759 = vld [vmem:[%s5 + $0x48] sm:$0xff]
    %v1760 = vld [vmem:[%s5 + $0x50] sm:$0xff]
    %v1761 = vld [vmem:[%s5 + $0x58] sm:$0xff]
    %v1762 = vld [vmem:[%s5 + $0x60] sm:$0xff]
    %v1763 = vld [vmem:[%s5 + $0x68] sm:$0xff]
    %v1764 = vld [vmem:[%s5 + $0x70] sm:$0xff]
    %v1765 = vld [vmem:[%s5 + $0x78] sm:$0xff]
    %v1766 = vld [vmem:[%s6] sm:$0x1]
    %v1768 = vlaneseq
    %v1769 = vshrl.u32 %v1768, 7
    %v1770 = vsub.s32 0, %v1769
    %v1771 = vrot.slane %v1766, %v1770
    %1773 = vmatprep.subr.mxu0 0.0
    %1774 = vmatpush1.msra.mxu0 %v1750
    %1775 = vmatprep.subr.mxu0 0.0
    %1776 = vmatpush1.msra.mxu0 %v1751
    %1777 = vmatprep.subr.mxu0 0.0
    %1778 = vmatpush1.msra.mxu0 %v1752
    %1779 = vmatprep.subr.mxu0 0.0
    %1780 = vmatpush1.msra.mxu0 %v1753
    %1781 = vmatprep.subr.mxu0 0.0
    %1782 = vmatpush1.msra.mxu0 %v1754
    %1783 = vmatprep.subr.mxu0 0.0
    %1784 = vmatpush1.msra.mxu0 %v1755
    %1785 = vmatprep.subr.mxu0 0.0
    %1786 = vmatpush1.msra.mxu0 %v1756
    %1787 = vmatprep.subr.mxu0 0.0
    %1788 = vmatpush1.msra.mxu0 %v1757
    %1789 = vmatprep.subr.mxu0 0.0
    %1790 = vmatpush1.msra.mxu0 %v1758
    %1791 = vmatprep.subr.mxu0 0.0
    %1792 = vmatpush1.msra.mxu0 %v1759
    %1793 = vmatprep.subr.mxu0 0.0
    %1794 = vmatpush1.msra.mxu0 %v1760
    %1795 = vmatprep.subr.mxu0 0.0
    %1796 = vmatpush1.msra.mxu0 %v1761
    %1797 = vmatprep.subr.mxu0 0.0
    %1798 = vmatpush1.msra.mxu0 %v1762
    %1799 = vmatprep.subr.mxu0 0.0
    %1800 = vmatpush1.msra.mxu0 %v1763
    %1801 = vmatprep.subr.mxu0 0.0
    %1802 = vmatpush1.msra.mxu0 %v1764
    %1803 = vmatprep.subr.mxu0 0.0
    %1804 = vmatpush1.msra.mxu0 %v1765
    %1805 = vmatprep.subr.mxu0 0.0
    %1806 = vmatpush1.msra.mxu0 0.0
    %1807 = vmatprep.subr.mxu0 0.0
    %1808 = vmatpush1.msra.mxu0 0.0
    %1809 = vmatprep.subr.mxu0 0.0
    %1810 = vmatpush1.msra.mxu0 0.0
    %1811 = vmatprep.subr.mxu0 0.0
    %1812 = vmatpush1.msra.mxu0 0.0
    %1813 = vmatprep.subr.mxu0 0.0
    %1814 = vmatpush1.msra.mxu0 0.0
    %1815 = vmatprep.subr.mxu0 0.0
    %1816 = vmatpush1.msra.mxu0 0.0
    %1817 = vmatprep.subr.mxu0 0.0
    %1818 = vmatpush1.msra.mxu0 0.0
    %1819 = vmatprep.subr.mxu0 0.0
    %1820 = vmatpush1.msra.mxu0 0.0
    %1821 = vmatprep.subr.mxu0 0.0
    %1822 = vmatpush1.msra.mxu0 0.0
    %1823 = vmatprep.subr.mxu0 0.0
    %1824 = vmatpush1.msra.mxu0 0.0
    %1825 = vmatprep.subr.mxu0 0.0
    %1826 = vmatpush1.msra.mxu0 0.0
    %1827 = vmatprep.subr.mxu0 0.0
    %1828 = vmatpush1.msra.mxu0 0.0
    %1829 = vmatprep.subr.mxu0 0.0
    %1830 = vmatpush1.msra.mxu0 0.0
    %1831 = vmatprep.subr.mxu0 0.0
    %1832 = vmatpush1.msra.mxu0 0.0
    %1833 = vmatprep.subr.mxu0 0.0
    %1834 = vmatpush1.msra.mxu0 0.0
    %1835 = vmatprep.subr.mxu0 0.0
    %1836 = vmatpush1.msra.mxu0 0.0
    %1837 = vmatprep.mubr.f32.mxu0 0.0
    %1838 = vmatmul.mubr.f32.gmra.mrb[0].mxu0 %v1745
    %v1839 = vpop.f32.mrb[0].mxu0
    %v1840 = vadd.f32 %v1771, %v1839
    %v1841 = vpop.f32.mrb[0].mxu0
    %1842 = vdwg.mxu0
    %1843 = vst [vmem:[%s7] sm:$0xff] %v1840
  $region37: #{gru_forward.3} parent=0 // pred_fallthru
    _
  // Predicated region
  $region38: #{gru_forward.3} parent=0 // pred_check
    _
  $region39: #{gru_forward.3} parent=0 // pred_check_branch
    %1845 = sbr.rel (0) target = $region41
  $region40: #{gru_forward.3} parent=0 // pred_region
    _
  $region41: #{gru_forward.3} parent=0 // pred_fallthru
    _
  // Predicated region
  $region42: #{gru_forward.3} parent=0 // pred_check
    _
  $region43: #{gru_forward.3} parent=0 // pred_check_branch
    %1847 = sbr.rel (0) target = $region45
  $region44: #{gru_forward.3} parent=0 // pred_region
    _
  $region45: #{gru_forward.3} parent=0 // pred_fallthru
    _

</llo_original>
